<compile_context>
chip_gen: v7x
topology: tpu7x:2x2x1
jax: 0.10.0
libtpu: 0.0.40
codegen_flags: <defaults>
</compile_context>

<pallas_src>
import functools
import math

import jax
import jax.numpy as jnp
from jax.experimental import pallas as pl
from jax.experimental.pallas import tpu as pltpu


# ----------------------------------------------------------------------------
# Host-side weight preprocessing (pure JAX glue, done once / folded by jit)
# ----------------------------------------------------------------------------
def _conv_banded_weights(w, w_in):
    """PyTorch conv weight (Cout, Cin, kh, kw) -> banded mats (kh, W_in*Cin, W_out*Cout).

    For an activation laid out as X[h, w*Cin + ci], the valid stride-1 conv is
        OUT[oy, ox*Cout + co] = sum_i ( X[oy + i, :] @ T[i] )[ox*Cout + co].
    """
    cout, cin, kh, kw = w.shape
    w_out = w_in - kw + 1
    mats = []
    for i in range(kh):
        t_i = jnp.zeros((w_in * cin, w_out * cout), jnp.float32)
        for j in range(kw):
            # band[w, ox] = 1 iff w == ox + j
            band = jnp.eye(w_in, w_out, k=-j, dtype=jnp.float32)
            t_i = t_i + jnp.kron(band, w[:, :, i, j].T.astype(jnp.float32))
        mats.append(t_i)
    return jnp.stack(mats)                                  # (kh, W_in*Cin, W_out*Cout)


def _pool_matrices(hw_in, c):
    """AvgPool2d(2,2) as pooled = PH @ act @ PW for act of shape (hw_in, hw_in*c)."""
    hw_out = hw_in // 2
    ph = 0.5 * jnp.kron(jnp.eye(hw_out, dtype=jnp.float32),
                        jnp.ones((1, 2), jnp.float32))       # (hw_out, hw_in)
    col = 0.5 * jnp.kron(jnp.eye(hw_out, dtype=jnp.float32),
                         jnp.ones((2, 1), jnp.float32))      # (hw_in, hw_out)
    pw = jnp.kron(col, jnp.eye(c, dtype=jnp.float32))        # (hw_in*c, hw_out*c)
    return ph, pw


def _prepare_kernel_operands(params, num_classes):
    bf16, f32 = jnp.bfloat16, jnp.float32
    (w1, b1), (w2, b2), (w3, b3) = params["conv1"], params["conv2"], params["conv3"]
    (wl1, bl1), (wl2, bl2) = params["linear1"], params["linear2"]

    t1 = _conv_banded_weights(w1, 32).astype(bf16)           # (5, 32*Cin, 28*6)
    t2 = _conv_banded_weights(w2, 14).astype(bf16)           # (5, 14*6, 10*16)
    t3 = _conv_banded_weights(w3, 5).astype(bf16)            # (5, 5*16, 1*120)
    bias1 = jnp.tile(b1, 28)[None, :].astype(f32)            # (1, 168)
    bias2 = jnp.tile(b2, 10)[None, :].astype(f32)            # (1, 160)
    bias3 = b3[None, :].astype(f32)                          # (1, 120)

    ph1, pw1 = _pool_matrices(28, 6)                         # (14,28), (168,84)
    ph2, pw2 = _pool_matrices(10, 16)                        # (5,10),  (160,80)
    ph1, pw1 = ph1.astype(bf16), pw1.astype(bf16)
    ph2, pw2 = ph2.astype(bf16), pw2.astype(bf16)

    # Pad fc2 output to a multiple of 128 lanes -> lane-dense HBM store.
    npad = max(128, -(-num_classes // 128) * 128)
    w4 = wl1.T.astype(bf16)                                  # (120, 84)
    bias4 = bl1[None, :].astype(f32)                         # (1, 84)
    w5 = jnp.zeros((84, npad), bf16).at[:, :num_classes].set(wl2.T.astype(bf16))
    bias5 = jnp.zeros((1, npad), f32).at[:, :num_classes].set(bl2.astype(f32))

    ops = (t1, bias1, ph1, pw1,
           t2, bias2, ph2, pw2,
           t3, bias3,
           w4, bias4, w5, bias5)
    return ops, npad


# ----------------------------------------------------------------------------
# Fused Pallas kernel (one grid step = one batch element, end-to-end network)
# ----------------------------------------------------------------------------
def _lenet_fused_kernel(x_ref,
                        t1_ref, b1_ref, ph1_ref, pw1_ref,
                        t2_ref, b2_ref, ph2_ref, pw2_ref,
                        t3_ref, b3_ref,
                        w4_ref, b4_ref, w5_ref, b5_ref,
                        out_ref,
                        p1_ref, p2_ref):
    f32 = jnp.float32

    def mm(a, b):
        # bf16 MXU matmul with f32 accumulation.
        return jnp.dot(a.astype(jnp.bfloat16), b.astype(jnp.bfloat16),
                       preferred_element_type=f32)

    # ---- conv1: (32, 32*Cin) -> (28, 28*6), 5 banded matmuls + bias + ReLU.
    acc1 = jnp.zeros((28, 28 * 6), f32)
    for i in range(5):
        acc1 = acc1 + mm(x_ref[0, pl.ds(i, 28), :], t1_ref[i])
    a1 = jnp.maximum(acc1 + b1_ref[...], 0.0)

    # ---- avgpool 2x2 -> (14, 14*6)
    p1_ref[...] = mm(mm(ph1_ref[...], a1), pw1_ref[...])

    # ---- conv2: (14, 14*6) -> (10, 10*16)
    acc2 = jnp.zeros((10, 10 * 16), f32)
    for i in range(5):
        acc2 = acc2 + mm(p1_ref[pl.ds(i, 10), :], t2_ref[i])
    a2 = jnp.maximum(acc2 + b2_ref[...], 0.0)

    # ---- avgpool 2x2 -> (5, 5*16)
    p2_ref[...] = mm(mm(ph2_ref[...], a2), pw2_ref[...])

    # ---- conv3 (5x5 -> 1x1 spatial): (5, 5*16) -> (1, 120)
    acc3 = jnp.zeros((1, 120), f32)
    for i in range(5):
        acc3 = acc3 + mm(p2_ref[pl.ds(i, 1), :], t3_ref[i])
    a3 = jnp.maximum(acc3 + b3_ref[...], 0.0)

    # ---- fc1 + ReLU: (1, 120) -> (1, 84)
    h = jnp.maximum(mm(a3, w4_ref[...]) + b4_ref[...], 0.0)

    # ---- fc2 (lane-padded): (1, 84) -> (1, npad >= 128)
    out_ref[0] = mm(h, w5_ref[...]) + b5_ref[...]


# ----------------------------------------------------------------------------
# Wrapper
# ----------------------------------------------------------------------------
def lenet_forward(params, x, num_classes):
    """Fused Pallas LeNet forward.  x: (B, in_channel, 32, 32) f32 -> (B, num_classes)."""
    b, cin, h, w = x.shape
    assert (h, w) == (32, 32), "LeNet expects 32x32 spatial input"

    ops, npad = _prepare_kernel_operands(params, num_classes)
    # NCHW -> (B, H, W*Cin) channels-interleaved layout (boundary-only conversion).
    x2 = x.transpose(0, 2, 3, 1).reshape(b, 32, 32 * cin).astype(jnp.float32)

    def const_map(nd):
        return lambda bi: (0,) * nd

    in_specs = [pl.BlockSpec((1, 32, 32 * cin), lambda bi: (bi, 0, 0))]
    in_specs += [pl.BlockSpec(op.shape, const_map(op.ndim)) for op in ops]

    out = pl.pallas_call(
        _lenet_fused_kernel,
        out_shape=jax.ShapeDtypeStruct((b, 1, npad), jnp.float32),
        grid=(b,),
        in_specs=in_specs,
        out_specs=pl.BlockSpec((1, 1, npad), lambda bi: (bi, 0, 0)),
        scratch_shapes=[pltpu.VMEM((14, 14 * 6), jnp.float32),   # pooled conv1
                        pltpu.VMEM((5, 5 * 16), jnp.float32)],   # pooled conv2
        compiler_params=pltpu.CompilerParams(
            dimension_semantics=("parallel",)),
    )(x2, *ops)
    return out.reshape(b, npad)[:, :num_classes]


# ----------------------------------------------------------------------------
# Parameter init (deterministic, PyTorch-default-style uniform bounds)
# ----------------------------------------------------------------------------
def _init_conv(key, cout, cin, kh, kw):
    k1, k2 = jax.random.split(key)
    bound = 1.0 / math.sqrt(cin * kh * kw)
    w = jax.random.uniform(k1, (cout, cin, kh, kw), jnp.float32, -bound, bound)
    b = jax.random.uniform(k2, (cout,), jnp.float32, -bound, bound)
    return w, b


def _init_linear(key, fout, fin):
    k1, k2 = jax.random.split(key)
    bound = 1.0 / math.sqrt(fin)
    w = jax.random.uniform(k1, (fout, fin), jnp.float32, -bound, bound)
    b = jax.random.uniform(k2, (fout,), jnp.float32, -bound, bound)
    return w, b


def init_lenet_params(key, in_channel, num_classes):
    ks = jax.random.split(key, 5)
    return {
        "conv1": _init_conv(ks[0], 6, in_channel, 5, 5),
        "conv2": _init_conv(ks[1], 16, 6, 5, 5),
        "conv3": _init_conv(ks[2], 120, 16, 5, 5),
        "linear1": _init_linear(ks[3], 84, 120),
        "linear2": _init_linear(ks[4], num_classes, 84),
    }


# ----------------------------------------------------------------------------
# Pure-JAX f32 reference (sanity check only)
# ----------------------------------------------------------------------------
def lenet_reference(params, x):
    def conv_relu(y, w, b):
        y = jax.lax.conv_general_dilated(
            y, w, window_strides=(1, 1), padding="VALID",
            dimension_numbers=("NCHW", "OIHW", "NCHW"))
        return jax.nn.relu(y + b[None, :, None, None])

    def pool(y):
        s = jax.lax.reduce_window(y, 0.0, jax.lax.add,
                                  (1, 1, 2, 2), (1, 1, 2, 2), "VALID")
        return s * 0.25

    x = pool(conv_relu(x, *params["conv1"]))
    x = pool(conv_relu(x, *params["conv2"]))
    x = conv_relu(x, *params["conv3"]).reshape(x.shape[0], -1)
    x = jax.nn.relu(x @ params["linear1"][0].T + params["linear1"][1])
    return x @ params["linear2"][0].T + params["linear2"][1]


if __name__ == "__main__":
    key = jax.random.PRNGKey(0)
    k_params, k_x = jax.random.split(key)

    in_channel, num_classes, batch = 3, 10, 2
    params = init_lenet_params(k_params, in_channel, num_classes)

    # LeNet requires 32x32 spatial input so conv3's output is 1x1 (-> 120 feats).
    x = jax.random.normal(k_x, (batch, in_channel, 32, 32), jnp.float32)

    fwd = jax.jit(functools.partial(lenet_forward, num_classes=num_classes))
    out = jax.block_until_ready(fwd(params, x))

    assert out.shape == (batch, num_classes)
    assert out.dtype == jnp.float32

    # Sanity check vs pure-f32 reference (kernel uses bf16 matmul operands
    # with f32 accumulation, so allow a small tolerance).
    ref = lenet_reference(params, x)
    err = float(jnp.max(jnp.abs(out - ref)))
    assert err < 7.5e-2, f"kernel/reference mismatch: max|diff|={err}"

    print("KERNEL_OK")
</pallas_src>

<mosaic_0001>
module attributes {stable_mosaic.version = 11 : i64} {
  func.func @_lenet_fused_kernel(%arg0: i32, %arg1: memref<1x32x96xf32, #tpu.memory_space<vmem>>, %arg2: memref<5x96x168xbf16, #tpu.memory_space<vmem>>, %arg3: memref<1x168xf32, #tpu.memory_space<vmem>>, %arg4: memref<14x28xbf16, #tpu.memory_space<vmem>>, %arg5: memref<168x84xbf16, #tpu.memory_space<vmem>>, %arg6: memref<5x84x160xbf16, #tpu.memory_space<vmem>>, %arg7: memref<1x160xf32, #tpu.memory_space<vmem>>, %arg8: memref<5x10xbf16, #tpu.memory_space<vmem>>, %arg9: memref<160x80xbf16, #tpu.memory_space<vmem>>, %arg10: memref<5x80x120xbf16, #tpu.memory_space<vmem>>, %arg11: memref<1x120xf32, #tpu.memory_space<vmem>>, %arg12: memref<120x84xbf16, #tpu.memory_space<vmem>>, %arg13: memref<1x84xf32, #tpu.memory_space<vmem>>, %arg14: memref<84x128xbf16, #tpu.memory_space<vmem>>, %arg15: memref<1x128xf32, #tpu.memory_space<vmem>>, %arg16: memref<1x1x128xf32, #tpu.memory_space<vmem>>, %arg17: memref<14x84xf32, #tpu.memory_space<vmem>>, %arg18: memref<5x80xf32, #tpu.memory_space<vmem>>) attributes {dimension_semantics = [#tpu.dimension_semantics<parallel>], iteration_bounds = array<i64: 2>, scalar_prefetch = 0 : i64, scratch_operands = 2 : i64, tpu.core_type = #tpu.core_type<tc>, window_params = [{transform_indices = @transform_0, window_bounds = array<i64: 1, 32, 96>}, {pipeline_mode = #tpu.pipeline_mode<synchronous>, transform_indices = @transform_1, window_bounds = array<i64: 5, 96, 168>}, {pipeline_mode = #tpu.pipeline_mode<synchronous>, transform_indices = @transform_2, window_bounds = array<i64: 1, 168>}, {pipeline_mode = #tpu.pipeline_mode<synchronous>, transform_indices = @transform_3, window_bounds = array<i64: 14, 28>}, {pipeline_mode = #tpu.pipeline_mode<synchronous>, transform_indices = @transform_4, window_bounds = array<i64: 168, 84>}, {pipeline_mode = #tpu.pipeline_mode<synchronous>, transform_indices = @transform_5, window_bounds = array<i64: 5, 84, 160>}, {pipeline_mode = #tpu.pipeline_mode<synchronous>, transform_indices = @transform_6, window_bounds = array<i64: 1, 160>}, {pipeline_mode = #tpu.pipeline_mode<synchronous>, transform_indices = @transform_7, window_bounds = array<i64: 5, 10>}, {pipeline_mode = #tpu.pipeline_mode<synchronous>, transform_indices = @transform_8, window_bounds = array<i64: 160, 80>}, {pipeline_mode = #tpu.pipeline_mode<synchronous>, transform_indices = @transform_9, window_bounds = array<i64: 5, 80, 120>}, {pipeline_mode = #tpu.pipeline_mode<synchronous>, transform_indices = @transform_10, window_bounds = array<i64: 1, 120>}, {pipeline_mode = #tpu.pipeline_mode<synchronous>, transform_indices = @transform_11, window_bounds = array<i64: 120, 84>}, {pipeline_mode = #tpu.pipeline_mode<synchronous>, transform_indices = @transform_12, window_bounds = array<i64: 1, 84>}, {pipeline_mode = #tpu.pipeline_mode<synchronous>, transform_indices = @transform_13, window_bounds = array<i64: 84, 128>}, {pipeline_mode = #tpu.pipeline_mode<synchronous>, transform_indices = @transform_14, window_bounds = array<i64: 1, 128>}, {transform_indices = @transform_15, window_bounds = array<i64: 1, 1, 128>}]} {
    %cst = arith.constant 0.000000e+00 : f32
    %0 = vector.broadcast %cst : f32 to vector<28x168xf32>
    %c0 = arith.constant 0 : index
    %c0_0 = arith.constant 0 : index
    %c0_1 = arith.constant 0 : index
    %1 = vector.load %arg1[%c0, %c0_0, %c0_1] : memref<1x32x96xf32, #tpu.memory_space<vmem>>, vector<1x28x96xf32>
    %2 = vector.shape_cast %1 : vector<1x28x96xf32> to vector<28x96xf32>
    %c0_2 = arith.constant 0 : index
    %c0_3 = arith.constant 0 : index
    %c0_4 = arith.constant 0 : index
    %3 = vector.load %arg2[%c0_2, %c0_3, %c0_4] : memref<5x96x168xbf16, #tpu.memory_space<vmem>>, vector<1x96x168xbf16>
    %4 = vector.shape_cast %3 : vector<1x96x168xbf16> to vector<96x168xbf16>
    %5 = arith.truncf %2 : vector<28x96xf32> to vector<28x96xbf16>
    %cst_5 = arith.constant dense<0.000000e+00> : vector<28x168xf32>
    %6 = tpu.matmul %5, %4, %cst_5 {dimension_numbers = #tpu.dot_dimension_numbers<[1], [0], [0], [1], [0, 0, 1, 1], [], []>} : vector<28x96xbf16>, vector<96x168xbf16>, vector<28x168xf32> -> vector<28x168xf32>
    %7 = arith.addf %0, %6 : vector<28x168xf32>
    %c0_6 = arith.constant 0 : index
    %c1 = arith.constant 1 : index
    %c0_7 = arith.constant 0 : index
    %8 = vector.load %arg1[%c0_6, %c1, %c0_7] : memref<1x32x96xf32, #tpu.memory_space<vmem>>, vector<1x28x96xf32>
    %9 = vector.shape_cast %8 : vector<1x28x96xf32> to vector<28x96xf32>
    %c1_8 = arith.constant 1 : index
    %c0_9 = arith.constant 0 : index
    %c0_10 = arith.constant 0 : index
    %10 = vector.load %arg2[%c1_8, %c0_9, %c0_10] : memref<5x96x168xbf16, #tpu.memory_space<vmem>>, vector<1x96x168xbf16>
    %11 = vector.shape_cast %10 : vector<1x96x168xbf16> to vector<96x168xbf16>
    %12 = arith.truncf %9 : vector<28x96xf32> to vector<28x96xbf16>
    %cst_11 = arith.constant dense<0.000000e+00> : vector<28x168xf32>
    %13 = tpu.matmul %12, %11, %cst_11 {dimension_numbers = #tpu.dot_dimension_numbers<[1], [0], [0], [1], [0, 0, 1, 1], [], []>} : vector<28x96xbf16>, vector<96x168xbf16>, vector<28x168xf32> -> vector<28x168xf32>
    %14 = arith.addf %7, %13 : vector<28x168xf32>
    %c0_12 = arith.constant 0 : index
    %c2 = arith.constant 2 : index
    %c0_13 = arith.constant 0 : index
    %15 = vector.load %arg1[%c0_12, %c2, %c0_13] : memref<1x32x96xf32, #tpu.memory_space<vmem>>, vector<1x28x96xf32>
    %16 = vector.shape_cast %15 : vector<1x28x96xf32> to vector<28x96xf32>
    %c2_14 = arith.constant 2 : index
    %c0_15 = arith.constant 0 : index
    %c0_16 = arith.constant 0 : index
    %17 = vector.load %arg2[%c2_14, %c0_15, %c0_16] : memref<5x96x168xbf16, #tpu.memory_space<vmem>>, vector<1x96x168xbf16>
    %18 = vector.shape_cast %17 : vector<1x96x168xbf16> to vector<96x168xbf16>
    %19 = arith.truncf %16 : vector<28x96xf32> to vector<28x96xbf16>
    %cst_17 = arith.constant dense<0.000000e+00> : vector<28x168xf32>
    %20 = tpu.matmul %19, %18, %cst_17 {dimension_numbers = #tpu.dot_dimension_numbers<[1], [0], [0], [1], [0, 0, 1, 1], [], []>} : vector<28x96xbf16>, vector<96x168xbf16>, vector<28x168xf32> -> vector<28x168xf32>
    %21 = arith.addf %14, %20 : vector<28x168xf32>
    %c0_18 = arith.constant 0 : index
    %c3 = arith.constant 3 : index
    %c0_19 = arith.constant 0 : index
    %22 = vector.load %arg1[%c0_18, %c3, %c0_19] : memref<1x32x96xf32, #tpu.memory_space<vmem>>, vector<1x28x96xf32>
    %23 = vector.shape_cast %22 : vector<1x28x96xf32> to vector<28x96xf32>
    %c3_20 = arith.constant 3 : index
    %c0_21 = arith.constant 0 : index
    %c0_22 = arith.constant 0 : index
    %24 = vector.load %arg2[%c3_20, %c0_21, %c0_22] : memref<5x96x168xbf16, #tpu.memory_space<vmem>>, vector<1x96x168xbf16>
    %25 = vector.shape_cast %24 : vector<1x96x168xbf16> to vector<96x168xbf16>
    %26 = arith.truncf %23 : vector<28x96xf32> to vector<28x96xbf16>
    %cst_23 = arith.constant dense<0.000000e+00> : vector<28x168xf32>
    %27 = tpu.matmul %26, %25, %cst_23 {dimension_numbers = #tpu.dot_dimension_numbers<[1], [0], [0], [1], [0, 0, 1, 1], [], []>} : vector<28x96xbf16>, vector<96x168xbf16>, vector<28x168xf32> -> vector<28x168xf32>
    %28 = arith.addf %21, %27 : vector<28x168xf32>
    %c0_24 = arith.constant 0 : index
    %c4 = arith.constant 4 : index
    %c0_25 = arith.constant 0 : index
    %29 = vector.load %arg1[%c0_24, %c4, %c0_25] : memref<1x32x96xf32, #tpu.memory_space<vmem>>, vector<1x28x96xf32>
    %30 = vector.shape_cast %29 : vector<1x28x96xf32> to vector<28x96xf32>
    %c4_26 = arith.constant 4 : index
    %c0_27 = arith.constant 0 : index
    %c0_28 = arith.constant 0 : index
    %31 = vector.load %arg2[%c4_26, %c0_27, %c0_28] : memref<5x96x168xbf16, #tpu.memory_space<vmem>>, vector<1x96x168xbf16>
    %32 = vector.shape_cast %31 : vector<1x96x168xbf16> to vector<96x168xbf16>
    %33 = arith.truncf %30 : vector<28x96xf32> to vector<28x96xbf16>
    %cst_29 = arith.constant dense<0.000000e+00> : vector<28x168xf32>
    %34 = tpu.matmul %33, %32, %cst_29 {dimension_numbers = #tpu.dot_dimension_numbers<[1], [0], [0], [1], [0, 0, 1, 1], [], []>} : vector<28x96xbf16>, vector<96x168xbf16>, vector<28x168xf32> -> vector<28x168xf32>
    %35 = arith.addf %28, %34 : vector<28x168xf32>
    %c0_30 = arith.constant 0 : index
    %c0_31 = arith.constant 0 : index
    %36 = vector.load %arg3[%c0_30, %c0_31] : memref<1x168xf32, #tpu.memory_space<vmem>>, vector<1x168xf32>
    %37 = vector.broadcast %36 : vector<1x168xf32> to vector<28x168xf32>
    %38 = arith.addf %35, %37 : vector<28x168xf32>
    %cst_32 = arith.constant 0.000000e+00 : f32
    %39 = vector.broadcast %cst_32 : f32 to vector<28x168xf32>
    %40 = arith.maximumf %38, %39 : vector<28x168xf32>
    %c0_33 = arith.constant 0 : index
    %c0_34 = arith.constant 0 : index
    %41 = vector.load %arg4[%c0_33, %c0_34] : memref<14x28xbf16, #tpu.memory_space<vmem>>, vector<14x28xbf16>
    %42 = arith.truncf %40 : vector<28x168xf32> to vector<28x168xbf16>
    %cst_35 = arith.constant dense<0.000000e+00> : vector<14x168xf32>
    %43 = tpu.matmul %41, %42, %cst_35 {dimension_numbers = #tpu.dot_dimension_numbers<[1], [0], [0], [1], [0, 0, 1, 1], [], []>} : vector<14x28xbf16>, vector<28x168xbf16>, vector<14x168xf32> -> vector<14x168xf32>
    %c0_36 = arith.constant 0 : index
    %c0_37 = arith.constant 0 : index
    %44 = vector.load %arg5[%c0_36, %c0_37] : memref<168x84xbf16, #tpu.memory_space<vmem>>, vector<168x84xbf16>
    %45 = arith.truncf %43 : vector<14x168xf32> to vector<14x168xbf16>
    %cst_38 = arith.constant dense<0.000000e+00> : vector<14x84xf32>
    %46 = tpu.matmul %45, %44, %cst_38 {dimension_numbers = #tpu.dot_dimension_numbers<[1], [0], [0], [1], [0, 0, 1, 1], [], []>} : vector<14x168xbf16>, vector<168x84xbf16>, vector<14x84xf32> -> vector<14x84xf32>
    %c0_39 = arith.constant 0 : index
    %c0_40 = arith.constant 0 : index
    %47 = vector.load %arg17[%c0_39, %c0_40] : memref<14x84xf32, #tpu.memory_space<vmem>>, vector<14x84xf32>
    tpu.vector_store %arg17[%c0_39, %c0_40], %46 {strides = array<i32>} : memref<14x84xf32, #tpu.memory_space<vmem>>, vector<14x84xf32>,
    %cst_41 = arith.constant 0.000000e+00 : f32
    %48 = vector.broadcast %cst_41 : f32 to vector<10x160xf32>
    %c0_42 = arith.constant 0 : index
    %c0_43 = arith.constant 0 : index
    %49 = vector.load %arg17[%c0_42, %c0_43] : memref<14x84xf32, #tpu.memory_space<vmem>>, vector<10x84xf32>
    %c0_44 = arith.constant 0 : index
    %c0_45 = arith.constant 0 : index
    %c0_46 = arith.constant 0 : index
    %50 = vector.load %arg6[%c0_44, %c0_45, %c0_46] : memref<5x84x160xbf16, #tpu.memory_space<vmem>>, vector<1x84x160xbf16>
    %51 = vector.shape_cast %50 : vector<1x84x160xbf16> to vector<84x160xbf16>
    %52 = arith.truncf %49 : vector<10x84xf32> to vector<10x84xbf16>
    %cst_47 = arith.constant dense<0.000000e+00> : vector<10x160xf32>
    %53 = tpu.matmul %52, %51, %cst_47 {dimension_numbers = #tpu.dot_dimension_numbers<[1], [0], [0], [1], [0, 0, 1, 1], [], []>} : vector<10x84xbf16>, vector<84x160xbf16>, vector<10x160xf32> -> vector<10x160xf32>
    %54 = arith.addf %48, %53 : vector<10x160xf32>
    %c1_48 = arith.constant 1 : index
    %c0_49 = arith.constant 0 : index
    %55 = vector.load %arg17[%c1_48, %c0_49] : memref<14x84xf32, #tpu.memory_space<vmem>>, vector<10x84xf32>
    %c1_50 = arith.constant 1 : index
    %c0_51 = arith.constant 0 : index
    %c0_52 = arith.constant 0 : index
    %56 = vector.load %arg6[%c1_50, %c0_51, %c0_52] : memref<5x84x160xbf16, #tpu.memory_space<vmem>>, vector<1x84x160xbf16>
    %57 = vector.shape_cast %56 : vector<1x84x160xbf16> to vector<84x160xbf16>
    %58 = arith.truncf %55 : vector<10x84xf32> to vector<10x84xbf16>
    %cst_53 = arith.constant dense<0.000000e+00> : vector<10x160xf32>
    %59 = tpu.matmul %58, %57, %cst_53 {dimension_numbers = #tpu.dot_dimension_numbers<[1], [0], [0], [1], [0, 0, 1, 1], [], []>} : vector<10x84xbf16>, vector<84x160xbf16>, vector<10x160xf32> -> vector<10x160xf32>
    %60 = arith.addf %54, %59 : vector<10x160xf32>
    %c2_54 = arith.constant 2 : index
    %c0_55 = arith.constant 0 : index
    %61 = vector.load %arg17[%c2_54, %c0_55] : memref<14x84xf32, #tpu.memory_space<vmem>>, vector<10x84xf32>
    %c2_56 = arith.constant 2 : index
    %c0_57 = arith.constant 0 : index
    %c0_58 = arith.constant 0 : index
    %62 = vector.load %arg6[%c2_56, %c0_57, %c0_58] : memref<5x84x160xbf16, #tpu.memory_space<vmem>>, vector<1x84x160xbf16>
    %63 = vector.shape_cast %62 : vector<1x84x160xbf16> to vector<84x160xbf16>
    %64 = arith.truncf %61 : vector<10x84xf32> to vector<10x84xbf16>
    %cst_59 = arith.constant dense<0.000000e+00> : vector<10x160xf32>
    %65 = tpu.matmul %64, %63, %cst_59 {dimension_numbers = #tpu.dot_dimension_numbers<[1], [0], [0], [1], [0, 0, 1, 1], [], []>} : vector<10x84xbf16>, vector<84x160xbf16>, vector<10x160xf32> -> vector<10x160xf32>
    %66 = arith.addf %60, %65 : vector<10x160xf32>
    %c3_60 = arith.constant 3 : index
    %c0_61 = arith.constant 0 : index
    %67 = vector.load %arg17[%c3_60, %c0_61] : memref<14x84xf32, #tpu.memory_space<vmem>>, vector<10x84xf32>
    %c3_62 = arith.constant 3 : index
    %c0_63 = arith.constant 0 : index
    %c0_64 = arith.constant 0 : index
    %68 = vector.load %arg6[%c3_62, %c0_63, %c0_64] : memref<5x84x160xbf16, #tpu.memory_space<vmem>>, vector<1x84x160xbf16>
    %69 = vector.shape_cast %68 : vector<1x84x160xbf16> to vector<84x160xbf16>
    %70 = arith.truncf %67 : vector<10x84xf32> to vector<10x84xbf16>
    %cst_65 = arith.constant dense<0.000000e+00> : vector<10x160xf32>
    %71 = tpu.matmul %70, %69, %cst_65 {dimension_numbers = #tpu.dot_dimension_numbers<[1], [0], [0], [1], [0, 0, 1, 1], [], []>} : vector<10x84xbf16>, vector<84x160xbf16>, vector<10x160xf32> -> vector<10x160xf32>
    %72 = arith.addf %66, %71 : vector<10x160xf32>
    %c4_66 = arith.constant 4 : index
    %c0_67 = arith.constant 0 : index
    %73 = vector.load %arg17[%c4_66, %c0_67] : memref<14x84xf32, #tpu.memory_space<vmem>>, vector<10x84xf32>
    %c4_68 = arith.constant 4 : index
    %c0_69 = arith.constant 0 : index
    %c0_70 = arith.constant 0 : index
    %74 = vector.load %arg6[%c4_68, %c0_69, %c0_70] : memref<5x84x160xbf16, #tpu.memory_space<vmem>>, vector<1x84x160xbf16>
    %75 = vector.shape_cast %74 : vector<1x84x160xbf16> to vector<84x160xbf16>
    %76 = arith.truncf %73 : vector<10x84xf32> to vector<10x84xbf16>
    %cst_71 = arith.constant dense<0.000000e+00> : vector<10x160xf32>
    %77 = tpu.matmul %76, %75, %cst_71 {dimension_numbers = #tpu.dot_dimension_numbers<[1], [0], [0], [1], [0, 0, 1, 1], [], []>} : vector<10x84xbf16>, vector<84x160xbf16>, vector<10x160xf32> -> vector<10x160xf32>
    %78 = arith.addf %72, %77 : vector<10x160xf32>
    %c0_72 = arith.constant 0 : index
    %c0_73 = arith.constant 0 : index
    %79 = vector.load %arg7[%c0_72, %c0_73] : memref<1x160xf32, #tpu.memory_space<vmem>>, vector<1x160xf32>
    %80 = vector.broadcast %79 : vector<1x160xf32> to vector<10x160xf32>
    %81 = arith.addf %78, %80 : vector<10x160xf32>
    %cst_74 = arith.constant 0.000000e+00 : f32
    %82 = vector.broadcast %cst_74 : f32 to vector<10x160xf32>
    %83 = arith.maximumf %81, %82 : vector<10x160xf32>
    %c0_75 = arith.constant 0 : index
    %c0_76 = arith.constant 0 : index
    %84 = vector.load %arg8[%c0_75, %c0_76] : memref<5x10xbf16, #tpu.memory_space<vmem>>, vector<5x10xbf16>
    %85 = arith.truncf %83 : vector<10x160xf32> to vector<10x160xbf16>
    %cst_77 = arith.constant dense<0.000000e+00> : vector<5x160xf32>
    %86 = tpu.matmul %84, %85, %cst_77 {dimension_numbers = #tpu.dot_dimension_numbers<[1], [0], [0], [1], [0, 0, 1, 1], [], []>} : vector<5x10xbf16>, vector<10x160xbf16>, vector<5x160xf32> -> vector<5x160xf32>
    %c0_78 = arith.constant 0 : index
    %c0_79 = arith.constant 0 : index
    %87 = vector.load %arg9[%c0_78, %c0_79] : memref<160x80xbf16, #tpu.memory_space<vmem>>, vector<160x80xbf16>
    %88 = arith.truncf %86 : vector<5x160xf32> to vector<5x160xbf16>
    %cst_80 = arith.constant dense<0.000000e+00> : vector<5x80xf32>
    %89 = tpu.matmul %88, %87, %cst_80 {dimension_numbers = #tpu.dot_dimension_numbers<[1], [0], [0], [1], [0, 0, 1, 1], [], []>} : vector<5x160xbf16>, vector<160x80xbf16>, vector<5x80xf32> -> vector<5x80xf32>
    %c0_81 = arith.constant 0 : index
    %c0_82 = arith.constant 0 : index
    %90 = vector.load %arg18[%c0_81, %c0_82] : memref<5x80xf32, #tpu.memory_space<vmem>>, vector<5x80xf32>
    tpu.vector_store %arg18[%c0_81, %c0_82], %89 {strides = array<i32>} : memref<5x80xf32, #tpu.memory_space<vmem>>, vector<5x80xf32>,
    %cst_83 = arith.constant 0.000000e+00 : f32
    %91 = vector.broadcast %cst_83 : f32 to vector<1x120xf32>
    %c0_84 = arith.constant 0 : index
    %c0_85 = arith.constant 0 : index
    %92 = vector.load %arg18[%c0_84, %c0_85] : memref<5x80xf32, #tpu.memory_space<vmem>>, vector<1x80xf32>
    %c0_86 = arith.constant 0 : index
    %c0_87 = arith.constant 0 : index
    %c0_88 = arith.constant 0 : index
    %93 = vector.load %arg10[%c0_86, %c0_87, %c0_88] : memref<5x80x120xbf16, #tpu.memory_space<vmem>>, vector<1x80x120xbf16>
    %94 = vector.shape_cast %93 : vector<1x80x120xbf16> to vector<80x120xbf16>
    %95 = arith.truncf %92 : vector<1x80xf32> to vector<1x80xbf16>
    %cst_89 = arith.constant dense<0.000000e+00> : vector<1x120xf32>
    %96 = tpu.matmul %95, %94, %cst_89 {dimension_numbers = #tpu.dot_dimension_numbers<[1], [0], [0], [1], [0, 0, 1, 1], [], []>} : vector<1x80xbf16>, vector<80x120xbf16>, vector<1x120xf32> -> vector<1x120xf32>
    %97 = arith.addf %91, %96 : vector<1x120xf32>
    %c1_90 = arith.constant 1 : index
    %c0_91 = arith.constant 0 : index
    %98 = vector.load %arg18[%c1_90, %c0_91] : memref<5x80xf32, #tpu.memory_space<vmem>>, vector<1x80xf32>
    %c1_92 = arith.constant 1 : index
    %c0_93 = arith.constant 0 : index
    %c0_94 = arith.constant 0 : index
    %99 = vector.load %arg10[%c1_92, %c0_93, %c0_94] : memref<5x80x120xbf16, #tpu.memory_space<vmem>>, vector<1x80x120xbf16>
    %100 = vector.shape_cast %99 : vector<1x80x120xbf16> to vector<80x120xbf16>
    %101 = arith.truncf %98 : vector<1x80xf32> to vector<1x80xbf16>
    %cst_95 = arith.constant dense<0.000000e+00> : vector<1x120xf32>
    %102 = tpu.matmul %101, %100, %cst_95 {dimension_numbers = #tpu.dot_dimension_numbers<[1], [0], [0], [1], [0, 0, 1, 1], [], []>} : vector<1x80xbf16>, vector<80x120xbf16>, vector<1x120xf32> -> vector<1x120xf32>
    %103 = arith.addf %97, %102 : vector<1x120xf32>
    %c2_96 = arith.constant 2 : index
    %c0_97 = arith.constant 0 : index
    %104 = vector.load %arg18[%c2_96, %c0_97] : memref<5x80xf32, #tpu.memory_space<vmem>>, vector<1x80xf32>
    %c2_98 = arith.constant 2 : index
    %c0_99 = arith.constant 0 : index
    %c0_100 = arith.constant 0 : index
    %105 = vector.load %arg10[%c2_98, %c0_99, %c0_100] : memref<5x80x120xbf16, #tpu.memory_space<vmem>>, vector<1x80x120xbf16>
    %106 = vector.shape_cast %105 : vector<1x80x120xbf16> to vector<80x120xbf16>
    %107 = arith.truncf %104 : vector<1x80xf32> to vector<1x80xbf16>
    %cst_101 = arith.constant dense<0.000000e+00> : vector<1x120xf32>
    %108 = tpu.matmul %107, %106, %cst_101 {dimension_numbers = #tpu.dot_dimension_numbers<[1], [0], [0], [1], [0, 0, 1, 1], [], []>} : vector<1x80xbf16>, vector<80x120xbf16>, vector<1x120xf32> -> vector<1x120xf32>
    %109 = arith.addf %103, %108 : vector<1x120xf32>
    %c3_102 = arith.constant 3 : index
    %c0_103 = arith.constant 0 : index
    %110 = vector.load %arg18[%c3_102, %c0_103] : memref<5x80xf32, #tpu.memory_space<vmem>>, vector<1x80xf32>
    %c3_104 = arith.constant 3 : index
    %c0_105 = arith.constant 0 : index
    %c0_106 = arith.constant 0 : index
    %111 = vector.load %arg10[%c3_104, %c0_105, %c0_106] : memref<5x80x120xbf16, #tpu.memory_space<vmem>>, vector<1x80x120xbf16>
    %112 = vector.shape_cast %111 : vector<1x80x120xbf16> to vector<80x120xbf16>
    %113 = arith.truncf %110 : vector<1x80xf32> to vector<1x80xbf16>
    %cst_107 = arith.constant dense<0.000000e+00> : vector<1x120xf32>
    %114 = tpu.matmul %113, %112, %cst_107 {dimension_numbers = #tpu.dot_dimension_numbers<[1], [0], [0], [1], [0, 0, 1, 1], [], []>} : vector<1x80xbf16>, vector<80x120xbf16>, vector<1x120xf32> -> vector<1x120xf32>
    %115 = arith.addf %109, %114 : vector<1x120xf32>
    %c4_108 = arith.constant 4 : index
    %c0_109 = arith.constant 0 : index
    %116 = vector.load %arg18[%c4_108, %c0_109] : memref<5x80xf32, #tpu.memory_space<vmem>>, vector<1x80xf32>
    %c4_110 = arith.constant 4 : index
    %c0_111 = arith.constant 0 : index
    %c0_112 = arith.constant 0 : index
    %117 = vector.load %arg10[%c4_110, %c0_111, %c0_112] : memref<5x80x120xbf16, #tpu.memory_space<vmem>>, vector<1x80x120xbf16>
    %118 = vector.shape_cast %117 : vector<1x80x120xbf16> to vector<80x120xbf16>
    %119 = arith.truncf %116 : vector<1x80xf32> to vector<1x80xbf16>
    %cst_113 = arith.constant dense<0.000000e+00> : vector<1x120xf32>
    %120 = tpu.matmul %119, %118, %cst_113 {dimension_numbers = #tpu.dot_dimension_numbers<[1], [0], [0], [1], [0, 0, 1, 1], [], []>} : vector<1x80xbf16>, vector<80x120xbf16>, vector<1x120xf32> -> vector<1x120xf32>
    %121 = arith.addf %115, %120 : vector<1x120xf32>
    %c0_114 = arith.constant 0 : index
    %c0_115 = arith.constant 0 : index
    %122 = vector.load %arg11[%c0_114, %c0_115] : memref<1x120xf32, #tpu.memory_space<vmem>>, vector<1x120xf32>
    %123 = arith.addf %121, %122 : vector<1x120xf32>
    %cst_116 = arith.constant 0.000000e+00 : f32
    %124 = vector.broadcast %cst_116 : f32 to vector<1x120xf32>
    %125 = arith.maximumf %123, %124 : vector<1x120xf32>
    %c0_117 = arith.constant 0 : index
    %c0_118 = arith.constant 0 : index
    %126 = vector.load %arg12[%c0_117, %c0_118] : memref<120x84xbf16, #tpu.memory_space<vmem>>, vector<120x84xbf16>
    %127 = arith.truncf %125 : vector<1x120xf32> to vector<1x120xbf16>
    %cst_119 = arith.constant dense<0.000000e+00> : vector<1x84xf32>
    %128 = tpu.matmul %127, %126, %cst_119 {dimension_numbers = #tpu.dot_dimension_numbers<[1], [0], [0], [1], [0, 0, 1, 1], [], []>} : vector<1x120xbf16>, vector<120x84xbf16>, vector<1x84xf32> -> vector<1x84xf32>
    %c0_120 = arith.constant 0 : index
    %c0_121 = arith.constant 0 : index
    %129 = vector.load %arg13[%c0_120, %c0_121] : memref<1x84xf32, #tpu.memory_space<vmem>>, vector<1x84xf32>
    %130 = arith.addf %128, %129 : vector<1x84xf32>
    %cst_122 = arith.constant 0.000000e+00 : f32
    %131 = vector.broadcast %cst_122 : f32 to vector<1x84xf32>
    %132 = arith.maximumf %130, %131 : vector<1x84xf32>
    %c0_123 = arith.constant 0 : index
    %c0_124 = arith.constant 0 : index
    %133 = vector.load %arg14[%c0_123, %c0_124] : memref<84x128xbf16, #tpu.memory_space<vmem>>, vector<84x128xbf16>
    %134 = arith.truncf %132 : vector<1x84xf32> to vector<1x84xbf16>
    %cst_125 = arith.constant dense<0.000000e+00> : vector<1x128xf32>
    %135 = tpu.matmul %134, %133, %cst_125 {dimension_numbers = #tpu.dot_dimension_numbers<[1], [0], [0], [1], [0, 0, 1, 1], [], []>} : vector<1x84xbf16>, vector<84x128xbf16>, vector<1x128xf32> -> vector<1x128xf32>
    %c0_126 = arith.constant 0 : index
    %c0_127 = arith.constant 0 : index
    %136 = vector.load %arg15[%c0_126, %c0_127] : memref<1x128xf32, #tpu.memory_space<vmem>>, vector<1x128xf32>
    %137 = arith.addf %135, %136 : vector<1x128xf32>
    %c0_128 = arith.constant 0 : index
    %c0_129 = arith.constant 0 : index
    %c0_130 = arith.constant 0 : index
    %138 = vector.load %arg16[%c0_128, %c0_129, %c0_130] : memref<1x1x128xf32, #tpu.memory_space<vmem>>, vector<1x1x128xf32>
    %139 = vector.shape_cast %138 : vector<1x1x128xf32> to vector<1x128xf32>
    %140 = vector.shape_cast %137 : vector<1x128xf32> to vector<1x1x128xf32>
    tpu.vector_store %arg16[%c0_128, %c0_129, %c0_130], %140 {strides = array<i32>} : memref<1x1x128xf32, #tpu.memory_space<vmem>>, vector<1x1x128xf32>,
    return
  }
  func.func @transform_0(%arg0: i32) -> (i32, i32, i32) {
    %c0_i32 = arith.constant 0 : i32
    %c0_i32_0 = arith.constant 0 : i32
    %c0_i32_1 = arith.constant 0 : i32
    return %arg0, %c0_i32, %c0_i32_0 : i32, i32, i32
  }
  func.func @transform_1(%arg0: i32) -> (i32, i32, i32) {
    %c0_i32 = arith.constant 0 : i32
    %c0_i32_0 = arith.constant 0 : i32
    %c0_i32_1 = arith.constant 0 : i32
    %c0_i32_2 = arith.constant 0 : i32
    return %c0_i32, %c0_i32_0, %c0_i32_1 : i32, i32, i32
  }
  func.func @transform_2(%arg0: i32) -> (i32, i32) {
    %c0_i32 = arith.constant 0 : i32
    %c0_i32_0 = arith.constant 0 : i32
    %c0_i32_1 = arith.constant 0 : i32
    return %c0_i32, %c0_i32_0 : i32, i32
  }
  func.func @transform_3(%arg0: i32) -> (i32, i32) {
    %c0_i32 = arith.constant 0 : i32
    %c0_i32_0 = arith.constant 0 : i32
    %c0_i32_1 = arith.constant 0 : i32
    return %c0_i32, %c0_i32_0 : i32, i32
  }
  func.func @transform_4(%arg0: i32) -> (i32, i32) {
    %c0_i32 = arith.constant 0 : i32
    %c0_i32_0 = arith.constant 0 : i32
    %c0_i32_1 = arith.constant 0 : i32
    return %c0_i32, %c0_i32_0 : i32, i32
  }
  func.func @transform_5(%arg0: i32) -> (i32, i32, i32) {
    %c0_i32 = arith.constant 0 : i32
    %c0_i32_0 = arith.constant 0 : i32
    %c0_i32_1 = arith.constant 0 : i32
    %c0_i32_2 = arith.constant 0 : i32
    return %c0_i32, %c0_i32_0, %c0_i32_1 : i32, i32, i32
  }
  func.func @transform_6(%arg0: i32) -> (i32, i32) {
    %c0_i32 = arith.constant 0 : i32
    %c0_i32_0 = arith.constant 0 : i32
    %c0_i32_1 = arith.constant 0 : i32
    return %c0_i32, %c0_i32_0 : i32, i32
  }
  func.func @transform_7(%arg0: i32) -> (i32, i32) {
    %c0_i32 = arith.constant 0 : i32
    %c0_i32_0 = arith.constant 0 : i32
    %c0_i32_1 = arith.constant 0 : i32
    return %c0_i32, %c0_i32_0 : i32, i32
  }
  func.func @transform_8(%arg0: i32) -> (i32, i32) {
    %c0_i32 = arith.constant 0 : i32
    %c0_i32_0 = arith.constant 0 : i32
    %c0_i32_1 = arith.constant 0 : i32
    return %c0_i32, %c0_i32_0 : i32, i32
  }
  func.func @transform_9(%arg0: i32) -> (i32, i32, i32) {
    %c0_i32 = arith.constant 0 : i32
    %c0_i32_0 = arith.constant 0 : i32
    %c0_i32_1 = arith.constant 0 : i32
    %c0_i32_2 = arith.constant 0 : i32
    return %c0_i32, %c0_i32_0, %c0_i32_1 : i32, i32, i32
  }
  func.func @transform_10(%arg0: i32) -> (i32, i32) {
    %c0_i32 = arith.constant 0 : i32
    %c0_i32_0 = arith.constant 0 : i32
    %c0_i32_1 = arith.constant 0 : i32
    return %c0_i32, %c0_i32_0 : i32, i32
  }
  func.func @transform_11(%arg0: i32) -> (i32, i32) {
    %c0_i32 = arith.constant 0 : i32
    %c0_i32_0 = arith.constant 0 : i32
    %c0_i32_1 = arith.constant 0 : i32
    return %c0_i32, %c0_i32_0 : i32, i32
  }
  func.func @transform_12(%arg0: i32) -> (i32, i32) {
    %c0_i32 = arith.constant 0 : i32
    %c0_i32_0 = arith.constant 0 : i32
    %c0_i32_1 = arith.constant 0 : i32
    return %c0_i32, %c0_i32_0 : i32, i32
  }
  func.func @transform_13(%arg0: i32) -> (i32, i32) {
    %c0_i32 = arith.constant 0 : i32
    %c0_i32_0 = arith.constant 0 : i32
    %c0_i32_1 = arith.constant 0 : i32
    return %c0_i32, %c0_i32_0 : i32, i32
  }
  func.func @transform_14(%arg0: i32) -> (i32, i32) {
    %c0_i32 = arith.constant 0 : i32
    %c0_i32_0 = arith.constant 0 : i32
    %c0_i32_1 = arith.constant 0 : i32
    return %c0_i32, %c0_i32_0 : i32, i32
  }
  func.func @transform_15(%arg0: i32) -> (i32, i32, i32) {
    %c0_i32 = arith.constant 0 : i32
    %c0_i32_0 = arith.constant 0 : i32
    %c0_i32_1 = arith.constant 0 : i32
    return %arg0, %c0_i32, %c0_i32_0 : i32, i32, i32
  }
}

</mosaic_0001>

<llo_original>
// kernel: tile.18
$region0: #{tile.18}
  #allocation2 [shape = 's32[1]{0}', space=sflag, size = 0x4, scoped, tag = 'scoped memory for tile.18']
  %s0 = inlined_call_operand.hbm [shape: f32[16], index: 0, kind: input, shape index: {}]
  %s1 = inlined_call_operand.vmem [shape: f32[10,16], index: 1, kind: output, shape index: {}]
  $region1: #{tile.18} parent=0
    #allocation0 [shape = 'u8[512]{0}', space=vmem, size = 0x400, scoped, tag = 'operand span for operand 0']
    #allocation1 [shape = 's32[1]{0}', space=sflag, size = 0x4, scoped, tag = 'scoped memory for tile.18']
    %2 = vsyncpa [#allocation1], 0
    // Predicated region
    $region2: #{tile.18} parent=1 // pred_check
      _
    $region3: #{tile.18} parent=1 // pred_check_branch
      %4 = sbr.rel (0) target = $region5
    $region4: #{tile.18} parent=1 // pred_region
      %s6 = ssub.s32 16, 16
      %7 = vsyncadd [#allocation1], %s6
      %s9 = sshll.u32 [#allocation0], 4
      %s10 = int_to_ptr.vmem [resolvable:$true] %s9
      %12 = dma.hbm_to_vmem [thread:$0]  %s0, 16, %s10, [#allocation1]
    $region5: #{tile.18} parent=1 // pred_fallthru
      _
    // Predicated region
    $region6: #{tile.18} parent=1 // pred_check
      _
    $region7: #{tile.18} parent=1 // pred_check_branch
      %14 = sbr.rel (0) target = $region9
    $region8: #{tile.18} parent=1 // pred_region
      %15 = dma.done [#allocation1], 16
    $region9: #{tile.18} parent=1 // pred_fallthru
      _
    %v16 = vld [vmem:[#allocation0] ss:$0 sm:$0xff]
    %17 = vst [vmem:[%s1] sm:$0xff] %v16
    %s18 = scalar_lea.vmem %s1, 8
    %19 = vst [vmem:[%s18] sm:$0xff] %v16
    %20 = vsyncpa [#allocation1], 1

// kernel: tile.19
$region0: #{tile.19}
  %s0 = inlined_call_operand.vmem [shape: f32[10,16], index: 0, kind: input, shape index: {}]
  %s1 = inlined_call_operand.vmem [shape: f32[1,160], index: 1, kind: output, shape index: {}]
  $region1: #{tile.19} parent=0
    #allocation0 [shape = 'u8[8192]{0}', space=vmem, size = 0x2000, scoped, tag = 'scoped mem for output reshape']
    %s2 = smov 3
    %v3 = vld [vmem:[%s0] ss:$8 sm:%s2]
    %vm4 = vcmask 130048
    %5 = vst.msk [vmem:[#allocation0] ss:$8 sm:$0x3] %vm4, %v3
    %s6 = scalar_lea.vmem %s0, 7
    %v7 = vld [vmem:[%s6] sm:$0x1]
    %8 = vrot.lane.b32.xlu0 %v7, 112
    %v9 = vpop.permute.xlu0 %8
    %vm10 = vcmask 1048448
    %11 = vst.msk [vmem:[#allocation0] sm:$0x1] %vm10, %v9
    %s12 = scalar_lea.vmem %s0, 6
    %v13 = vld [vmem:[%s12] sm:$0x1]
    %14 = vrot.lane.b32.xlu0 %v13, 96
    %v15 = vpop.permute.xlu0 %14
    %vm16 = vcmask 917248
    %17 = vst.msk [vmem:[#allocation0] sm:$0x1] %vm16, %v15
    %s18 = scalar_lea.vmem %s0, 5
    %v19 = vld [vmem:[%s18] sm:$0x1]
    %20 = vrot.lane.b32.xlu0 %v19, 80
    %v21 = vpop.permute.xlu0 %20
    %vm22 = vcmask 786048
    %23 = vst.msk [vmem:[#allocation0] sm:$0x1] %vm22, %v21
    %s24 = scalar_lea.vmem %s0, 4
    %v25 = vld [vmem:[%s24] sm:$0x1]
    %26 = vrot.lane.b32.xlu0 %v25, 64
    %v27 = vpop.permute.xlu0 %26
    %vm28 = vcmask 654848
    %29 = vst.msk [vmem:[#allocation0] sm:$0x1] %vm28, %v27
    %s30 = scalar_lea.vmem %s0, 3
    %v31 = vld [vmem:[%s30] sm:$0x1]
    %32 = vrot.lane.b32.xlu0 %v31, 48
    %v33 = vpop.permute.xlu0 %32
    %vm34 = vcmask 523648
    %35 = vst.msk [vmem:[#allocation0] sm:$0x1] %vm34, %v33
    %s36 = scalar_lea.vmem %s0, 2
    %v37 = vld [vmem:[%s36] sm:$0x1]
    %38 = vrot.lane.b32.xlu0 %v37, 32
    %v39 = vpop.permute.xlu0 %38
    %vm40 = vcmask 392448
    %41 = vst.msk [vmem:[#allocation0] sm:$0x1] %vm40, %v39
    %s42 = scalar_lea.vmem %s0, 1
    %s43 = smov 3
    %v44 = vld [vmem:[%s42] ss:$8 sm:%s43]
    %45 = vrot.lane.b32.xlu0 %v44, 16
    %v46 = vpop.permute.xlu0 %45
    %vm47 = vcmask 261248
    %48 = vst.msk [vmem:[#allocation0] ss:$8 sm:$0x3] %vm47, %v46
    %s50 = sshllo.u32 0, 1
    %v52 = vld [vmem:[#allocation0] sm:%s50]
    %s53 = sshllo.u32 0, 1
    %54 = vst [vmem:[%s1] sm:%s53] %v52
    %s55 = scalar_lea.vmem [#allocation0], 8
    %v56 = vld [vmem:[%s55] sm:%s50]
    %s57 = sshllo.u32 0, 1
    %s58 = scalar_lea.vmem %s1, 1
    %59 = vst [vmem:[%s58] sm:%s57] %v56

// kernel: tile.13
$region0: #{tile.13}
  #allocation2 [shape = 's32[1]{0}', space=sflag, size = 0x4, scoped, tag = 'scoped memory for tile.13']
  %s0 = inlined_call_operand.hbm [shape: f32[6], index: 0, kind: input, shape index: {}]
  %s1 = inlined_call_operand.vmem [shape: f32[28,6], index: 1, kind: output, shape index: {}]
  $region1: #{tile.13} parent=0
    #allocation0 [shape = 'u8[512]{0}', space=vmem, size = 0x400, scoped, tag = 'operand span for operand 0']
    #allocation1 [shape = 's32[1]{0}', space=sflag, size = 0x4, scoped, tag = 'scoped memory for tile.13']
    %2 = vsyncpa [#allocation1], 0
    // Predicated region
    $region2: #{tile.13} parent=1 // pred_check
      _
    $region3: #{tile.13} parent=1 // pred_check_branch
      %4 = sbr.rel (0) target = $region5
    $region4: #{tile.13} parent=1 // pred_region
      %s6 = ssub.s32 16, 16
      %7 = vsyncadd [#allocation1], %s6
      %s9 = sshll.u32 [#allocation0], 4
      %s10 = int_to_ptr.vmem [resolvable:$true] %s9
      %12 = dma.hbm_to_vmem [thread:$0]  %s0, 16, %s10, [#allocation1]
    $region5: #{tile.13} parent=1 // pred_fallthru
      _
    // Predicated region
    $region6: #{tile.13} parent=1 // pred_check
      _
    $region7: #{tile.13} parent=1 // pred_check_branch
      %14 = sbr.rel (0) target = $region9
    $region8: #{tile.13} parent=1 // pred_region
      %15 = dma.done [#allocation1], 16
    $region9: #{tile.13} parent=1 // pred_fallthru
      _
    %v16 = vld [vmem:[#allocation0] ss:$0 sm:$0xff]
    %17 = vst [vmem:[%s1] sm:$0xff] %v16
    %s18 = scalar_lea.vmem %s1, 8
    %19 = vst [vmem:[%s18] sm:$0xff] %v16
    %s20 = scalar_lea.vmem %s1, 16
    %21 = vst [vmem:[%s20] sm:$0xff] %v16
    %s22 = scalar_lea.vmem %s1, 24
    %23 = vst [vmem:[%s22] sm:$0xff] %v16
    %24 = vsyncpa [#allocation1], 1

// kernel: tile.14
$region0: #{tile.14}
  %s0 = inlined_call_operand.vmem [shape: f32[28,6], index: 0, kind: input, shape index: {}]
  %s1 = inlined_call_operand.vmem [shape: f32[1,168], index: 1, kind: output, shape index: {}]
  $region1: #{tile.14} parent=0
    #allocation0 [shape = 'u8[8192]{0}', space=vmem, size = 0x2000, scoped, tag = 'scoped mem for output reshape']
    %v2 = vld [vmem:[%s0] sm:$0x1]
    %vm3 = vcmask 48128
    %4 = vst.msk [vmem:[#allocation0] sm:$0x1] %vm3, %v2
    %s5 = scalar_lea.vmem %s0, 21
    %v6 = vld [vmem:[%s5] sm:$0x1]
    %s7 = scalar_lea.vmem %s0, 21
    %v8 = vld [vmem:[%s7] sm:$0x1]
    %vm9 = vcmask 15360
    %v10 = vsel %vm9, %v8, %v6
    %11 = vrot.lane.b32.xlu0 %v10, 126
    %v12 = vpop.permute.xlu0 %11
    %vm13 = vcmask 31744
    %s14 = scalar_lea.vmem [#allocation0], 8
    %15 = vst.msk [vmem:[%s14] sm:$0x1] %vm13, %v12
    %vm16 = vcmask 1048560
    %17 = vst.msk [vmem:[#allocation0] sm:$0x1] %vm16, %v12
    %s18 = scalar_lea.vmem %s0, 20
    %v19 = vld [vmem:[%s18] sm:$0x1]
    %20 = vrot.lane.b32.xlu0 %v19, 120
    %v21 = vpop.permute.xlu0 %20
    %vm22 = vcmask 1032128
    %23 = vst.msk [vmem:[#allocation0] sm:$0x1] %vm22, %v21
    %s24 = scalar_lea.vmem %s0, 19
    %v25 = vld [vmem:[%s24] sm:$0x1]
    %26 = vrot.lane.b32.xlu0 %v25, 114
    %v27 = vpop.permute.xlu0 %26
    %vm28 = vcmask 982928
    %29 = vst.msk [vmem:[#allocation0] sm:$0x1] %vm28, %v27
    %s30 = scalar_lea.vmem %s0, 18
    %v31 = vld [vmem:[%s30] sm:$0x1]
    %32 = vrot.lane.b32.xlu0 %v31, 108
    %v33 = vpop.permute.xlu0 %32
    %vm34 = vcmask 933728
    %35 = vst.msk [vmem:[#allocation0] sm:$0x1] %vm34, %v33
    %s36 = scalar_lea.vmem %s0, 17
    %v37 = vld [vmem:[%s36] sm:$0x1]
    %38 = vrot.lane.b32.xlu0 %v37, 102
    %v39 = vpop.permute.xlu0 %38
    %vm40 = vcmask 884528
    %41 = vst.msk [vmem:[#allocation0] sm:$0x1] %vm40, %v39
    %s42 = scalar_lea.vmem %s0, 16
    %v43 = vld [vmem:[%s42] sm:$0x1]
    %44 = vrot.lane.b32.xlu0 %v43, 96
    %v45 = vpop.permute.xlu0 %44
    %vm46 = vcmask 835328
    %47 = vst.msk [vmem:[#allocation0] sm:$0x1] %vm46, %v45
    %s48 = scalar_lea.vmem %s0, 15
    %v49 = vld [vmem:[%s48] sm:$0x1]
    %50 = vrot.lane.b32.xlu0 %v49, 90
    %v51 = vpop.permute.xlu0 %50
    %vm52 = vcmask 786128
    %53 = vst.msk [vmem:[#allocation0] sm:$0x1] %vm52, %v51
    %s54 = scalar_lea.vmem %s0, 14
    %v55 = vld [vmem:[%s54] sm:$0x1]
    %56 = vrot.lane.b32.xlu0 %v55, 84
    %v57 = vpop.permute.xlu0 %56
    %vm58 = vcmask 736928
    %59 = vst.msk [vmem:[#allocation0] sm:$0x1] %vm58, %v57
    %s60 = scalar_lea.vmem %s0, 13
    %v61 = vld [vmem:[%s60] sm:$0x1]
    %62 = vrot.lane.b32.xlu0 %v61, 78
    %v63 = vpop.permute.xlu0 %62
    %vm64 = vcmask 687728
    %65 = vst.msk [vmem:[#allocation0] sm:$0x1] %vm64, %v63
    %s66 = scalar_lea.vmem %s0, 12
    %v67 = vld [vmem:[%s66] sm:$0x1]
    %68 = vrot.lane.b32.xlu0 %v67, 72
    %v69 = vpop.permute.xlu0 %68
    %vm70 = vcmask 638528
    %71 = vst.msk [vmem:[#allocation0] sm:$0x1] %vm70, %v69
    %s72 = scalar_lea.vmem %s0, 11
    %v73 = vld [vmem:[%s72] sm:$0x1]
    %74 = vrot.lane.b32.xlu0 %v73, 66
    %v75 = vpop.permute.xlu0 %74
    %vm76 = vcmask 589328
    %77 = vst.msk [vmem:[#allocation0] sm:$0x1] %vm76, %v75
    %s78 = scalar_lea.vmem %s0, 10
    %v79 = vld [vmem:[%s78] sm:$0x1]
    %80 = vrot.lane.b32.xlu0 %v79, 60
    %v81 = vpop.permute.xlu0 %80
    %vm82 = vcmask 540128
    %83 = vst.msk [vmem:[#allocation0] sm:$0x1] %vm82, %v81
    %s84 = scalar_lea.vmem %s0, 9
    %v85 = vld [vmem:[%s84] sm:$0x1]
    %86 = vrot.lane.b32.xlu0 %v85, 54
    %v87 = vpop.permute.xlu0 %86
    %vm88 = vcmask 490928
    %89 = vst.msk [vmem:[#allocation0] sm:$0x1] %vm88, %v87
    %s90 = scalar_lea.vmem %s0, 8
    %v91 = vld [vmem:[%s90] sm:$0x1]
    %92 = vrot.lane.b32.xlu0 %v91, 48
    %v93 = vpop.permute.xlu0 %92
    %vm94 = vcmask 441728
    %95 = vst.msk [vmem:[#allocation0] sm:$0x1] %vm94, %v93
    %s96 = scalar_lea.vmem %s0, 7
    %v97 = vld [vmem:[%s96] sm:$0x1]
    %98 = vrot.lane.b32.xlu0 %v97, 42
    %v99 = vpop.permute.xlu0 %98
    %vm100 = vcmask 392528
    %101 = vst.msk [vmem:[#allocation0] sm:$0x1] %vm100, %v99
    %s102 = scalar_lea.vmem %s0, 6
    %v103 = vld [vmem:[%s102] sm:$0x1]
    %104 = vrot.lane.b32.xlu0 %v103, 36
    %v105 = vpop.permute.xlu0 %104
    %vm106 = vcmask 343328
    %107 = vst.msk [vmem:[#allocation0] sm:$0x1] %vm106, %v105
    %s108 = scalar_lea.vmem %s0, 27
    %v109 = vld [vmem:[%s108] sm:$0x1]
    %110 = vrot.lane.b32.xlu0 %v109, 34
    %v111 = vpop.permute.xlu0 %110
    %vm112 = vcmask 326928
    %s113 = scalar_lea.vmem [#allocation0], 8
    %114 = vst.msk [vmem:[%s113] sm:$0x1] %vm112, %v111
    %s115 = scalar_lea.vmem %s0, 5
    %v116 = vld [vmem:[%s115] sm:$0x1]
    %117 = vrot.lane.b32.xlu0 %v116, 30
    %v118 = vpop.permute.xlu0 %117
    %vm119 = vcmask 294128
    %120 = vst.msk [vmem:[#allocation0] sm:$0x1] %vm119, %v118
    %s121 = scalar_lea.vmem %s0, 26
    %v122 = vld [vmem:[%s121] sm:$0x1]
    %123 = vrot.lane.b32.xlu0 %v122, 28
    %v124 = vpop.permute.xlu0 %123
    %vm125 = vcmask 277728
    %s126 = scalar_lea.vmem [#allocation0], 8
    %127 = vst.msk [vmem:[%s126] sm:$0x1] %vm125, %v124
    %s128 = scalar_lea.vmem %s0, 4
    %v129 = vld [vmem:[%s128] sm:$0x1]
    %130 = vrot.lane.b32.xlu0 %v129, 24
    %v131 = vpop.permute.xlu0 %130
    %vm132 = vcmask 244928
    %133 = vst.msk [vmem:[#allocation0] sm:$0x1] %vm132, %v131
    %s134 = scalar_lea.vmem %s0, 25
    %v135 = vld [vmem:[%s134] sm:$0x1]
    %136 = vrot.lane.b32.xlu0 %v135, 22
    %v137 = vpop.permute.xlu0 %136
    %vm138 = vcmask 228528
    %s139 = scalar_lea.vmem [#allocation0], 8
    %140 = vst.msk [vmem:[%s139] sm:$0x1] %vm138, %v137
    %s141 = scalar_lea.vmem %s0, 3
    %v142 = vld [vmem:[%s141] sm:$0x1]
    %143 = vrot.lane.b32.xlu0 %v142, 18
    %v144 = vpop.permute.xlu0 %143
    %vm145 = vcmask 195728
    %146 = vst.msk [vmem:[#allocation0] sm:$0x1] %vm145, %v144
    %s147 = scalar_lea.vmem %s0, 24
    %v148 = vld [vmem:[%s147] sm:$0x1]
    %149 = vrot.lane.b32.xlu0 %v148, 16
    %v150 = vpop.permute.xlu0 %149
    %vm151 = vcmask 179328
    %s152 = scalar_lea.vmem [#allocation0], 8
    %153 = vst.msk [vmem:[%s152] sm:$0x1] %vm151, %v150
    %s154 = scalar_lea.vmem %s0, 2
    %v155 = vld [vmem:[%s154] sm:$0x1]
    %156 = vrot.lane.b32.xlu0 %v155, 12
    %v157 = vpop.permute.xlu0 %156
    %vm158 = vcmask 146528
    %159 = vst.msk [vmem:[#allocation0] sm:$0x1] %vm158, %v157
    %s160 = scalar_lea.vmem %s0, 23
    %v161 = vld [vmem:[%s160] sm:$0x1]
    %162 = vrot.lane.b32.xlu0 %v161, 10
    %v163 = vpop.permute.xlu0 %162
    %vm164 = vcmask 130128
    %s165 = scalar_lea.vmem [#allocation0], 8
    %166 = vst.msk [vmem:[%s165] sm:$0x1] %vm164, %v163
    %s167 = scalar_lea.vmem %s0, 1
    %v168 = vld [vmem:[%s167] sm:$0x1]
    %169 = vrot.lane.b32.xlu0 %v168, 6
    %v170 = vpop.permute.xlu0 %169
    %vm171 = vcmask 97328
    %172 = vst.msk [vmem:[#allocation0] sm:$0x1] %vm171, %v170
    %s173 = scalar_lea.vmem %s0, 22
    %v174 = vld [vmem:[%s173] sm:$0x1]
    %175 = vrot.lane.b32.xlu0 %v174, 4
    %v176 = vpop.permute.xlu0 %175
    %vm177 = vcmask 80928
    %s178 = scalar_lea.vmem [#allocation0], 8
    %179 = vst.msk [vmem:[%s178] sm:$0x1] %vm177, %v176
    %s181 = sshllo.u32 0, 1
    %v183 = vld [vmem:[#allocation0] sm:%s181]
    %s184 = sshllo.u32 0, 1
    %185 = vst [vmem:[%s1] sm:%s184] %v183
    %s186 = scalar_lea.vmem [#allocation0], 8
    %v187 = vld [vmem:[%s186] sm:%s181]
    %s188 = sshllo.u32 0, 1
    %s189 = scalar_lea.vmem %s1, 1
    %190 = vst [vmem:[%s189] sm:%s188] %v187

// kernel: lenet_forward.1
$region0: #{lenet_forward.1}
  #allocation0 [shape = 'u32[]', space=smem, size = 0x4, offset = 0x4, fixed_abs, tag = 'smem constant byte address 0x4 - core index']
  #allocation1 [shape = 'u32[144,128]{1,0:T(1,128)}', space=vmem, size = 0x12000, scoped, tag = 'internal scratch']
  #allocation2 [shape = 'f32[14,84]{1,0:T(8,128)}', space=vmem, size = 0x2000, scoped, tag = 'scratch operand']
  #allocation3 [shape = 'f32[5,80]{1,0:T(8,128)}', space=vmem, size = 0x1000, scoped, tag = 'scratch operand']
  %s0 = inlined_call_operand.vmem [shape: f32[2,32,96], index: 0, kind: input, shape index: {}]
  %s1 = inlined_call_operand.vmem [shape: bf16[5,96,168], index: 1, kind: input, shape index: {}]
  %s2 = inlined_call_operand.vmem [shape: f32[1,168], index: 2, kind: input, shape index: {}]
  %s3 = inlined_call_operand.vmem [shape: bf16[14,28], index: 3, kind: input, shape index: {}]
  %s4 = inlined_call_operand.vmem [shape: bf16[168,84], index: 4, kind: input, shape index: {}]
  %s5 = inlined_call_operand.vmem [shape: bf16[5,84,160], index: 5, kind: input, shape index: {}]
  %s6 = inlined_call_operand.vmem [shape: f32[1,160], index: 6, kind: input, shape index: {}]
  %s7 = inlined_call_operand.vmem [shape: bf16[5,10], index: 7, kind: input, shape index: {}]
  %s8 = inlined_call_operand.vmem [shape: bf16[160,80], index: 8, kind: input, shape index: {}]
  %s9 = inlined_call_operand.vmem [shape: bf16[5,80,120], index: 9, kind: input, shape index: {}]
  %s10 = inlined_call_operand.vmem [shape: f32[1,120], index: 10, kind: input, shape index: {}]
  %s11 = inlined_call_operand.vmem [shape: bf16[120,84], index: 11, kind: input, shape index: {}]
  %s12 = inlined_call_operand.vmem [shape: f32[1,84], index: 12, kind: input, shape index: {}]
  %s13 = inlined_call_operand.vmem [shape: bf16[84,128], index: 13, kind: input, shape index: {}]
  %s14 = inlined_call_operand.vmem [shape: f32[1,128], index: 14, kind: input, shape index: {}]
  %s15 = inlined_call_operand.hbm [shape: f32[2,1,128], index: 15, kind: output, shape index: {}]
  %s16 = sld [smem:[#allocation0]]
  $region93: #{lenet_forward.1} parent=0
    _
  %s18 = ssub.s32 1, %s16
  %s19 = scalar_select 0, %s18, %s16
  $region1: #{lenet_forward.1} parent=0
    #allocation4 [shape = 'u8[1024]{0}', space=vmem, size = 0x400, scoped, tag = 'output window, operand 0']
    #allocation5 [shape = 's32[2]{0}', space=sflag, size = 0x8, scoped, tag = 'scoped memory for lenet_forward.1']
    %20 = vsyncpa [#allocation5], 0
    %s21 = scalar_lea.sflag [#allocation5], 1
    %22 = vsyncpa %s21, 0
    loop: start=0, step=1, limit=4
    $region2: #{lenet_forward.1} parent=1 // loop_pre_header
      _
    $region3: #{lenet_forward.1} parent=1 // loop_header
      %s24 = sphi 0, %s28
      %p25 = scmp.ge.s32.totalorder %s24, 4
      %s34 = sphi 0, %s36
      %s37 = sphi 0, %s34
      %s38 = sphi 0, %s37
      %s54 = sphi 0, %s38
      %s58 = sphi 0, %s58
      %s60 = sphi 0, %s58
      %s61 = sphi 0, %s60
      %s75 = sphi 0, %s61
      %s79 = sphi 0, %s79
      %s81 = sphi 0, %s79
      %s82 = sphi 0, %s81
      %s96 = sphi 0, %s82
      %s100 = sphi 0, %s100
      %s102 = sphi 0, %s100
      %s103 = sphi 0, %s102
      %s117 = sphi 0, %s103
      %s121 = sphi 0, %s121
      %s123 = sphi 0, %s121
      %s124 = sphi 0, %s123
      %s138 = sphi 0, %s124
      %s142 = sphi 0, %s142
      %s144 = sphi 0, %s142
      %s145 = sphi 0, %s144
      %s159 = sphi 0, %s145
      %s163 = sphi 0, %s163
      %s165 = sphi 0, %s163
      %s166 = sphi 0, %s165
      %s180 = sphi 0, %s166
      %s184 = sphi 0, %s184
      %s186 = sphi 0, %s184
      %s187 = sphi 0, %s186
      %s201 = sphi 0, %s187
      %s205 = sphi 0, %s205
      %s207 = sphi 0, %s205
      %s208 = sphi 0, %s207
      %s222 = sphi 0, %s208
      %s226 = sphi 0, %s226
      %s228 = sphi 0, %s226
      %s229 = sphi 0, %s228
      %s243 = sphi 0, %s229
      %s247 = sphi 0, %s247
      %s249 = sphi 0, %s247
      %s250 = sphi 0, %s249
      %s264 = sphi 0, %s250
      %s268 = sphi 0, %s268
      %s270 = sphi 0, %s268
      %s271 = sphi 0, %s270
      %s285 = sphi 0, %s271
      %s289 = sphi 0, %s289
      %s291 = sphi 0, %s289
      %s292 = sphi 0, %s291
      %s306 = sphi 0, %s292
      %s310 = sphi 0, %s310
      %s312 = sphi 0, %s310
      %s313 = sphi 0, %s312
      %s327 = sphi 0, %s313
      %s331 = sphi 0, %s331
      %s333 = sphi 0, %s331
      %s334 = sphi 0, %s333
      %s348 = sphi 0, %s334
      %s354 = sphi 0, %s356
      %s357 = sphi 0, %s354
      %s358 = sphi 0, %s357
      %s374 = sphi 0, %s358
    $region4: #{lenet_forward.1} parent=1 // loop_header_branch
      %27 = sbr.rel (%p25) target = $region8
    $region5: #{lenet_forward.1} parent=1 // loop_body
      %s29 = ssub.s32 %s24, 1
      %s30 = ssub.s32 %s24, 2
      %s31 = sadd.s32 %s24, 1
      %s32 = ssub.s32 %s24, %s31
      %p33 = scmp.eq.s32.totalorder %s32, 0
      %s35 = sadd.s32 %s34, 1
      %s36 = scalar_select %p33, %s34, %s35
      %p39 = pneg %p33
      %p40 = scmp.eq.s32.totalorder %s24, 1
      %p41 = por %p39, %p40
      %p42 = scmp.ne.s32.totalorder %s34, %s37
      %p43 = scmp.eq.s32.totalorder %s24, 0
      %p44 = por %p42, %p43
      %p45 = scmp.ne.s32.totalorder %s34, %s37
      %p46 = scmp.eq.s32.totalorder %s29, 1
      %p47 = por %p45, %p46
      %p48 = scmp.ne.s32.totalorder %s37, %s38
      %p49 = scmp.eq.s32.totalorder %s29, 0
      %p50 = por %p48, %p49
      %p51 = scmp.ne.s32.totalorder %s37, %s38
      %p52 = scmp.eq.s32.totalorder %s30, 1
      %p53 = por %p51, %p52
      %p55 = scmp.ne.s32.totalorder %s38, %s54
      %p56 = scmp.eq.s32.totalorder %s30, 0
      %p57 = por %p55, %p56
      %s59 = sadd.s32 %s58, 1
      %p62 = scmp.eq.s32.totalorder %s24, 1
      %p63 = scmp.ne.s32.totalorder %s58, %s60
      %p64 = scmp.eq.s32.totalorder %s24, 0
      %p65 = por %p63, %p64
      %p66 = scmp.ne.s32.totalorder %s58, %s60
      %p67 = scmp.eq.s32.totalorder %s29, 1
      %p68 = por %p66, %p67
      %p69 = scmp.ne.s32.totalorder %s60, %s61
      %p70 = scmp.eq.s32.totalorder %s29, 0
      %p71 = por %p69, %p70
      %p72 = scmp.ne.s32.totalorder %s60, %s61
      %p73 = scmp.eq.s32.totalorder %s30, 1
      %p74 = por %p72, %p73
      %p76 = scmp.ne.s32.totalorder %s61, %s75
      %p77 = scmp.eq.s32.totalorder %s30, 0
      %p78 = por %p76, %p77
      %s80 = sadd.s32 %s79, 1
      %p83 = scmp.eq.s32.totalorder %s24, 1
      %p84 = scmp.ne.s32.totalorder %s79, %s81
      %p85 = scmp.eq.s32.totalorder %s24, 0
      %p86 = por %p84, %p85
      %p87 = scmp.ne.s32.totalorder %s79, %s81
      %p88 = scmp.eq.s32.totalorder %s29, 1
      %p89 = por %p87, %p88
      %p90 = scmp.ne.s32.totalorder %s81, %s82
      %p91 = scmp.eq.s32.totalorder %s29, 0
      %p92 = por %p90, %p91
      %p93 = scmp.ne.s32.totalorder %s81, %s82
      %p94 = scmp.eq.s32.totalorder %s30, 1
      %p95 = por %p93, %p94
      %p97 = scmp.ne.s32.totalorder %s82, %s96
      %p98 = scmp.eq.s32.totalorder %s30, 0
      %p99 = por %p97, %p98
      %s101 = sadd.s32 %s100, 1
      %p104 = scmp.eq.s32.totalorder %s24, 1
      %p105 = scmp.ne.s32.totalorder %s100, %s102
      %p106 = scmp.eq.s32.totalorder %s24, 0
      %p107 = por %p105, %p106
      %p108 = scmp.ne.s32.totalorder %s100, %s102
      %p109 = scmp.eq.s32.totalorder %s29, 1
      %p110 = por %p108, %p109
      %p111 = scmp.ne.s32.totalorder %s102, %s103
      %p112 = scmp.eq.s32.totalorder %s29, 0
      %p113 = por %p111, %p112
      %p114 = scmp.ne.s32.totalorder %s102, %s103
      %p115 = scmp.eq.s32.totalorder %s30, 1
      %p116 = por %p114, %p115
      %p118 = scmp.ne.s32.totalorder %s103, %s117
      %p119 = scmp.eq.s32.totalorder %s30, 0
      %p120 = por %p118, %p119
      %s122 = sadd.s32 %s121, 1
      %p125 = scmp.eq.s32.totalorder %s24, 1
      %p126 = scmp.ne.s32.totalorder %s121, %s123
      %p127 = scmp.eq.s32.totalorder %s24, 0
      %p128 = por %p126, %p127
      %p129 = scmp.ne.s32.totalorder %s121, %s123
      %p130 = scmp.eq.s32.totalorder %s29, 1
      %p131 = por %p129, %p130
      %p132 = scmp.ne.s32.totalorder %s123, %s124
      %p133 = scmp.eq.s32.totalorder %s29, 0
      %p134 = por %p132, %p133
      %p135 = scmp.ne.s32.totalorder %s123, %s124
      %p136 = scmp.eq.s32.totalorder %s30, 1
      %p137 = por %p135, %p136
      %p139 = scmp.ne.s32.totalorder %s124, %s138
      %p140 = scmp.eq.s32.totalorder %s30, 0
      %p141 = por %p139, %p140
      %s143 = sadd.s32 %s142, 1
      %p146 = scmp.eq.s32.totalorder %s24, 1
      %p147 = scmp.ne.s32.totalorder %s142, %s144
      %p148 = scmp.eq.s32.totalorder %s24, 0
      %p149 = por %p147, %p148
      %p150 = scmp.ne.s32.totalorder %s142, %s144
      %p151 = scmp.eq.s32.totalorder %s29, 1
      %p152 = por %p150, %p151
      %p153 = scmp.ne.s32.totalorder %s144, %s145
      %p154 = scmp.eq.s32.totalorder %s29, 0
      %p155 = por %p153, %p154
      %p156 = scmp.ne.s32.totalorder %s144, %s145
      %p157 = scmp.eq.s32.totalorder %s30, 1
      %p158 = por %p156, %p157
      %p160 = scmp.ne.s32.totalorder %s145, %s159
      %p161 = scmp.eq.s32.totalorder %s30, 0
      %p162 = por %p160, %p161
      %s164 = sadd.s32 %s163, 1
      %p167 = scmp.eq.s32.totalorder %s24, 1
      %p168 = scmp.ne.s32.totalorder %s163, %s165
      %p169 = scmp.eq.s32.totalorder %s24, 0
      %p170 = por %p168, %p169
      %p171 = scmp.ne.s32.totalorder %s163, %s165
      %p172 = scmp.eq.s32.totalorder %s29, 1
      %p173 = por %p171, %p172
      %p174 = scmp.ne.s32.totalorder %s165, %s166
      %p175 = scmp.eq.s32.totalorder %s29, 0
      %p176 = por %p174, %p175
      %p177 = scmp.ne.s32.totalorder %s165, %s166
      %p178 = scmp.eq.s32.totalorder %s30, 1
      %p179 = por %p177, %p178
      %p181 = scmp.ne.s32.totalorder %s166, %s180
      %p182 = scmp.eq.s32.totalorder %s30, 0
      %p183 = por %p181, %p182
      %s185 = sadd.s32 %s184, 1
      %p188 = scmp.eq.s32.totalorder %s24, 1
      %p189 = scmp.ne.s32.totalorder %s184, %s186
      %p190 = scmp.eq.s32.totalorder %s24, 0
      %p191 = por %p189, %p190
      %p192 = scmp.ne.s32.totalorder %s184, %s186
      %p193 = scmp.eq.s32.totalorder %s29, 1
      %p194 = por %p192, %p193
      %p195 = scmp.ne.s32.totalorder %s186, %s187
      %p196 = scmp.eq.s32.totalorder %s29, 0
      %p197 = por %p195, %p196
      %p198 = scmp.ne.s32.totalorder %s186, %s187
      %p199 = scmp.eq.s32.totalorder %s30, 1
      %p200 = por %p198, %p199
      %p202 = scmp.ne.s32.totalorder %s187, %s201
      %p203 = scmp.eq.s32.totalorder %s30, 0
      %p204 = por %p202, %p203
      %s206 = sadd.s32 %s205, 1
      %p209 = scmp.eq.s32.totalorder %s24, 1
      %p210 = scmp.ne.s32.totalorder %s205, %s207
      %p211 = scmp.eq.s32.totalorder %s24, 0
      %p212 = por %p210, %p211
      %p213 = scmp.ne.s32.totalorder %s205, %s207
      %p214 = scmp.eq.s32.totalorder %s29, 1
      %p215 = por %p213, %p214
      %p216 = scmp.ne.s32.totalorder %s207, %s208
      %p217 = scmp.eq.s32.totalorder %s29, 0
      %p218 = por %p216, %p217
      %p219 = scmp.ne.s32.totalorder %s207, %s208
      %p220 = scmp.eq.s32.totalorder %s30, 1
      %p221 = por %p219, %p220
      %p223 = scmp.ne.s32.totalorder %s208, %s222
      %p224 = scmp.eq.s32.totalorder %s30, 0
      %p225 = por %p223, %p224
      %s227 = sadd.s32 %s226, 1
      %p230 = scmp.eq.s32.totalorder %s24, 1
      %p231 = scmp.ne.s32.totalorder %s226, %s228
      %p232 = scmp.eq.s32.totalorder %s24, 0
      %p233 = por %p231, %p232
      %p234 = scmp.ne.s32.totalorder %s226, %s228
      %p235 = scmp.eq.s32.totalorder %s29, 1
      %p236 = por %p234, %p235
      %p237 = scmp.ne.s32.totalorder %s228, %s229
      %p238 = scmp.eq.s32.totalorder %s29, 0
      %p239 = por %p237, %p238
      %p240 = scmp.ne.s32.totalorder %s228, %s229
      %p241 = scmp.eq.s32.totalorder %s30, 1
      %p242 = por %p240, %p241
      %p244 = scmp.ne.s32.totalorder %s229, %s243
      %p245 = scmp.eq.s32.totalorder %s30, 0
      %p246 = por %p244, %p245
      %s248 = sadd.s32 %s247, 1
      %p251 = scmp.eq.s32.totalorder %s24, 1
      %p252 = scmp.ne.s32.totalorder %s247, %s249
      %p253 = scmp.eq.s32.totalorder %s24, 0
      %p254 = por %p252, %p253
      %p255 = scmp.ne.s32.totalorder %s247, %s249
      %p256 = scmp.eq.s32.totalorder %s29, 1
      %p257 = por %p255, %p256
      %p258 = scmp.ne.s32.totalorder %s249, %s250
      %p259 = scmp.eq.s32.totalorder %s29, 0
      %p260 = por %p258, %p259
      %p261 = scmp.ne.s32.totalorder %s249, %s250
      %p262 = scmp.eq.s32.totalorder %s30, 1
      %p263 = por %p261, %p262
      %p265 = scmp.ne.s32.totalorder %s250, %s264
      %p266 = scmp.eq.s32.totalorder %s30, 0
      %p267 = por %p265, %p266
      %s269 = sadd.s32 %s268, 1
      %p272 = scmp.eq.s32.totalorder %s24, 1
      %p273 = scmp.ne.s32.totalorder %s268, %s270
      %p274 = scmp.eq.s32.totalorder %s24, 0
      %p275 = por %p273, %p274
      %p276 = scmp.ne.s32.totalorder %s268, %s270
      %p277 = scmp.eq.s32.totalorder %s29, 1
      %p278 = por %p276, %p277
      %p279 = scmp.ne.s32.totalorder %s270, %s271
      %p280 = scmp.eq.s32.totalorder %s29, 0
      %p281 = por %p279, %p280
      %p282 = scmp.ne.s32.totalorder %s270, %s271
      %p283 = scmp.eq.s32.totalorder %s30, 1
      %p284 = por %p282, %p283
      %p286 = scmp.ne.s32.totalorder %s271, %s285
      %p287 = scmp.eq.s32.totalorder %s30, 0
      %p288 = por %p286, %p287
      %s290 = sadd.s32 %s289, 1
      %p293 = scmp.eq.s32.totalorder %s24, 1
      %p294 = scmp.ne.s32.totalorder %s289, %s291
      %p295 = scmp.eq.s32.totalorder %s24, 0
      %p296 = por %p294, %p295
      %p297 = scmp.ne.s32.totalorder %s289, %s291
      %p298 = scmp.eq.s32.totalorder %s29, 1
      %p299 = por %p297, %p298
      %p300 = scmp.ne.s32.totalorder %s291, %s292
      %p301 = scmp.eq.s32.totalorder %s29, 0
      %p302 = por %p300, %p301
      %p303 = scmp.ne.s32.totalorder %s291, %s292
      %p304 = scmp.eq.s32.totalorder %s30, 1
      %p305 = por %p303, %p304
      %p307 = scmp.ne.s32.totalorder %s292, %s306
      %p308 = scmp.eq.s32.totalorder %s30, 0
      %p309 = por %p307, %p308
      %s311 = sadd.s32 %s310, 1
      %p314 = scmp.eq.s32.totalorder %s24, 1
      %p315 = scmp.ne.s32.totalorder %s310, %s312
      %p316 = scmp.eq.s32.totalorder %s24, 0
      %p317 = por %p315, %p316
      %p318 = scmp.ne.s32.totalorder %s310, %s312
      %p319 = scmp.eq.s32.totalorder %s29, 1
      %p320 = por %p318, %p319
      %p321 = scmp.ne.s32.totalorder %s312, %s313
      %p322 = scmp.eq.s32.totalorder %s29, 0
      %p323 = por %p321, %p322
      %p324 = scmp.ne.s32.totalorder %s312, %s313
      %p325 = scmp.eq.s32.totalorder %s30, 1
      %p326 = por %p324, %p325
      %p328 = scmp.ne.s32.totalorder %s313, %s327
      %p329 = scmp.eq.s32.totalorder %s30, 0
      %p330 = por %p328, %p329
      %s332 = sadd.s32 %s331, 1
      %p335 = scmp.eq.s32.totalorder %s24, 1
      %p336 = scmp.ne.s32.totalorder %s331, %s333
      %p337 = scmp.eq.s32.totalorder %s24, 0
      %p338 = por %p336, %p337
      %p339 = scmp.ne.s32.totalorder %s331, %s333
      %p340 = scmp.eq.s32.totalorder %s29, 1
      %p341 = por %p339, %p340
      %p342 = scmp.ne.s32.totalorder %s333, %s334
      %p343 = scmp.eq.s32.totalorder %s29, 0
      %p344 = por %p342, %p343
      %p345 = scmp.ne.s32.totalorder %s333, %s334
      %p346 = scmp.eq.s32.totalorder %s30, 1
      %p347 = por %p345, %p346
      %p349 = scmp.ne.s32.totalorder %s334, %s348
      %p350 = scmp.eq.s32.totalorder %s30, 0
      %p351 = por %p349, %p350
      %s352 = ssub.s32 %s24, %s31
      %p353 = scmp.eq.s32.totalorder %s352, 0
      %s355 = sadd.s32 %s354, 1
      %s356 = scalar_select %p353, %s354, %s355
      %p359 = pneg %p353
      %p360 = scmp.eq.s32.totalorder %s24, 1
      %p361 = por %p359, %p360
      %p362 = scmp.ne.s32.totalorder %s354, %s357
      %p363 = scmp.eq.s32.totalorder %s24, 0
      %p364 = por %p362, %p363
      %p365 = scmp.ne.s32.totalorder %s354, %s357
      %p366 = scmp.eq.s32.totalorder %s29, 1
      %p367 = por %p365, %p366
      %p368 = scmp.ne.s32.totalorder %s357, %s358
      %p369 = scmp.eq.s32.totalorder %s29, 0
      %p370 = por %p368, %p369
      %p371 = scmp.ne.s32.totalorder %s357, %s358
      %p372 = scmp.eq.s32.totalorder %s30, 1
      %p373 = por %p371, %p372
      %p375 = scmp.ne.s32.totalorder %s358, %s374
      %p376 = scmp.eq.s32.totalorder %s30, 0
      %p377 = por %p375, %p376
      %p378 = scmp.le.s32.totalorder 1, %s24
      %p379 = scmp.lt.s32.totalorder %s24, 3
      %p380 = pnand %p378, %p379
      %p381 = pneg %p380
      // Predicated region
      $region9: #{lenet_forward.1} parent=5 // pred_check
        _
      $region10: #{lenet_forward.1} parent=5 // pred_check_branch
        %383 = sbr.rel (%p380) target = $region12
      $region11: #{lenet_forward.1} parent=5 // pred_region
        %s384 = ssub.s32 %s24, 1
        // Predicated region
        $region13: #{lenet_forward.1} parent=11 // pred_check
          %p385 = pneg %p71
        $region14: #{lenet_forward.1} parent=11 // pred_check_branch
          %387 = sbr.rel (%p385) target = $region16
        $region15: #{lenet_forward.1} parent=11 // pred_region
          _
        $region16: #{lenet_forward.1} parent=11 // pred_fallthru
          _
        // Predicated region
        $region17: #{lenet_forward.1} parent=11 // pred_check
          %p388 = pneg %p92
        $region18: #{lenet_forward.1} parent=11 // pred_check_branch
          %390 = sbr.rel (%p388) target = $region20
        $region19: #{lenet_forward.1} parent=11 // pred_region
          _
        $region20: #{lenet_forward.1} parent=11 // pred_fallthru
          _
        // Predicated region
        $region21: #{lenet_forward.1} parent=11 // pred_check
          %p391 = pneg %p113
        $region22: #{lenet_forward.1} parent=11 // pred_check_branch
          %393 = sbr.rel (%p391) target = $region24
        $region23: #{lenet_forward.1} parent=11 // pred_region
          _
        $region24: #{lenet_forward.1} parent=11 // pred_fallthru
          _
        // Predicated region
        $region25: #{lenet_forward.1} parent=11 // pred_check
          %p394 = pneg %p134
        $region26: #{lenet_forward.1} parent=11 // pred_check_branch
          %396 = sbr.rel (%p394) target = $region28
        $region27: #{lenet_forward.1} parent=11 // pred_region
          _
        $region28: #{lenet_forward.1} parent=11 // pred_fallthru
          _
        // Predicated region
        $region29: #{lenet_forward.1} parent=11 // pred_check
          %p397 = pneg %p155
        $region30: #{lenet_forward.1} parent=11 // pred_check_branch
          %399 = sbr.rel (%p397) target = $region32
        $region31: #{lenet_forward.1} parent=11 // pred_region
          _
        $region32: #{lenet_forward.1} parent=11 // pred_fallthru
          _
        // Predicated region
        $region33: #{lenet_forward.1} parent=11 // pred_check
          %p400 = pneg %p176
        $region34: #{lenet_forward.1} parent=11 // pred_check_branch
          %402 = sbr.rel (%p400) target = $region36
        $region35: #{lenet_forward.1} parent=11 // pred_region
          _
        $region36: #{lenet_forward.1} parent=11 // pred_fallthru
          _
        // Predicated region
        $region37: #{lenet_forward.1} parent=11 // pred_check
          %p403 = pneg %p197
        $region38: #{lenet_forward.1} parent=11 // pred_check_branch
          %405 = sbr.rel (%p403) target = $region40
        $region39: #{lenet_forward.1} parent=11 // pred_region
          _
        $region40: #{lenet_forward.1} parent=11 // pred_fallthru
          _
        // Predicated region
        $region41: #{lenet_forward.1} parent=11 // pred_check
          %p406 = pneg %p218
        $region42: #{lenet_forward.1} parent=11 // pred_check_branch
          %408 = sbr.rel (%p406) target = $region44
        $region43: #{lenet_forward.1} parent=11 // pred_region
          _
        $region44: #{lenet_forward.1} parent=11 // pred_fallthru
          _
        // Predicated region
        $region45: #{lenet_forward.1} parent=11 // pred_check
          %p409 = pneg %p239
        $region46: #{lenet_forward.1} parent=11 // pred_check_branch
          %411 = sbr.rel (%p409) target = $region48
        $region47: #{lenet_forward.1} parent=11 // pred_region
          _
        $region48: #{lenet_forward.1} parent=11 // pred_fallthru
          _
        // Predicated region
        $region49: #{lenet_forward.1} parent=11 // pred_check
          %p412 = pneg %p260
        $region50: #{lenet_forward.1} parent=11 // pred_check_branch
          %414 = sbr.rel (%p412) target = $region52
        $region51: #{lenet_forward.1} parent=11 // pred_region
          _
        $region52: #{lenet_forward.1} parent=11 // pred_fallthru
          _
        // Predicated region
        $region53: #{lenet_forward.1} parent=11 // pred_check
          %p415 = pneg %p281
        $region54: #{lenet_forward.1} parent=11 // pred_check_branch
          %417 = sbr.rel (%p415) target = $region56
        $region55: #{lenet_forward.1} parent=11 // pred_region
          _
        $region56: #{lenet_forward.1} parent=11 // pred_fallthru
          _
        // Predicated region
        $region57: #{lenet_forward.1} parent=11 // pred_check
          %p418 = pneg %p302
        $region58: #{lenet_forward.1} parent=11 // pred_check_branch
          %420 = sbr.rel (%p418) target = $region60
        $region59: #{lenet_forward.1} parent=11 // pred_region
          _
        $region60: #{lenet_forward.1} parent=11 // pred_fallthru
          _
        // Predicated region
        $region61: #{lenet_forward.1} parent=11 // pred_check
          %p421 = pneg %p323
        $region62: #{lenet_forward.1} parent=11 // pred_check_branch
          %423 = sbr.rel (%p421) target = $region64
        $region63: #{lenet_forward.1} parent=11 // pred_region
          _
        $region64: #{lenet_forward.1} parent=11 // pred_fallthru
          _
        // Predicated region
        $region65: #{lenet_forward.1} parent=11 // pred_check
          %p424 = pneg %p344
        $region66: #{lenet_forward.1} parent=11 // pred_check_branch
          %426 = sbr.rel (%p424) target = $region68
        $region67: #{lenet_forward.1} parent=11 // pred_region
          _
        $region68: #{lenet_forward.1} parent=11 // pred_fallthru
          _
      $region12: #{lenet_forward.1} parent=5 // pred_fallthru
        _
      %p427 = scmp.lt.s32.totalorder %s24, 2
      // Predicated region
      $region69: #{lenet_forward.1} parent=5 // pred_check
        %p428 = pneg %p427
      $region70: #{lenet_forward.1} parent=5 // pred_check_branch
        %430 = sbr.rel (%p428) target = $region72
      $region71: #{lenet_forward.1} parent=5 // pred_region
        // Predicated region
        $region73: #{lenet_forward.1} parent=71 // pred_check
          %p431 = pneg %p44
        $region74: #{lenet_forward.1} parent=71 // pred_check_branch
          %433 = sbr.rel (%p431) target = $region76
        $region75: #{lenet_forward.1} parent=71 // pred_region
          %p434 = scmp.lt.s32.totalorder %s24, 1
          %s435 = scalar_select %p434, %s24, 1
          %s436 = smul.addr %s435, 4
          %s437 = smul.addr %s436, 8
          %s438 = scalar_lea.vmem %s0, %s437
        $region76: #{lenet_forward.1} parent=71 // pred_fallthru
          _
      $region72: #{lenet_forward.1} parent=5 // pred_fallthru
        _
      %p439 = scmp.le.s32.totalorder 1, %s24
      %p440 = scmp.lt.s32.totalorder %s24, 3
      %p441 = pnand %p439, %p440
      %p442 = pneg %p441
      // Predicated region
      $region77: #{lenet_forward.1} parent=5 // pred_check
        _
      $region78: #{lenet_forward.1} parent=5 // pred_check_branch
        %444 = sbr.rel (%p441) target = $region80
      $region79: #{lenet_forward.1} parent=5 // pred_region
        %s445 = ssub.s32 %s24, 1
        %p446 = scmp.lt.s32.totalorder %s29, 1
        %s447 = scalar_select %p446, %s29, 1
        %s448 = smul.addr %s447, 4
        %s449 = smul.addr %s448, 8
        %s450 = scalar_lea.vmem %s0, %s449
        %p451 = pneg %p50
        %p452 = pneg %p47
        %p453 = pneg %p71
        %p454 = pneg %p68
        %p455 = pneg %p92
        %p456 = pneg %p89
        %p457 = pneg %p113
        %p458 = pneg %p110
        %p459 = pneg %p134
        %p460 = pneg %p131
        %p461 = pneg %p155
        %p462 = pneg %p152
        %p463 = pneg %p176
        %p464 = pneg %p173
        %p465 = pneg %p197
        %p466 = pneg %p194
        %p467 = pneg %p218
        %p468 = pneg %p215
        %p469 = pneg %p239
        %p470 = pneg %p236
        %p471 = pneg %p260
        %p472 = pneg %p257
        %p473 = pneg %p281
        %p474 = pneg %p278
        %p475 = pneg %p302
        %p476 = pneg %p299
        %p477 = pneg %p323
        %p478 = pneg %p320
        %p479 = pneg %p344
        %p480 = pneg %p341
        %p481 = pneg %p370
        %p482 = pneg %p367
        %s483 = sand.u32 %s357, 1
        %s484 = scalar_lea.sflag [#allocation5], %s483
        %s485 = sand.u32 %s357, 1
        %s486 = scalar_lea.vmem [#allocation4], %s485
        %p487 = scmp.lt.s32.totalorder %s29, 1
        %s488 = scalar_select %p487, %s29, 1
        %s489 = smul.addr %s488, 4
        %s490 = smul.addr %s489, 8
        %s491 = scalar_lea.vmem %s0, %s490
        %v493 = vld [vmem:[%s491] sm:$0xff]
        %v494 = vld [vmem:[%s491 + $0x8] sm:$0xff]
        %v495 = vld [vmem:[%s491 + $0x10] sm:$0xff]
        %v496 = vld [vmem:[%s491 + $0x18] sm:$0xf]
        %v497 = vld [vmem:[%s1] sm:$0xff]
        %v498 = vld [vmem:[%s1 + $0x8] sm:$0xff]
        %v499 = vld [vmem:[%s1 + $0x10] sm:$0xff]
        %v500 = vld [vmem:[%s1 + $0x18] sm:$0xff]
        %v501 = vld [vmem:[%s1 + $0x20] sm:$0xff]
        %v502 = vld [vmem:[%s1 + $0x28] sm:$0xff]
        %v503 = vld [vmem:[%s1 + $0x30] sm:$0xff]
        %v504 = vld [vmem:[%s1 + $0x38] sm:$0xff]
        %v505 = vld [vmem:[%s1 + $0x40] sm:$0xff]
        %v506 = vld [vmem:[%s1 + $0x48] sm:$0xff]
        %v507 = vld [vmem:[%s1 + $0x50] sm:$0xff]
        %v508 = vld [vmem:[%s1 + $0x58] sm:$0xff]
        %v509 = vpack.c.bf16 %v494, %v493
        %v510 = vpack.c.bf16 %v496, %v495
        %v511 = vld [vmem:[%s491 + $0x1] sm:$0xff]
        %v512 = vld [vmem:[%s491 + $0x9] sm:$0xff]
        %v513 = vld [vmem:[%s491 + $0x11] sm:$0xff]
        %v514 = vld [vmem:[%s491 + $0x19] sm:$0xf]
        %s515 = scalar_lea.vmem %s1, 96
        %v516 = vld [vmem:[%s515] sm:$0xff]
        %v517 = vld [vmem:[%s515 + $0x8] sm:$0xff]
        %v518 = vld [vmem:[%s515 + $0x10] sm:$0xff]
        %v519 = vld [vmem:[%s515 + $0x18] sm:$0xff]
        %v520 = vld [vmem:[%s515 + $0x20] sm:$0xff]
        %v521 = vld [vmem:[%s515 + $0x28] sm:$0xff]
        %v522 = vld [vmem:[%s515 + $0x30] sm:$0xff]
        %v523 = vld [vmem:[%s515 + $0x38] sm:$0xff]
        %v524 = vld [vmem:[%s515 + $0x40] sm:$0xff]
        %v525 = vld [vmem:[%s515 + $0x48] sm:$0xff]
        %v526 = vld [vmem:[%s515 + $0x50] sm:$0xff]
        %v527 = vld [vmem:[%s515 + $0x58] sm:$0xff]
        %v528 = vpack.c.bf16 %v512, %v511
        %v529 = vpack.c.bf16 %v514, %v513
        %v542 = vunpack.c.l.b16 %v516
        %v543 = vunpack.c.h.b16 %v516
        %v544 = vunpack.c.l.b16 %v517
        %v545 = vunpack.c.h.b16 %v517
        %v546 = vunpack.c.l.b16 %v518
        %v547 = vunpack.c.h.b16 %v518
        %v548 = vunpack.c.l.b16 %v519
        %v549 = vunpack.c.h.b16 %v519
        %v550 = vunpack.c.l.b16 %v520
        %v551 = vunpack.c.h.b16 %v520
        %v552 = vunpack.c.l.b16 %v521
        %v553 = vunpack.c.h.b16 %v521
        %v554 = vunpack.c.l.b16 %v522
        %v555 = vunpack.c.h.b16 %v522
        %v556 = vunpack.c.l.b16 %v523
        %v557 = vunpack.c.h.b16 %v523
        %v558 = vunpack.c.l.b16 %v524
        %v559 = vunpack.c.h.b16 %v524
        %v560 = vunpack.c.l.b16 %v525
        %v561 = vunpack.c.h.b16 %v525
        %v562 = vunpack.c.l.b16 %v526
        %v563 = vunpack.c.h.b16 %v526
        %v564 = vunpack.c.l.b16 %v527
        %v565 = vunpack.c.h.b16 %v527
        %v566 = vpack.c.b16 %v544, %v542
        %v567 = vpack.c.b16 %v545, %v543
        %v568 = vpack.c.b16 %v548, %v546
        %v569 = vpack.c.b16 %v549, %v547
        %v570 = vpack.c.b16 %v552, %v550
        %v571 = vpack.c.b16 %v553, %v551
        %v572 = vpack.c.b16 %v556, %v554
        %v573 = vpack.c.b16 %v557, %v555
        %v574 = vpack.c.b16 %v560, %v558
        %v575 = vpack.c.b16 %v561, %v559
        %v576 = vpack.c.b16 %v564, %v562
        %v577 = vpack.c.b16 %v565, %v563
        %vm590 = vcmask 785408
        %v592 = vsel %vm590, %v528, 0
        %v595 = vsel %vm590, %v529, 0
        %597 = vmatprep.subr.bf16.mxu0 %v567
        %598 = vmatpush1.bf16.msra.mxu0 %v566
        %599 = vmatprep.subr.bf16.mxu0 %v569
        %600 = vmatpush1.bf16.msra.mxu0 %v568
        %601 = vmatprep.subr.bf16.mxu0 %v571
        %602 = vmatpush1.bf16.msra.mxu0 %v570
        %603 = vmatprep.subr.bf16.mxu0 %v573
        %604 = vmatpush1.bf16.msra.mxu0 %v572
        %605 = vmatprep.subr.bf16.mxu0 %v575
        %606 = vmatpush1.bf16.msra.mxu0 %v574
        %607 = vmatprep.subr.bf16.mxu0 %v577
        %608 = vmatpush1.bf16.msra.mxu0 %v576
        %609 = vmatprep.subr.bf16.mxu0 0
        %610 = vmatpush1.bf16.msra.mxu0 0
        %611 = vmatprep.subr.bf16.mxu0 0
        %612 = vmatpush1.bf16.msra.mxu0 0
        %613 = vmatprep.subr.bf16.mxu0 0
        %614 = vmatpush1.bf16.msra.mxu0 0
        %615 = vmatprep.subr.bf16.mxu0 0
        %616 = vmatpush1.bf16.msra.mxu0 0
        %617 = vmatprep.subr.bf16.mxu0 0
        %618 = vmatpush1.bf16.msra.mxu0 0
        %619 = vmatprep.subr.bf16.mxu0 0
        %620 = vmatpush1.bf16.msra.mxu0 0
        %621 = vmatprep.subr.bf16.mxu0 0
        %622 = vmatpush1.bf16.msra.mxu0 0
        %623 = vmatprep.subr.bf16.mxu0 0
        %624 = vmatpush1.bf16.msra.mxu0 0
        %625 = vmatprep.subr.bf16.mxu0 0
        %626 = vmatpush1.bf16.msra.mxu0 0
        %627 = vmatprep.subr.bf16.mxu0 0
        %628 = vmatpush1.bf16.msra.mxu0 0
        %629 = vmatprep.mubr.bf16.mxu0 0
        %630 = vmatmul.mubr.bf16.gmra.mrb[0].mxu0 %v592
        %v631 = vpop.f32.mrb[0].mxu0
        %v632 = vadd.f32 0.0, %v631
        %v633 = vpop.f32.mrb[0].mxu0
        %v634 = vadd.f32 0.0, %v633
        %v635 = vpop.f32.mrb[0].mxu0
        %v636 = vadd.f32 0.0, %v635
        %v637 = vpop.f32.mrb[0].mxu0
        %v638 = vadd.f32 0.0, %v637
        %639 = vmatprep.mubr.bf16.mxu0 0
        %640 = vmatmul.mubr.bf16.gmra.mrb[0].mxu0 %v595
        %v641 = vpop.f32.mrb[0].mxu0
        %v642 = vadd.f32 0.0, %v641
        %v643 = vpop.f32.mrb[0].mxu0
        %v644 = vadd.f32 0.0, %v643
        %v645 = vpop.f32.mrb[0].mxu0
        %v646 = vadd.f32 0.0, %v645
        %v647 = vpop.f32.mrb[0].mxu0
        %v648 = vadd.f32 0.0, %v647
        %649 = vdwg.mxu0
        %v662 = vunpack.c.l.b16 %v497
        %v663 = vunpack.c.h.b16 %v497
        %v664 = vunpack.c.l.b16 %v498
        %v665 = vunpack.c.h.b16 %v498
        %v666 = vunpack.c.l.b16 %v499
        %v667 = vunpack.c.h.b16 %v499
        %v668 = vunpack.c.l.b16 %v500
        %v669 = vunpack.c.h.b16 %v500
        %v670 = vunpack.c.l.b16 %v501
        %v671 = vunpack.c.h.b16 %v501
        %v672 = vunpack.c.l.b16 %v502
        %v673 = vunpack.c.h.b16 %v502
        %v674 = vunpack.c.l.b16 %v503
        %v675 = vunpack.c.h.b16 %v503
        %v676 = vunpack.c.l.b16 %v504
        %v677 = vunpack.c.h.b16 %v504
        %v678 = vunpack.c.l.b16 %v505
        %v679 = vunpack.c.h.b16 %v505
        %v680 = vunpack.c.l.b16 %v506
        %v681 = vunpack.c.h.b16 %v506
        %v682 = vunpack.c.l.b16 %v507
        %v683 = vunpack.c.h.b16 %v507
        %v684 = vunpack.c.l.b16 %v508
        %v685 = vunpack.c.h.b16 %v508
        %v686 = vpack.c.b16 %v664, %v662
        %v687 = vpack.c.b16 %v665, %v663
        %v688 = vpack.c.b16 %v668, %v666
        %v689 = vpack.c.b16 %v669, %v667
        %v690 = vpack.c.b16 %v672, %v670
        %v691 = vpack.c.b16 %v673, %v671
        %v692 = vpack.c.b16 %v676, %v674
        %v693 = vpack.c.b16 %v677, %v675
        %v694 = vpack.c.b16 %v680, %v678
        %v695 = vpack.c.b16 %v681, %v679
        %v696 = vpack.c.b16 %v684, %v682
        %v697 = vpack.c.b16 %v685, %v683
        %v711 = vsel %vm590, %v509, 0
        %v714 = vsel %vm590, %v510, 0
        %716 = vmatprep.subr.bf16.mxu0 %v687
        %717 = vmatpush1.bf16.msra.mxu0 %v686
        %718 = vmatprep.subr.bf16.mxu0 %v689
        %719 = vmatpush1.bf16.msra.mxu0 %v688
        %720 = vmatprep.subr.bf16.mxu0 %v691
        %721 = vmatpush1.bf16.msra.mxu0 %v690
        %722 = vmatprep.subr.bf16.mxu0 %v693
        %723 = vmatpush1.bf16.msra.mxu0 %v692
        %724 = vmatprep.subr.bf16.mxu0 %v695
        %725 = vmatpush1.bf16.msra.mxu0 %v694
        %726 = vmatprep.subr.bf16.mxu0 %v697
        %727 = vmatpush1.bf16.msra.mxu0 %v696
        %728 = vmatprep.subr.bf16.mxu0 0
        %729 = vmatpush1.bf16.msra.mxu0 0
        %730 = vmatprep.subr.bf16.mxu0 0
        %731 = vmatpush1.bf16.msra.mxu0 0
        %732 = vmatprep.subr.bf16.mxu0 0
        %733 = vmatpush1.bf16.msra.mxu0 0
        %734 = vmatprep.subr.bf16.mxu0 0
        %735 = vmatpush1.bf16.msra.mxu0 0
        %736 = vmatprep.subr.bf16.mxu0 0
        %737 = vmatpush1.bf16.msra.mxu0 0
        %738 = vmatprep.subr.bf16.mxu0 0
        %739 = vmatpush1.bf16.msra.mxu0 0
        %740 = vmatprep.subr.bf16.mxu0 0
        %741 = vmatpush1.bf16.msra.mxu0 0
        %742 = vmatprep.subr.bf16.mxu0 0
        %743 = vmatpush1.bf16.msra.mxu0 0
        %744 = vmatprep.subr.bf16.mxu0 0
        %745 = vmatpush1.bf16.msra.mxu0 0
        %746 = vmatprep.subr.bf16.mxu0 0
        %747 = vmatpush1.bf16.msra.mxu0 0
        %748 = vmatprep.mubr.bf16.mxu0 0
        %749 = vmatmul.mubr.bf16.gmra.mrb[0].mxu0 %v711
        %v750 = vpop.f32.mrb[0].mxu0
        %v751 = vadd.f32 %v632, %v750
        %v752 = vpop.f32.mrb[0].mxu0
        %v753 = vadd.f32 %v634, %v752
        %v754 = vpop.f32.mrb[0].mxu0
        %v755 = vadd.f32 %v636, %v754
        %v756 = vpop.f32.mrb[0].mxu0
        %v757 = vadd.f32 %v638, %v756
        %758 = vmatprep.mubr.bf16.mxu0 0
        %759 = vmatmul.mubr.bf16.gmra.mrb[0].mxu0 %v714
        %v760 = vpop.f32.mrb[0].mxu0
        %v761 = vadd.f32 %v642, %v760
        %v762 = vpop.f32.mrb[0].mxu0
        %v763 = vadd.f32 %v644, %v762
        %v764 = vpop.f32.mrb[0].mxu0
        %v765 = vadd.f32 %v646, %v764
        %v766 = vpop.f32.mrb[0].mxu0
        %v767 = vadd.f32 %v648, %v766
        %768 = vdwg.mxu0
        %v769 = vld [vmem:[%s491 + $0x2] sm:$0xff]
        %v770 = vld [vmem:[%s491 + $0xa] sm:$0xff]
        %v771 = vld [vmem:[%s491 + $0x12] sm:$0xff]
        %v772 = vld [vmem:[%s491 + $0x1a] sm:$0xf]
        %s773 = scalar_lea.vmem %s1, 192
        %v774 = vld [vmem:[%s773] sm:$0xff]
        %v775 = vld [vmem:[%s773 + $0x8] sm:$0xff]
        %v776 = vld [vmem:[%s773 + $0x10] sm:$0xff]
        %v777 = vld [vmem:[%s773 + $0x18] sm:$0xff]
        %v778 = vld [vmem:[%s773 + $0x20] sm:$0xff]
        %v779 = vld [vmem:[%s773 + $0x28] sm:$0xff]
        %v780 = vld [vmem:[%s773 + $0x30] sm:$0xff]
        %v781 = vld [vmem:[%s773 + $0x38] sm:$0xff]
        %v782 = vld [vmem:[%s773 + $0x40] sm:$0xff]
        %v783 = vld [vmem:[%s773 + $0x48] sm:$0xff]
        %v784 = vld [vmem:[%s773 + $0x50] sm:$0xff]
        %v785 = vld [vmem:[%s773 + $0x58] sm:$0xff]
        %v786 = vpack.c.bf16 %v770, %v769
        %v787 = vpack.c.bf16 %v772, %v771
        %v800 = vunpack.c.l.b16 %v774
        %v801 = vunpack.c.h.b16 %v774
        %v802 = vunpack.c.l.b16 %v775
        %v803 = vunpack.c.h.b16 %v775
        %v804 = vunpack.c.l.b16 %v776
        %v805 = vunpack.c.h.b16 %v776
        %v806 = vunpack.c.l.b16 %v777
        %v807 = vunpack.c.h.b16 %v777
        %v808 = vunpack.c.l.b16 %v778
        %v809 = vunpack.c.h.b16 %v778
        %v810 = vunpack.c.l.b16 %v779
        %v811 = vunpack.c.h.b16 %v779
        %v812 = vunpack.c.l.b16 %v780
        %v813 = vunpack.c.h.b16 %v780
        %v814 = vunpack.c.l.b16 %v781
        %v815 = vunpack.c.h.b16 %v781
        %v816 = vunpack.c.l.b16 %v782
        %v817 = vunpack.c.h.b16 %v782
        %v818 = vunpack.c.l.b16 %v783
        %v819 = vunpack.c.h.b16 %v783
        %v820 = vunpack.c.l.b16 %v784
        %v821 = vunpack.c.h.b16 %v784
        %v822 = vunpack.c.l.b16 %v785
        %v823 = vunpack.c.h.b16 %v785
        %v824 = vpack.c.b16 %v802, %v800
        %v825 = vpack.c.b16 %v803, %v801
        %v826 = vpack.c.b16 %v806, %v804
        %v827 = vpack.c.b16 %v807, %v805
        %v828 = vpack.c.b16 %v810, %v808
        %v829 = vpack.c.b16 %v811, %v809
        %v830 = vpack.c.b16 %v814, %v812
        %v831 = vpack.c.b16 %v815, %v813
        %v832 = vpack.c.b16 %v818, %v816
        %v833 = vpack.c.b16 %v819, %v817
        %v834 = vpack.c.b16 %v822, %v820
        %v835 = vpack.c.b16 %v823, %v821
        %v849 = vsel %vm590, %v786, 0
        %v852 = vsel %vm590, %v787, 0
        %854 = vmatprep.subr.bf16.mxu0 %v825
        %855 = vmatpush1.bf16.msra.mxu0 %v824
        %856 = vmatprep.subr.bf16.mxu0 %v827
        %857 = vmatpush1.bf16.msra.mxu0 %v826
        %858 = vmatprep.subr.bf16.mxu0 %v829
        %859 = vmatpush1.bf16.msra.mxu0 %v828
        %860 = vmatprep.subr.bf16.mxu0 %v831
        %861 = vmatpush1.bf16.msra.mxu0 %v830
        %862 = vmatprep.subr.bf16.mxu0 %v833
        %863 = vmatpush1.bf16.msra.mxu0 %v832
        %864 = vmatprep.subr.bf16.mxu0 %v835
        %865 = vmatpush1.bf16.msra.mxu0 %v834
        %866 = vmatprep.subr.bf16.mxu0 0
        %867 = vmatpush1.bf16.msra.mxu0 0
        %868 = vmatprep.subr.bf16.mxu0 0
        %869 = vmatpush1.bf16.msra.mxu0 0
        %870 = vmatprep.subr.bf16.mxu0 0
        %871 = vmatpush1.bf16.msra.mxu0 0
        %872 = vmatprep.subr.bf16.mxu0 0
        %873 = vmatpush1.bf16.msra.mxu0 0
        %874 = vmatprep.subr.bf16.mxu0 0
        %875 = vmatpush1.bf16.msra.mxu0 0
        %876 = vmatprep.subr.bf16.mxu0 0
        %877 = vmatpush1.bf16.msra.mxu0 0
        %878 = vmatprep.subr.bf16.mxu0 0
        %879 = vmatpush1.bf16.msra.mxu0 0
        %880 = vmatprep.subr.bf16.mxu0 0
        %881 = vmatpush1.bf16.msra.mxu0 0
        %882 = vmatprep.subr.bf16.mxu0 0
        %883 = vmatpush1.bf16.msra.mxu0 0
        %884 = vmatprep.subr.bf16.mxu0 0
        %885 = vmatpush1.bf16.msra.mxu0 0
        %886 = vmatprep.mubr.bf16.mxu0 0
        %887 = vmatmul.mubr.bf16.gmra.mrb[0].mxu0 %v849
        %v888 = vpop.f32.mrb[0].mxu0
        %v889 = vadd.f32 0.0, %v888
        %v890 = vpop.f32.mrb[0].mxu0
        %v891 = vadd.f32 0.0, %v890
        %v892 = vpop.f32.mrb[0].mxu0
        %v893 = vadd.f32 0.0, %v892
        %v894 = vpop.f32.mrb[0].mxu0
        %v895 = vadd.f32 0.0, %v894
        %896 = vmatprep.mubr.bf16.mxu0 0
        %897 = vmatmul.mubr.bf16.gmra.mrb[0].mxu0 %v852
        %v898 = vpop.f32.mrb[0].mxu0
        %v899 = vadd.f32 0.0, %v898
        %v900 = vpop.f32.mrb[0].mxu0
        %v901 = vadd.f32 0.0, %v900
        %v902 = vpop.f32.mrb[0].mxu0
        %v903 = vadd.f32 0.0, %v902
        %v904 = vpop.f32.mrb[0].mxu0
        %v905 = vadd.f32 0.0, %v904
        %906 = vdwg.mxu0
        %v907 = vadd.f32 %v751, %v889
        %v908 = vadd.f32 %v753, %v891
        %v909 = vadd.f32 %v755, %v893
        %v910 = vadd.f32 %v757, %v895
        %v911 = vadd.f32 %v761, %v899
        %v912 = vadd.f32 %v763, %v901
        %v913 = vadd.f32 %v765, %v903
        %v914 = vadd.f32 %v767, %v905
        %v915 = vld [vmem:[%s491 + $0x3] sm:$0xff]
        %v916 = vld [vmem:[%s491 + $0xb] sm:$0xff]
        %v917 = vld [vmem:[%s491 + $0x13] sm:$0xff]
        %v918 = vld [vmem:[%s491 + $0x1b] sm:$0xf]
        %s919 = scalar_lea.vmem %s1, 288
        %v920 = vld [vmem:[%s919] sm:$0xff]
        %v921 = vld [vmem:[%s919 + $0x8] sm:$0xff]
        %v922 = vld [vmem:[%s919 + $0x10] sm:$0xff]
        %v923 = vld [vmem:[%s919 + $0x18] sm:$0xff]
        %v924 = vld [vmem:[%s919 + $0x20] sm:$0xff]
        %v925 = vld [vmem:[%s919 + $0x28] sm:$0xff]
        %v926 = vld [vmem:[%s919 + $0x30] sm:$0xff]
        %v927 = vld [vmem:[%s919 + $0x38] sm:$0xff]
        %v928 = vld [vmem:[%s919 + $0x40] sm:$0xff]
        %v929 = vld [vmem:[%s919 + $0x48] sm:$0xff]
        %v930 = vld [vmem:[%s919 + $0x50] sm:$0xff]
        %v931 = vld [vmem:[%s919 + $0x58] sm:$0xff]
        %v932 = vpack.c.bf16 %v916, %v915
        %v933 = vpack.c.bf16 %v918, %v917
        %v946 = vunpack.c.l.b16 %v920
        %v947 = vunpack.c.h.b16 %v920
        %v948 = vunpack.c.l.b16 %v921
        %v949 = vunpack.c.h.b16 %v921
        %v950 = vunpack.c.l.b16 %v922
        %v951 = vunpack.c.h.b16 %v922
        %v952 = vunpack.c.l.b16 %v923
        %v953 = vunpack.c.h.b16 %v923
        %v954 = vunpack.c.l.b16 %v924
        %v955 = vunpack.c.h.b16 %v924
        %v956 = vunpack.c.l.b16 %v925
        %v957 = vunpack.c.h.b16 %v925
        %v958 = vunpack.c.l.b16 %v926
        %v959 = vunpack.c.h.b16 %v926
        %v960 = vunpack.c.l.b16 %v927
        %v961 = vunpack.c.h.b16 %v927
        %v962 = vunpack.c.l.b16 %v928
        %v963 = vunpack.c.h.b16 %v928
        %v964 = vunpack.c.l.b16 %v929
        %v965 = vunpack.c.h.b16 %v929
        %v966 = vunpack.c.l.b16 %v930
        %v967 = vunpack.c.h.b16 %v930
        %v968 = vunpack.c.l.b16 %v931
        %v969 = vunpack.c.h.b16 %v931
        %v970 = vpack.c.b16 %v948, %v946
        %v971 = vpack.c.b16 %v949, %v947
        %v972 = vpack.c.b16 %v952, %v950
        %v973 = vpack.c.b16 %v953, %v951
        %v974 = vpack.c.b16 %v956, %v954
        %v975 = vpack.c.b16 %v957, %v955
        %v976 = vpack.c.b16 %v960, %v958
        %v977 = vpack.c.b16 %v961, %v959
        %v978 = vpack.c.b16 %v964, %v962
        %v979 = vpack.c.b16 %v965, %v963
        %v980 = vpack.c.b16 %v968, %v966
        %v981 = vpack.c.b16 %v969, %v967
        %v995 = vsel %vm590, %v932, 0
        %v998 = vsel %vm590, %v933, 0
        %1000 = vmatprep.subr.bf16.mxu0 %v971
        %1001 = vmatpush1.bf16.msra.mxu0 %v970
        %1002 = vmatprep.subr.bf16.mxu0 %v973
        %1003 = vmatpush1.bf16.msra.mxu0 %v972
        %1004 = vmatprep.subr.bf16.mxu0 %v975
        %1005 = vmatpush1.bf16.msra.mxu0 %v974
        %1006 = vmatprep.subr.bf16.mxu0 %v977
        %1007 = vmatpush1.bf16.msra.mxu0 %v976
        %1008 = vmatprep.subr.bf16.mxu0 %v979
        %1009 = vmatpush1.bf16.msra.mxu0 %v978
        %1010 = vmatprep.subr.bf16.mxu0 %v981
        %1011 = vmatpush1.bf16.msra.mxu0 %v980
        %1012 = vmatprep.subr.bf16.mxu0 0
        %1013 = vmatpush1.bf16.msra.mxu0 0
        %1014 = vmatprep.subr.bf16.mxu0 0
        %1015 = vmatpush1.bf16.msra.mxu0 0
        %1016 = vmatprep.subr.bf16.mxu0 0
        %1017 = vmatpush1.bf16.msra.mxu0 0
        %1018 = vmatprep.subr.bf16.mxu0 0
        %1019 = vmatpush1.bf16.msra.mxu0 0
        %1020 = vmatprep.subr.bf16.mxu0 0
        %1021 = vmatpush1.bf16.msra.mxu0 0
        %1022 = vmatprep.subr.bf16.mxu0 0
        %1023 = vmatpush1.bf16.msra.mxu0 0
        %1024 = vmatprep.subr.bf16.mxu0 0
        %1025 = vmatpush1.bf16.msra.mxu0 0
        %1026 = vmatprep.subr.bf16.mxu0 0
        %1027 = vmatpush1.bf16.msra.mxu0 0
        %1028 = vmatprep.subr.bf16.mxu0 0
        %1029 = vmatpush1.bf16.msra.mxu0 0
        %1030 = vmatprep.subr.bf16.mxu0 0
        %1031 = vmatpush1.bf16.msra.mxu0 0
        %1032 = vmatprep.mubr.bf16.mxu0 0
        %1033 = vmatmul.mubr.bf16.gmra.mrb[0].mxu0 %v995
        %v1034 = vpop.f32.mrb[0].mxu0
        %v1035 = vadd.f32 0.0, %v1034
        %v1036 = vpop.f32.mrb[0].mxu0
        %v1037 = vadd.f32 0.0, %v1036
        %v1038 = vpop.f32.mrb[0].mxu0
        %v1039 = vadd.f32 0.0, %v1038
        %v1040 = vpop.f32.mrb[0].mxu0
        %v1041 = vadd.f32 0.0, %v1040
        %1042 = vmatprep.mubr.bf16.mxu0 0
        %1043 = vmatmul.mubr.bf16.gmra.mrb[0].mxu0 %v998
        %v1044 = vpop.f32.mrb[0].mxu0
        %v1045 = vadd.f32 0.0, %v1044
        %v1046 = vpop.f32.mrb[0].mxu0
        %v1047 = vadd.f32 0.0, %v1046
        %v1048 = vpop.f32.mrb[0].mxu0
        %v1049 = vadd.f32 0.0, %v1048
        %v1050 = vpop.f32.mrb[0].mxu0
        %v1051 = vadd.f32 0.0, %v1050
        %1052 = vdwg.mxu0
        %v1053 = vadd.f32 %v907, %v1035
        %v1054 = vadd.f32 %v908, %v1037
        %v1055 = vadd.f32 %v909, %v1039
        %v1056 = vadd.f32 %v910, %v1041
        %v1057 = vadd.f32 %v911, %v1045
        %v1058 = vadd.f32 %v912, %v1047
        %v1059 = vadd.f32 %v913, %v1049
        %v1060 = vadd.f32 %v914, %v1051
        %v1061 = vld [vmem:[%s491 + $0x4] sm:$0xff]
        %v1062 = vld [vmem:[%s491 + $0xc] sm:$0xff]
        %v1063 = vld [vmem:[%s491 + $0x14] sm:$0xff]
        %v1064 = vld [vmem:[%s491 + $0x1c] sm:$0xf]
        %s1065 = scalar_lea.vmem %s1, 384
        %v1066 = vld [vmem:[%s1065] sm:$0xff]
        %v1067 = vld [vmem:[%s1065 + $0x8] sm:$0xff]
        %v1068 = vld [vmem:[%s1065 + $0x10] sm:$0xff]
        %v1069 = vld [vmem:[%s1065 + $0x18] sm:$0xff]
        %v1070 = vld [vmem:[%s1065 + $0x20] sm:$0xff]
        %v1071 = vld [vmem:[%s1065 + $0x28] sm:$0xff]
        %v1072 = vld [vmem:[%s1065 + $0x30] sm:$0xff]
        %v1073 = vld [vmem:[%s1065 + $0x38] sm:$0xff]
        %v1074 = vld [vmem:[%s1065 + $0x40] sm:$0xff]
        %v1075 = vld [vmem:[%s1065 + $0x48] sm:$0xff]
        %v1076 = vld [vmem:[%s1065 + $0x50] sm:$0xff]
        %v1077 = vld [vmem:[%s1065 + $0x58] sm:$0xff]
        %v1078 = vpack.c.bf16 %v1062, %v1061
        %v1079 = vpack.c.bf16 %v1064, %v1063
        %v1092 = vunpack.c.l.b16 %v1066
        %v1093 = vunpack.c.h.b16 %v1066
        %v1094 = vunpack.c.l.b16 %v1067
        %v1095 = vunpack.c.h.b16 %v1067
        %v1096 = vunpack.c.l.b16 %v1068
        %v1097 = vunpack.c.h.b16 %v1068
        %v1098 = vunpack.c.l.b16 %v1069
        %v1099 = vunpack.c.h.b16 %v1069
        %v1100 = vunpack.c.l.b16 %v1070
        %v1101 = vunpack.c.h.b16 %v1070
        %v1102 = vunpack.c.l.b16 %v1071
        %v1103 = vunpack.c.h.b16 %v1071
        %v1104 = vunpack.c.l.b16 %v1072
        %v1105 = vunpack.c.h.b16 %v1072
        %v1106 = vunpack.c.l.b16 %v1073
        %v1107 = vunpack.c.h.b16 %v1073
        %v1108 = vunpack.c.l.b16 %v1074
        %v1109 = vunpack.c.h.b16 %v1074
        %v1110 = vunpack.c.l.b16 %v1075
        %v1111 = vunpack.c.h.b16 %v1075
        %v1112 = vunpack.c.l.b16 %v1076
        %v1113 = vunpack.c.h.b16 %v1076
        %v1114 = vunpack.c.l.b16 %v1077
        %v1115 = vunpack.c.h.b16 %v1077
        %v1116 = vpack.c.b16 %v1094, %v1092
        %v1117 = vpack.c.b16 %v1095, %v1093
        %v1118 = vpack.c.b16 %v1098, %v1096
        %v1119 = vpack.c.b16 %v1099, %v1097
        %v1120 = vpack.c.b16 %v1102, %v1100
        %v1121 = vpack.c.b16 %v1103, %v1101
        %v1122 = vpack.c.b16 %v1106, %v1104
        %v1123 = vpack.c.b16 %v1107, %v1105
        %v1124 = vpack.c.b16 %v1110, %v1108
        %v1125 = vpack.c.b16 %v1111, %v1109
        %v1126 = vpack.c.b16 %v1114, %v1112
        %v1127 = vpack.c.b16 %v1115, %v1113
        %v1141 = vsel %vm590, %v1078, 0
        %v1144 = vsel %vm590, %v1079, 0
        %1146 = vmatprep.subr.bf16.mxu0 %v1117
        %1147 = vmatpush1.bf16.msra.mxu0 %v1116
        %1148 = vmatprep.subr.bf16.mxu0 %v1119
        %1149 = vmatpush1.bf16.msra.mxu0 %v1118
        %1150 = vmatprep.subr.bf16.mxu0 %v1121
        %1151 = vmatpush1.bf16.msra.mxu0 %v1120
        %1152 = vmatprep.subr.bf16.mxu0 %v1123
        %1153 = vmatpush1.bf16.msra.mxu0 %v1122
        %1154 = vmatprep.subr.bf16.mxu0 %v1125
        %1155 = vmatpush1.bf16.msra.mxu0 %v1124
        %1156 = vmatprep.subr.bf16.mxu0 %v1127
        %1157 = vmatpush1.bf16.msra.mxu0 %v1126
        %1158 = vmatprep.subr.bf16.mxu0 0
        %1159 = vmatpush1.bf16.msra.mxu0 0
        %1160 = vmatprep.subr.bf16.mxu0 0
        %1161 = vmatpush1.bf16.msra.mxu0 0
        %1162 = vmatprep.subr.bf16.mxu0 0
        %1163 = vmatpush1.bf16.msra.mxu0 0
        %1164 = vmatprep.subr.bf16.mxu0 0
        %1165 = vmatpush1.bf16.msra.mxu0 0
        %1166 = vmatprep.subr.bf16.mxu0 0
        %1167 = vmatpush1.bf16.msra.mxu0 0
        %1168 = vmatprep.subr.bf16.mxu0 0
        %1169 = vmatpush1.bf16.msra.mxu0 0
        %1170 = vmatprep.subr.bf16.mxu0 0
        %1171 = vmatpush1.bf16.msra.mxu0 0
        %1172 = vmatprep.subr.bf16.mxu0 0
        %1173 = vmatpush1.bf16.msra.mxu0 0
        %1174 = vmatprep.subr.bf16.mxu0 0
        %1175 = vmatpush1.bf16.msra.mxu0 0
        %1176 = vmatprep.subr.bf16.mxu0 0
        %1177 = vmatpush1.bf16.msra.mxu0 0
        %1178 = vmatprep.mubr.bf16.mxu0 0
        %1179 = vmatmul.mubr.bf16.gmra.mrb[0].mxu0 %v1141
        %v1180 = vpop.f32.mrb[0].mxu0
        %v1181 = vadd.f32 0.0, %v1180
        %v1182 = vpop.f32.mrb[0].mxu0
        %v1183 = vadd.f32 0.0, %v1182
        %v1184 = vpop.f32.mrb[0].mxu0
        %v1185 = vadd.f32 0.0, %v1184
        %v1186 = vpop.f32.mrb[0].mxu0
        %v1187 = vadd.f32 0.0, %v1186
        %1188 = vmatprep.mubr.bf16.mxu0 0
        %1189 = vmatmul.mubr.bf16.gmra.mrb[0].mxu0 %v1144
        %v1190 = vpop.f32.mrb[0].mxu0
        %v1191 = vadd.f32 0.0, %v1190
        %v1192 = vpop.f32.mrb[0].mxu0
        %v1193 = vadd.f32 0.0, %v1192
        %v1194 = vpop.f32.mrb[0].mxu0
        %v1195 = vadd.f32 0.0, %v1194
        %v1196 = vpop.f32.mrb[0].mxu0
        %v1197 = vadd.f32 0.0, %v1196
        %1198 = vdwg.mxu0
        %v1199 = vadd.f32 %v1053, %v1181
        %v1200 = vadd.f32 %v1054, %v1183
        %v1201 = vadd.f32 %v1055, %v1185
        %v1202 = vadd.f32 %v1056, %v1187
        %v1203 = vadd.f32 %v1057, %v1191
        %v1204 = vadd.f32 %v1058, %v1193
        %v1205 = vadd.f32 %v1059, %v1195
        %v1206 = vadd.f32 %v1060, %v1197
        %v1207 = vld [vmem:[%s2] sm:$0x3]
        %v1209 = vlaneseq
        %v1210 = vshrl.u32 %v1209, 7
        %v1211 = vsub.s32 0, %v1210
        %v1212 = vrot.slane %v1207, %v1211
        %v1213 = vlaneseq
        %v1214 = vshrl.u32 %v1213, 7
        %v1215 = vsub.s32 1, %v1214
        %v1216 = vrot.slane %v1207, %v1215
        %v1219 = vadd.f32 %v1199, %v1212
        %v1220 = vadd.f32 %v1200, %v1216
        %v1221 = vadd.f32 %v1201, %v1212
        %v1222 = vadd.f32 %v1202, %v1216
        %v1223 = vadd.f32 %v1203, %v1212
        %v1224 = vadd.f32 %v1204, %v1216
        %v1225 = vadd.f32 %v1205, %v1212
        %v1226 = vadd.f32 %v1206, %v1216
        %v1227 = vmax.f32 %v1219, 0.0
        %v1228 = vmax.f32 %v1220, 0.0
        %v1229 = vmax.f32 %v1221, 0.0
        %v1230 = vmax.f32 %v1222, 0.0
        %v1231 = vmax.f32 %v1223, 0.0
        %v1232 = vmax.f32 %v1224, 0.0
        %v1233 = vmax.f32 %v1225, 0.0
        %v1234 = vmax.f32 %v1226, 0.0
        %v1235 = vld [vmem:[%s3] sm:$0xf]
        %v1236 = vld [vmem:[%s3 + $0x4] sm:$0x7]
        %v1237 = vpack.c.bf16 %v1229, %v1227
        %v1238 = vpack.c.bf16 %v1230, %v1228
        %v1239 = vpack.c.bf16 %v1233, %v1231
        %v1240 = vpack.c.bf16 %v1234, %v1232
        %v1243 = vunpack.c.l.b16 %v1235
        %v1244 = vunpack.c.l.b16 %v1236
        %v1245 = vpack.c.b16 %v1244, %v1243
        %vm1246 = vcmask 228352
        %v1248 = vsel %vm1246, %v1245, 0
        %vm1250 = vcmask 1045504
        %v1252 = vsel %vm1250, %v1239, 0
        %v1255 = vsel %vm1250, %v1240, 0
        %1257 = vmatprep.subr.bf16.mxu0 %v1238
        %1258 = vmatpush1.bf16.msra.mxu0 %v1237
        %1259 = vmatprep.subr.bf16.mxu0 %v1255
        %1260 = vmatpush1.bf16.msra.mxu0 %v1252
        %1261 = vmatprep.subr.bf16.mxu0 0
        %1262 = vmatpush1.bf16.msra.mxu0 0
        %1263 = vmatprep.subr.bf16.mxu0 0
        %1264 = vmatpush1.bf16.msra.mxu0 0
        %1265 = vmatprep.subr.bf16.mxu0 0
        %1266 = vmatpush1.bf16.msra.mxu0 0
        %1267 = vmatprep.subr.bf16.mxu0 0
        %1268 = vmatpush1.bf16.msra.mxu0 0
        %1269 = vmatprep.subr.bf16.mxu0 0
        %1270 = vmatpush1.bf16.msra.mxu0 0
        %1271 = vmatprep.subr.bf16.mxu0 0
        %1272 = vmatpush1.bf16.msra.mxu0 0
        %1273 = vmatprep.subr.bf16.mxu0 0
        %1274 = vmatpush1.bf16.msra.mxu0 0
        %1275 = vmatprep.subr.bf16.mxu0 0
        %1276 = vmatpush1.bf16.msra.mxu0 0
        %1277 = vmatprep.subr.bf16.mxu0 0
        %1278 = vmatpush1.bf16.msra.mxu0 0
        %1279 = vmatprep.subr.bf16.mxu0 0
        %1280 = vmatpush1.bf16.msra.mxu0 0
        %1281 = vmatprep.subr.bf16.mxu0 0
        %1282 = vmatpush1.bf16.msra.mxu0 0
        %1283 = vmatprep.subr.bf16.mxu0 0
        %1284 = vmatpush1.bf16.msra.mxu0 0
        %1285 = vmatprep.subr.bf16.mxu0 0
        %1286 = vmatpush1.bf16.msra.mxu0 0
        %1287 = vmatprep.subr.bf16.mxu0 0
        %1288 = vmatpush1.bf16.msra.mxu0 0
        %1289 = vmatprep.mubr.bf16.mxu0 0
        %1290 = vmatmul.mubr.bf16.gmra.mrb[0].mxu0 %v1248
        %v1291 = vpop.f32.mrb[0].mxu0
        %v1292 = vadd.f32 0.0, %v1291
        %v1293 = vpop.f32.mrb[0].mxu0
        %v1294 = vadd.f32 0.0, %v1293
        %v1295 = vpop.f32.mrb[0].mxu0
        %v1296 = vadd.f32 0.0, %v1295
        %v1297 = vpop.f32.mrb[0].mxu0
        %v1298 = vadd.f32 0.0, %v1297
        %1299 = vdwg.mxu0
        %v1300 = vld [vmem:[%s4] sm:$0xf]
        %v1301 = vld [vmem:[%s4 + $0x4] sm:$0xf]
        %v1302 = vld [vmem:[%s4 + $0x8] sm:$0xf]
        %v1303 = vld [vmem:[%s4 + $0xc] sm:$0xf]
        %v1304 = vld [vmem:[%s4 + $0x10] sm:$0xf]
        %v1305 = vld [vmem:[%s4 + $0x14] sm:$0xf]
        %v1306 = vld [vmem:[%s4 + $0x18] sm:$0xf]
        %v1307 = vld [vmem:[%s4 + $0x1c] sm:$0xf]
        %v1308 = vld [vmem:[%s4 + $0x20] sm:$0xf]
        %v1309 = vld [vmem:[%s4 + $0x24] sm:$0xf]
        %v1310 = vld [vmem:[%s4 + $0x28] sm:$0xf]
        %v1311 = vld [vmem:[%s4 + $0x2c] sm:$0xf]
        %v1312 = vld [vmem:[%s4 + $0x30] sm:$0xf]
        %v1313 = vld [vmem:[%s4 + $0x34] sm:$0xf]
        %v1314 = vld [vmem:[%s4 + $0x38] sm:$0xf]
        %v1315 = vld [vmem:[%s4 + $0x3c] sm:$0xf]
        %v1316 = vld [vmem:[%s4 + $0x40] sm:$0xf]
        %v1317 = vld [vmem:[%s4 + $0x44] sm:$0xf]
        %v1318 = vld [vmem:[%s4 + $0x48] sm:$0xf]
        %v1319 = vld [vmem:[%s4 + $0x4c] sm:$0xf]
        %v1320 = vld [vmem:[%s4 + $0x50] sm:$0xf]
        %v1321 = vpack.c.bf16 %v1296, %v1292
        %v1322 = vpack.c.bf16 %v1298, %v1294
        %v1344 = vunpack.c.l.b16 %v1300
        %v1345 = vunpack.c.l.b16 %v1301
        %v1346 = vunpack.c.l.b16 %v1302
        %v1347 = vunpack.c.l.b16 %v1303
        %v1348 = vunpack.c.l.b16 %v1304
        %v1349 = vunpack.c.l.b16 %v1305
        %v1350 = vunpack.c.l.b16 %v1306
        %v1351 = vunpack.c.l.b16 %v1307
        %v1352 = vunpack.c.l.b16 %v1308
        %v1353 = vunpack.c.l.b16 %v1309
        %v1354 = vunpack.c.l.b16 %v1310
        %v1355 = vunpack.c.l.b16 %v1311
        %v1356 = vunpack.c.l.b16 %v1312
        %v1357 = vunpack.c.l.b16 %v1313
        %v1358 = vunpack.c.l.b16 %v1314
        %v1359 = vunpack.c.l.b16 %v1315
        %v1360 = vunpack.c.l.b16 %v1316
        %v1361 = vunpack.c.l.b16 %v1317
        %v1362 = vunpack.c.l.b16 %v1318
        %v1363 = vunpack.c.l.b16 %v1319
        %v1364 = vunpack.c.l.b16 %v1320
        %v1365 = vpack.c.b16 %v1345, %v1344
        %v1366 = vpack.c.b16 %v1347, %v1346
        %v1367 = vpack.c.b16 %v1349, %v1348
        %v1368 = vpack.c.b16 %v1351, %v1350
        %v1369 = vpack.c.b16 %v1353, %v1352
        %v1370 = vpack.c.b16 %v1355, %v1354
        %v1371 = vpack.c.b16 %v1357, %v1356
        %v1372 = vpack.c.b16 %v1359, %v1358
        %v1373 = vpack.c.b16 %v1361, %v1360
        %v1374 = vpack.c.b16 %v1363, %v1362
        %v1375 = vpack.c.b16 %v1364, %v1364
        %vm1386 = vcmask 326656
        %v1388 = vsel %vm1386, %v1322, 0
        %vm1390 = vcmask 1043456
        %v1392 = vsel %vm1390, %v1375, 0
        %1394 = vmatprep.subr.bf16.mxu0 0
        %1395 = vmatpush1.bf16.msra.mxu0 %v1365
        %1396 = vmatprep.subr.bf16.mxu0 0
        %1397 = vmatpush1.bf16.msra.mxu0 %v1366
        %1398 = vmatprep.subr.bf16.mxu0 0
        %1399 = vmatpush1.bf16.msra.mxu0 %v1367
        %1400 = vmatprep.subr.bf16.mxu0 0
        %1401 = vmatpush1.bf16.msra.mxu0 %v1368
        %1402 = vmatprep.subr.bf16.mxu0 0
        %1403 = vmatpush1.bf16.msra.mxu0 %v1369
        %1404 = vmatprep.subr.bf16.mxu0 0
        %1405 = vmatpush1.bf16.msra.mxu0 %v1370
        %1406 = vmatprep.subr.bf16.mxu0 0
        %1407 = vmatpush1.bf16.msra.mxu0 %v1371
        %1408 = vmatprep.subr.bf16.mxu0 0
        %1409 = vmatpush1.bf16.msra.mxu0 %v1372
        %1410 = vmatprep.subr.bf16.mxu0 0
        %1411 = vmatpush1.bf16.msra.mxu0 %v1373
        %1412 = vmatprep.subr.bf16.mxu0 0
        %1413 = vmatpush1.bf16.msra.mxu0 %v1374
        %1414 = vmatprep.subr.bf16.mxu0 0
        %1415 = vmatpush1.bf16.msra.mxu0 %v1392
        %1416 = vmatprep.subr.bf16.mxu0 0
        %1417 = vmatpush1.bf16.msra.mxu0 0
        %1418 = vmatprep.subr.bf16.mxu0 0
        %1419 = vmatpush1.bf16.msra.mxu0 0
        %1420 = vmatprep.subr.bf16.mxu0 0
        %1421 = vmatpush1.bf16.msra.mxu0 0
        %1422 = vmatprep.subr.bf16.mxu0 0
        %1423 = vmatpush1.bf16.msra.mxu0 0
        %1424 = vmatprep.subr.bf16.mxu0 0
        %1425 = vmatpush1.bf16.msra.mxu0 0
        %1426 = vmatprep.mubr.bf16.mxu0 %v1388
        %1427 = vmatmul.mubr.bf16.gmra.mrb[0].mxu0 %v1321
        %v1428 = vpop.f32.mrb[0].mxu0
        %v1429 = vadd.f32 0.0, %v1428
        %v1430 = vpop.f32.mrb[0].mxu0
        %v1431 = vpop.f32.mrb[0].mxu0
        %v1432 = vadd.f32 0.0, %v1431
        %v1433 = vpop.f32.mrb[0].mxu0
        %1434 = vdwg.mxu0
        %vm1435 = vcmask 687104
        %1436 = vst.msk [vmem:[#allocation2] sm:$0xff] %vm1435, %v1429
        %vm1437 = vcmask 685056
        %1438 = vst.msk [vmem:[#allocation2 + $0x8] sm:$0x3f] %vm1437, %v1432
        %v1439 = vld [vmem:[#allocation2] sm:$0xff]
        %v1440 = vld [vmem:[#allocation2 + $0x8] sm:$0x3]
        %v1441 = vld [vmem:[%s5] sm:$0xff]
        %v1442 = vld [vmem:[%s5 + $0x8] sm:$0xff]
        %v1443 = vld [vmem:[%s5 + $0x10] sm:$0xff]
        %v1444 = vld [vmem:[%s5 + $0x18] sm:$0xff]
        %v1445 = vld [vmem:[%s5 + $0x20] sm:$0xff]
        %v1446 = vld [vmem:[%s5 + $0x28] sm:$0xff]
        %v1447 = vld [vmem:[%s5 + $0x30] sm:$0xff]
        %v1448 = vld [vmem:[%s5 + $0x38] sm:$0xff]
        %v1449 = vld [vmem:[%s5 + $0x40] sm:$0xff]
        %v1450 = vld [vmem:[%s5 + $0x48] sm:$0xff]
        %v1451 = vld [vmem:[%s5 + $0x50] sm:$0x33]
        %v1452 = vpack.c.bf16 %v1440, %v1439
        %v1453 = vld [vmem:[#allocation2 + $0x1] sm:$0xff]
        %v1454 = vld [vmem:[#allocation2 + $0x9] sm:$0x3]
        %s1455 = scalar_lea.vmem %s5, 88
        %v1456 = vld [vmem:[%s1455] sm:$0xff]
        %v1457 = vld [vmem:[%s1455 + $0x8] sm:$0xff]
        %v1458 = vld [vmem:[%s1455 + $0x10] sm:$0xff]
        %v1459 = vld [vmem:[%s1455 + $0x18] sm:$0xff]
        %v1460 = vld [vmem:[%s1455 + $0x20] sm:$0xff]
        %v1461 = vld [vmem:[%s1455 + $0x28] sm:$0xff]
        %v1462 = vld [vmem:[%s1455 + $0x30] sm:$0xff]
        %v1463 = vld [vmem:[%s1455 + $0x38] sm:$0xff]
        %v1464 = vld [vmem:[%s1455 + $0x40] sm:$0xff]
        %v1465 = vld [vmem:[%s1455 + $0x48] sm:$0xff]
        %v1466 = vld [vmem:[%s1455 + $0x50] sm:$0x33]
        %v1467 = vpack.c.bf16 %v1454, %v1453
        %v1479 = vunpack.c.l.b16 %v1456
        %v1480 = vunpack.c.h.b16 %v1456
        %v1481 = vunpack.c.l.b16 %v1457
        %v1482 = vunpack.c.h.b16 %v1457
        %v1483 = vunpack.c.l.b16 %v1458
        %v1484 = vunpack.c.h.b16 %v1458
        %v1485 = vunpack.c.l.b16 %v1459
        %v1486 = vunpack.c.h.b16 %v1459
        %v1487 = vunpack.c.l.b16 %v1460
        %v1488 = vunpack.c.h.b16 %v1460
        %v1489 = vunpack.c.l.b16 %v1461
        %v1490 = vunpack.c.h.b16 %v1461
        %v1491 = vunpack.c.l.b16 %v1462
        %v1492 = vunpack.c.h.b16 %v1462
        %v1493 = vunpack.c.l.b16 %v1463
        %v1494 = vunpack.c.h.b16 %v1463
        %v1495 = vunpack.c.l.b16 %v1464
        %v1496 = vunpack.c.h.b16 %v1464
        %v1497 = vunpack.c.l.b16 %v1465
        %v1498 = vunpack.c.h.b16 %v1465
        %v1499 = vunpack.c.l.b16 %v1466
        %v1500 = vunpack.c.h.b16 %v1466
        %v1501 = vpack.c.b16 %v1481, %v1479
        %v1502 = vpack.c.b16 %v1482, %v1480
        %v1503 = vpack.c.b16 %v1485, %v1483
        %v1504 = vpack.c.b16 %v1486, %v1484
        %v1505 = vpack.c.b16 %v1489, %v1487
        %v1506 = vpack.c.b16 %v1490, %v1488
        %v1507 = vpack.c.b16 %v1493, %v1491
        %v1508 = vpack.c.b16 %v1494, %v1492
        %v1509 = vpack.c.b16 %v1497, %v1495
        %v1510 = vpack.c.b16 %v1498, %v1496
        %v1511 = vpack.c.b16 %v1499, %v1499
        %v1512 = vpack.c.b16 %v1500, %v1500
        %v1524 = vsel %vm1435, %v1467, 0
        %vm1526 = vcmask 1041408
        %v1528 = vsel %vm1526, %v1511, 0
        %v1531 = vsel %vm1526, %v1512, 0
        %1533 = vmatprep.subr.bf16.mxu0 %v1502
        %1534 = vmatpush1.bf16.msra.mxu0 %v1501
        %1535 = vmatprep.subr.bf16.mxu0 %v1504
        %1536 = vmatpush1.bf16.msra.mxu0 %v1503
        %1537 = vmatprep.subr.bf16.mxu0 %v1506
        %1538 = vmatpush1.bf16.msra.mxu0 %v1505
        %1539 = vmatprep.subr.bf16.mxu0 %v1508
        %1540 = vmatpush1.bf16.msra.mxu0 %v1507
        %1541 = vmatprep.subr.bf16.mxu0 %v1510
        %1542 = vmatpush1.bf16.msra.mxu0 %v1509
        %1543 = vmatprep.subr.bf16.mxu0 %v1531
        %1544 = vmatpush1.bf16.msra.mxu0 %v1528
        %1545 = vmatprep.subr.bf16.mxu0 0
        %1546 = vmatpush1.bf16.msra.mxu0 0
        %1547 = vmatprep.subr.bf16.mxu0 0
        %1548 = vmatpush1.bf16.msra.mxu0 0
        %1549 = vmatprep.subr.bf16.mxu0 0
        %1550 = vmatpush1.bf16.msra.mxu0 0
        %1551 = vmatprep.subr.bf16.mxu0 0
        %1552 = vmatpush1.bf16.msra.mxu0 0
        %1553 = vmatprep.subr.bf16.mxu0 0
        %1554 = vmatpush1.bf16.msra.mxu0 0
        %1555 = vmatprep.subr.bf16.mxu0 0
        %1556 = vmatpush1.bf16.msra.mxu0 0
        %1557 = vmatprep.subr.bf16.mxu0 0
        %1558 = vmatpush1.bf16.msra.mxu0 0
        %1559 = vmatprep.subr.bf16.mxu0 0
        %1560 = vmatpush1.bf16.msra.mxu0 0
        %1561 = vmatprep.subr.bf16.mxu0 0
        %1562 = vmatpush1.bf16.msra.mxu0 0
        %1563 = vmatprep.subr.bf16.mxu0 0
        %1564 = vmatpush1.bf16.msra.mxu0 0
        %1565 = vmatprep.mubr.bf16.mxu0 0
        %1566 = vmatmul.mubr.bf16.gmra.mrb[0].mxu0 %v1524
        %v1567 = vpop.f32.mrb[0].mxu0
        %v1568 = vadd.f32 0.0, %v1567
        %v1569 = vpop.f32.mrb[0].mxu0
        %v1570 = vadd.f32 0.0, %v1569
        %v1571 = vpop.f32.mrb[0].mxu0
        %v1572 = vadd.f32 0.0, %v1571
        %v1573 = vpop.f32.mrb[0].mxu0
        %v1574 = vadd.f32 0.0, %v1573
        %1575 = vdwg.mxu0
        %v1587 = vunpack.c.l.b16 %v1441
        %v1588 = vunpack.c.h.b16 %v1441
        %v1589 = vunpack.c.l.b16 %v1442
        %v1590 = vunpack.c.h.b16 %v1442
        %v1591 = vunpack.c.l.b16 %v1443
        %v1592 = vunpack.c.h.b16 %v1443
        %v1593 = vunpack.c.l.b16 %v1444
        %v1594 = vunpack.c.h.b16 %v1444
        %v1595 = vunpack.c.l.b16 %v1445
        %v1596 = vunpack.c.h.b16 %v1445
        %v1597 = vunpack.c.l.b16 %v1446
        %v1598 = vunpack.c.h.b16 %v1446
        %v1599 = vunpack.c.l.b16 %v1447
        %v1600 = vunpack.c.h.b16 %v1447
        %v1601 = vunpack.c.l.b16 %v1448
        %v1602 = vunpack.c.h.b16 %v1448
        %v1603 = vunpack.c.l.b16 %v1449
        %v1604 = vunpack.c.h.b16 %v1449
        %v1605 = vunpack.c.l.b16 %v1450
        %v1606 = vunpack.c.h.b16 %v1450
        %v1607 = vunpack.c.l.b16 %v1451
        %v1608 = vunpack.c.h.b16 %v1451
        %v1609 = vpack.c.b16 %v1589, %v1587
        %v1610 = vpack.c.b16 %v1590, %v1588
        %v1611 = vpack.c.b16 %v1593, %v1591
        %v1612 = vpack.c.b16 %v1594, %v1592
        %v1613 = vpack.c.b16 %v1597, %v1595
        %v1614 = vpack.c.b16 %v1598, %v1596
        %v1615 = vpack.c.b16 %v1601, %v1599
        %v1616 = vpack.c.b16 %v1602, %v1600
        %v1617 = vpack.c.b16 %v1605, %v1603
        %v1618 = vpack.c.b16 %v1606, %v1604
        %v1619 = vpack.c.b16 %v1607, %v1607
        %v1620 = vpack.c.b16 %v1608, %v1608
        %v1632 = vsel %vm1435, %v1452, 0
        %v1635 = vsel %vm1526, %v1619, 0
        %v1638 = vsel %vm1526, %v1620, 0
        %1640 = vmatprep.subr.bf16.mxu0 %v1610
        %1641 = vmatpush1.bf16.msra.mxu0 %v1609
        %1642 = vmatprep.subr.bf16.mxu0 %v1612
        %1643 = vmatpush1.bf16.msra.mxu0 %v1611
        %1644 = vmatprep.subr.bf16.mxu0 %v1614
        %1645 = vmatpush1.bf16.msra.mxu0 %v1613
        %1646 = vmatprep.subr.bf16.mxu0 %v1616
        %1647 = vmatpush1.bf16.msra.mxu0 %v1615
        %1648 = vmatprep.subr.bf16.mxu0 %v1618
        %1649 = vmatpush1.bf16.msra.mxu0 %v1617
        %1650 = vmatprep.subr.bf16.mxu0 %v1638
        %1651 = vmatpush1.bf16.msra.mxu0 %v1635
        %1652 = vmatprep.subr.bf16.mxu0 0
        %1653 = vmatpush1.bf16.msra.mxu0 0
        %1654 = vmatprep.subr.bf16.mxu0 0
        %1655 = vmatpush1.bf16.msra.mxu0 0
        %1656 = vmatprep.subr.bf16.mxu0 0
        %1657 = vmatpush1.bf16.msra.mxu0 0
        %1658 = vmatprep.subr.bf16.mxu0 0
        %1659 = vmatpush1.bf16.msra.mxu0 0
        %1660 = vmatprep.subr.bf16.mxu0 0
        %1661 = vmatpush1.bf16.msra.mxu0 0
        %1662 = vmatprep.subr.bf16.mxu0 0
        %1663 = vmatpush1.bf16.msra.mxu0 0
        %1664 = vmatprep.subr.bf16.mxu0 0
        %1665 = vmatpush1.bf16.msra.mxu0 0
        %1666 = vmatprep.subr.bf16.mxu0 0
        %1667 = vmatpush1.bf16.msra.mxu0 0
        %1668 = vmatprep.subr.bf16.mxu0 0
        %1669 = vmatpush1.bf16.msra.mxu0 0
        %1670 = vmatprep.subr.bf16.mxu0 0
        %1671 = vmatpush1.bf16.msra.mxu0 0
        %1672 = vmatprep.mubr.bf16.mxu0 0
        %1673 = vmatmul.mubr.bf16.gmra.mrb[0].mxu0 %v1632
        %v1674 = vpop.f32.mrb[0].mxu0
        %v1675 = vadd.f32 %v1568, %v1674
        %v1676 = vpop.f32.mrb[0].mxu0
        %v1677 = vadd.f32 %v1570, %v1676
        %v1678 = vpop.f32.mrb[0].mxu0
        %v1679 = vadd.f32 %v1572, %v1678
        %v1680 = vpop.f32.mrb[0].mxu0
        %v1681 = vadd.f32 %v1574, %v1680
        %1682 = vdwg.mxu0
        %v1683 = vld [vmem:[#allocation2 + $0x2] sm:$0xff]
        %v1684 = vld [vmem:[#allocation2 + $0xa] sm:$0x3]
        %s1685 = scalar_lea.vmem %s5, 176
        %v1686 = vld [vmem:[%s1685] sm:$0xff]
        %v1687 = vld [vmem:[%s1685 + $0x8] sm:$0xff]
        %v1688 = vld [vmem:[%s1685 + $0x10] sm:$0xff]
        %v1689 = vld [vmem:[%s1685 + $0x18] sm:$0xff]
        %v1690 = vld [vmem:[%s1685 + $0x20] sm:$0xff]
        %v1691 = vld [vmem:[%s1685 + $0x28] sm:$0xff]
        %v1692 = vld [vmem:[%s1685 + $0x30] sm:$0xff]
        %v1693 = vld [vmem:[%s1685 + $0x38] sm:$0xff]
        %v1694 = vld [vmem:[%s1685 + $0x40] sm:$0xff]
        %v1695 = vld [vmem:[%s1685 + $0x48] sm:$0xff]
        %v1696 = vld [vmem:[%s1685 + $0x50] sm:$0x33]
        %v1697 = vpack.c.bf16 %v1684, %v1683
        %v1709 = vunpack.c.l.b16 %v1686
        %v1710 = vunpack.c.h.b16 %v1686
        %v1711 = vunpack.c.l.b16 %v1687
        %v1712 = vunpack.c.h.b16 %v1687
        %v1713 = vunpack.c.l.b16 %v1688
        %v1714 = vunpack.c.h.b16 %v1688
        %v1715 = vunpack.c.l.b16 %v1689
        %v1716 = vunpack.c.h.b16 %v1689
        %v1717 = vunpack.c.l.b16 %v1690
        %v1718 = vunpack.c.h.b16 %v1690
        %v1719 = vunpack.c.l.b16 %v1691
        %v1720 = vunpack.c.h.b16 %v1691
        %v1721 = vunpack.c.l.b16 %v1692
        %v1722 = vunpack.c.h.b16 %v1692
        %v1723 = vunpack.c.l.b16 %v1693
        %v1724 = vunpack.c.h.b16 %v1693
        %v1725 = vunpack.c.l.b16 %v1694
        %v1726 = vunpack.c.h.b16 %v1694
        %v1727 = vunpack.c.l.b16 %v1695
        %v1728 = vunpack.c.h.b16 %v1695
        %v1729 = vunpack.c.l.b16 %v1696
        %v1730 = vunpack.c.h.b16 %v1696
        %v1731 = vpack.c.b16 %v1711, %v1709
        %v1732 = vpack.c.b16 %v1712, %v1710
        %v1733 = vpack.c.b16 %v1715, %v1713
        %v1734 = vpack.c.b16 %v1716, %v1714
        %v1735 = vpack.c.b16 %v1719, %v1717
        %v1736 = vpack.c.b16 %v1720, %v1718
        %v1737 = vpack.c.b16 %v1723, %v1721
        %v1738 = vpack.c.b16 %v1724, %v1722
        %v1739 = vpack.c.b16 %v1727, %v1725
        %v1740 = vpack.c.b16 %v1728, %v1726
        %v1741 = vpack.c.b16 %v1729, %v1729
        %v1742 = vpack.c.b16 %v1730, %v1730
        %v1754 = vsel %vm1435, %v1697, 0
        %v1757 = vsel %vm1526, %v1741, 0
        %v1760 = vsel %vm1526, %v1742, 0
        %1762 = vmatprep.subr.bf16.mxu0 %v1732
        %1763 = vmatpush1.bf16.msra.mxu0 %v1731
        %1764 = vmatprep.subr.bf16.mxu0 %v1734
        %1765 = vmatpush1.bf16.msra.mxu0 %v1733
        %1766 = vmatprep.subr.bf16.mxu0 %v1736
        %1767 = vmatpush1.bf16.msra.mxu0 %v1735
        %1768 = vmatprep.subr.bf16.mxu0 %v1738
        %1769 = vmatpush1.bf16.msra.mxu0 %v1737
        %1770 = vmatprep.subr.bf16.mxu0 %v1740
        %1771 = vmatpush1.bf16.msra.mxu0 %v1739
        %1772 = vmatprep.subr.bf16.mxu0 %v1760
        %1773 = vmatpush1.bf16.msra.mxu0 %v1757
        %1774 = vmatprep.subr.bf16.mxu0 0
        %1775 = vmatpush1.bf16.msra.mxu0 0
        %1776 = vmatprep.subr.bf16.mxu0 0
        %1777 = vmatpush1.bf16.msra.mxu0 0
        %1778 = vmatprep.subr.bf16.mxu0 0
        %1779 = vmatpush1.bf16.msra.mxu0 0
        %1780 = vmatprep.subr.bf16.mxu0 0
        %1781 = vmatpush1.bf16.msra.mxu0 0
        %1782 = vmatprep.subr.bf16.mxu0 0
        %1783 = vmatpush1.bf16.msra.mxu0 0
        %1784 = vmatprep.subr.bf16.mxu0 0
        %1785 = vmatpush1.bf16.msra.mxu0 0
        %1786 = vmatprep.subr.bf16.mxu0 0
        %1787 = vmatpush1.bf16.msra.mxu0 0
        %1788 = vmatprep.subr.bf16.mxu0 0
        %1789 = vmatpush1.bf16.msra.mxu0 0
        %1790 = vmatprep.subr.bf16.mxu0 0
        %1791 = vmatpush1.bf16.msra.mxu0 0
        %1792 = vmatprep.subr.bf16.mxu0 0
        %1793 = vmatpush1.bf16.msra.mxu0 0
        %1794 = vmatprep.mubr.bf16.mxu0 0
        %1795 = vmatmul.mubr.bf16.gmra.mrb[0].mxu0 %v1754
        %v1796 = vpop.f32.mrb[0].mxu0
        %v1797 = vadd.f32 0.0, %v1796
        %v1798 = vpop.f32.mrb[0].mxu0
        %v1799 = vadd.f32 0.0, %v1798
        %v1800 = vpop.f32.mrb[0].mxu0
        %v1801 = vadd.f32 0.0, %v1800
        %v1802 = vpop.f32.mrb[0].mxu0
        %v1803 = vadd.f32 0.0, %v1802
        %1804 = vdwg.mxu0
        %v1805 = vadd.f32 %v1675, %v1797
        %v1806 = vadd.f32 %v1677, %v1799
        %v1807 = vadd.f32 %v1679, %v1801
        %v1808 = vadd.f32 %v1681, %v1803
        %v1809 = vld [vmem:[#allocation2 + $0x3] sm:$0xff]
        %v1810 = vld [vmem:[#allocation2 + $0xb] sm:$0x3]
        %s1811 = scalar_lea.vmem %s5, 264
        %v1812 = vld [vmem:[%s1811] sm:$0xff]
        %v1813 = vld [vmem:[%s1811 + $0x8] sm:$0xff]
        %v1814 = vld [vmem:[%s1811 + $0x10] sm:$0xff]
        %v1815 = vld [vmem:[%s1811 + $0x18] sm:$0xff]
        %v1816 = vld [vmem:[%s1811 + $0x20] sm:$0xff]
        %v1817 = vld [vmem:[%s1811 + $0x28] sm:$0xff]
        %v1818 = vld [vmem:[%s1811 + $0x30] sm:$0xff]
        %v1819 = vld [vmem:[%s1811 + $0x38] sm:$0xff]
        %v1820 = vld [vmem:[%s1811 + $0x40] sm:$0xff]
        %v1821 = vld [vmem:[%s1811 + $0x48] sm:$0xff]
        %v1822 = vld [vmem:[%s1811 + $0x50] sm:$0x33]
        %v1823 = vpack.c.bf16 %v1810, %v1809
        %v1835 = vunpack.c.l.b16 %v1812
        %v1836 = vunpack.c.h.b16 %v1812
        %v1837 = vunpack.c.l.b16 %v1813
        %v1838 = vunpack.c.h.b16 %v1813
        %v1839 = vunpack.c.l.b16 %v1814
        %v1840 = vunpack.c.h.b16 %v1814
        %v1841 = vunpack.c.l.b16 %v1815
        %v1842 = vunpack.c.h.b16 %v1815
        %v1843 = vunpack.c.l.b16 %v1816
        %v1844 = vunpack.c.h.b16 %v1816
        %v1845 = vunpack.c.l.b16 %v1817
        %v1846 = vunpack.c.h.b16 %v1817
        %v1847 = vunpack.c.l.b16 %v1818
        %v1848 = vunpack.c.h.b16 %v1818
        %v1849 = vunpack.c.l.b16 %v1819
        %v1850 = vunpack.c.h.b16 %v1819
        %v1851 = vunpack.c.l.b16 %v1820
        %v1852 = vunpack.c.h.b16 %v1820
        %v1853 = vunpack.c.l.b16 %v1821
        %v1854 = vunpack.c.h.b16 %v1821
        %v1855 = vunpack.c.l.b16 %v1822
        %v1856 = vunpack.c.h.b16 %v1822
        %v1857 = vpack.c.b16 %v1837, %v1835
        %v1858 = vpack.c.b16 %v1838, %v1836
        %v1859 = vpack.c.b16 %v1841, %v1839
        %v1860 = vpack.c.b16 %v1842, %v1840
        %v1861 = vpack.c.b16 %v1845, %v1843
        %v1862 = vpack.c.b16 %v1846, %v1844
        %v1863 = vpack.c.b16 %v1849, %v1847
        %v1864 = vpack.c.b16 %v1850, %v1848
        %v1865 = vpack.c.b16 %v1853, %v1851
        %v1866 = vpack.c.b16 %v1854, %v1852
        %v1867 = vpack.c.b16 %v1855, %v1855
        %v1868 = vpack.c.b16 %v1856, %v1856
        %v1880 = vsel %vm1435, %v1823, 0
        %v1883 = vsel %vm1526, %v1867, 0
        %v1886 = vsel %vm1526, %v1868, 0
        %1888 = vmatprep.subr.bf16.mxu0 %v1858
        %1889 = vmatpush1.bf16.msra.mxu0 %v1857
        %1890 = vmatprep.subr.bf16.mxu0 %v1860
        %1891 = vmatpush1.bf16.msra.mxu0 %v1859
        %1892 = vmatprep.subr.bf16.mxu0 %v1862
        %1893 = vmatpush1.bf16.msra.mxu0 %v1861
        %1894 = vmatprep.subr.bf16.mxu0 %v1864
        %1895 = vmatpush1.bf16.msra.mxu0 %v1863
        %1896 = vmatprep.subr.bf16.mxu0 %v1866
        %1897 = vmatpush1.bf16.msra.mxu0 %v1865
        %1898 = vmatprep.subr.bf16.mxu0 %v1886
        %1899 = vmatpush1.bf16.msra.mxu0 %v1883
        %1900 = vmatprep.subr.bf16.mxu0 0
        %1901 = vmatpush1.bf16.msra.mxu0 0
        %1902 = vmatprep.subr.bf16.mxu0 0
        %1903 = vmatpush1.bf16.msra.mxu0 0
        %1904 = vmatprep.subr.bf16.mxu0 0
        %1905 = vmatpush1.bf16.msra.mxu0 0
        %1906 = vmatprep.subr.bf16.mxu0 0
        %1907 = vmatpush1.bf16.msra.mxu0 0
        %1908 = vmatprep.subr.bf16.mxu0 0
        %1909 = vmatpush1.bf16.msra.mxu0 0
        %1910 = vmatprep.subr.bf16.mxu0 0
        %1911 = vmatpush1.bf16.msra.mxu0 0
        %1912 = vmatprep.subr.bf16.mxu0 0
        %1913 = vmatpush1.bf16.msra.mxu0 0
        %1914 = vmatprep.subr.bf16.mxu0 0
        %1915 = vmatpush1.bf16.msra.mxu0 0
        %1916 = vmatprep.subr.bf16.mxu0 0
        %1917 = vmatpush1.bf16.msra.mxu0 0
        %1918 = vmatprep.subr.bf16.mxu0 0
        %1919 = vmatpush1.bf16.msra.mxu0 0
        %1920 = vmatprep.mubr.bf16.mxu0 0
        %1921 = vmatmul.mubr.bf16.gmra.mrb[0].mxu0 %v1880
        %v1922 = vpop.f32.mrb[0].mxu0
        %v1923 = vadd.f32 0.0, %v1922
        %v1924 = vpop.f32.mrb[0].mxu0
        %v1925 = vadd.f32 0.0, %v1924
        %v1926 = vpop.f32.mrb[0].mxu0
        %v1927 = vadd.f32 0.0, %v1926
        %v1928 = vpop.f32.mrb[0].mxu0
        %v1929 = vadd.f32 0.0, %v1928
        %1930 = vdwg.mxu0
        %v1931 = vadd.f32 %v1805, %v1923
        %v1932 = vadd.f32 %v1806, %v1925
        %v1933 = vadd.f32 %v1807, %v1927
        %v1934 = vadd.f32 %v1808, %v1929
        %v1935 = vld [vmem:[#allocation2 + $0x4] sm:$0xff]
        %v1936 = vld [vmem:[#allocation2 + $0xc] sm:$0x3]
        %s1937 = scalar_lea.vmem %s5, 352
        %v1938 = vld [vmem:[%s1937] sm:$0xff]
        %v1939 = vld [vmem:[%s1937 + $0x8] sm:$0xff]
        %v1940 = vld [vmem:[%s1937 + $0x10] sm:$0xff]
        %v1941 = vld [vmem:[%s1937 + $0x18] sm:$0xff]
        %v1942 = vld [vmem:[%s1937 + $0x20] sm:$0xff]
        %v1943 = vld [vmem:[%s1937 + $0x28] sm:$0xff]
        %v1944 = vld [vmem:[%s1937 + $0x30] sm:$0xff]
        %v1945 = vld [vmem:[%s1937 + $0x38] sm:$0xff]
        %v1946 = vld [vmem:[%s1937 + $0x40] sm:$0xff]
        %v1947 = vld [vmem:[%s1937 + $0x48] sm:$0xff]
        %v1948 = vld [vmem:[%s1937 + $0x50] sm:$0x33]
        %v1949 = vpack.c.bf16 %v1936, %v1935
        %v1961 = vunpack.c.l.b16 %v1938
        %v1962 = vunpack.c.h.b16 %v1938
        %v1963 = vunpack.c.l.b16 %v1939
        %v1964 = vunpack.c.h.b16 %v1939
        %v1965 = vunpack.c.l.b16 %v1940
        %v1966 = vunpack.c.h.b16 %v1940
        %v1967 = vunpack.c.l.b16 %v1941
        %v1968 = vunpack.c.h.b16 %v1941
        %v1969 = vunpack.c.l.b16 %v1942
        %v1970 = vunpack.c.h.b16 %v1942
        %v1971 = vunpack.c.l.b16 %v1943
        %v1972 = vunpack.c.h.b16 %v1943
        %v1973 = vunpack.c.l.b16 %v1944
        %v1974 = vunpack.c.h.b16 %v1944
        %v1975 = vunpack.c.l.b16 %v1945
        %v1976 = vunpack.c.h.b16 %v1945
        %v1977 = vunpack.c.l.b16 %v1946
        %v1978 = vunpack.c.h.b16 %v1946
        %v1979 = vunpack.c.l.b16 %v1947
        %v1980 = vunpack.c.h.b16 %v1947
        %v1981 = vunpack.c.l.b16 %v1948
        %v1982 = vunpack.c.h.b16 %v1948
        %v1983 = vpack.c.b16 %v1963, %v1961
        %v1984 = vpack.c.b16 %v1964, %v1962
        %v1985 = vpack.c.b16 %v1967, %v1965
        %v1986 = vpack.c.b16 %v1968, %v1966
        %v1987 = vpack.c.b16 %v1971, %v1969
        %v1988 = vpack.c.b16 %v1972, %v1970
        %v1989 = vpack.c.b16 %v1975, %v1973
        %v1990 = vpack.c.b16 %v1976, %v1974
        %v1991 = vpack.c.b16 %v1979, %v1977
        %v1992 = vpack.c.b16 %v1980, %v1978
        %v1993 = vpack.c.b16 %v1981, %v1981
        %v1994 = vpack.c.b16 %v1982, %v1982
        %v2006 = vsel %vm1435, %v1949, 0
        %v2009 = vsel %vm1526, %v1993, 0
        %v2012 = vsel %vm1526, %v1994, 0
        %2014 = vmatprep.subr.bf16.mxu0 %v1984
        %2015 = vmatpush1.bf16.msra.mxu0 %v1983
        %2016 = vmatprep.subr.bf16.mxu0 %v1986
        %2017 = vmatpush1.bf16.msra.mxu0 %v1985
        %2018 = vmatprep.subr.bf16.mxu0 %v1988
        %2019 = vmatpush1.bf16.msra.mxu0 %v1987
        %2020 = vmatprep.subr.bf16.mxu0 %v1990
        %2021 = vmatpush1.bf16.msra.mxu0 %v1989
        %2022 = vmatprep.subr.bf16.mxu0 %v1992
        %2023 = vmatpush1.bf16.msra.mxu0 %v1991
        %2024 = vmatprep.subr.bf16.mxu0 %v2012
        %2025 = vmatpush1.bf16.msra.mxu0 %v2009
        %2026 = vmatprep.subr.bf16.mxu0 0
        %2027 = vmatpush1.bf16.msra.mxu0 0
        %2028 = vmatprep.subr.bf16.mxu0 0
        %2029 = vmatpush1.bf16.msra.mxu0 0
        %2030 = vmatprep.subr.bf16.mxu0 0
        %2031 = vmatpush1.bf16.msra.mxu0 0
        %2032 = vmatprep.subr.bf16.mxu0 0
        %2033 = vmatpush1.bf16.msra.mxu0 0
        %2034 = vmatprep.subr.bf16.mxu0 0
        %2035 = vmatpush1.bf16.msra.mxu0 0
        %2036 = vmatprep.subr.bf16.mxu0 0
        %2037 = vmatpush1.bf16.msra.mxu0 0
        %2038 = vmatprep.subr.bf16.mxu0 0
        %2039 = vmatpush1.bf16.msra.mxu0 0
        %2040 = vmatprep.subr.bf16.mxu0 0
        %2041 = vmatpush1.bf16.msra.mxu0 0
        %2042 = vmatprep.subr.bf16.mxu0 0
        %2043 = vmatpush1.bf16.msra.mxu0 0
        %2044 = vmatprep.subr.bf16.mxu0 0
        %2045 = vmatpush1.bf16.msra.mxu0 0
        %2046 = vmatprep.mubr.bf16.mxu0 0
        %2047 = vmatmul.mubr.bf16.gmra.mrb[0].mxu0 %v2006
        %v2048 = vpop.f32.mrb[0].mxu0
        %v2049 = vadd.f32 0.0, %v2048
        %v2050 = vpop.f32.mrb[0].mxu0
        %v2051 = vadd.f32 0.0, %v2050
        %v2052 = vpop.f32.mrb[0].mxu0
        %v2053 = vadd.f32 0.0, %v2052
        %v2054 = vpop.f32.mrb[0].mxu0
        %v2055 = vadd.f32 0.0, %v2054
        %2056 = vdwg.mxu0
        %v2057 = vadd.f32 %v1931, %v2049
        %v2058 = vadd.f32 %v1932, %v2051
        %v2059 = vadd.f32 %v1933, %v2053
        %v2060 = vadd.f32 %v1934, %v2055
        %v2061 = vld [vmem:[%s6] sm:$0x3]
        %v2063 = vlaneseq
        %v2064 = vshrl.u32 %v2063, 7
        %v2065 = vsub.s32 0, %v2064
        %v2066 = vrot.slane %v2061, %v2065
        %v2067 = vlaneseq
        %v2068 = vshrl.u32 %v2067, 7
        %v2069 = vsub.s32 1, %v2068
        %v2070 = vrot.slane %v2061, %v2069
        %v2073 = vadd.f32 %v2057, %v2066
        %v2074 = vadd.f32 %v2058, %v2070
        %v2075 = vadd.f32 %v2059, %v2066
        %v2076 = vadd.f32 %v2060, %v2070
        %v2077 = vmax.f32 %v2073, 0.0
        %v2078 = vmax.f32 %v2074, 0.0
        %v2079 = vmax.f32 %v2075, 0.0
        %v2080 = vmax.f32 %v2076, 0.0
        %v2081 = vld [vmem:[%s7] sm:$0x7]
        %v2082 = vpack.c.bf16 %v2079, %v2077
        %v2083 = vpack.c.bf16 %v2080, %v2078
        %vm2084 = vcmask 80896
        %v2086 = vsel %vm2084, %v2081, 0
        %vm2088 = vcmask 1044480
        %v2090 = vsel %vm2088, %v2082, 0
        %v2093 = vsel %vm2088, %v2083, 0
        %2095 = vmatprep.subr.bf16.mxu0 %v2093
        %2096 = vmatpush1.bf16.msra.mxu0 %v2090
        %2097 = vmatprep.subr.bf16.mxu0 0
        %2098 = vmatpush1.bf16.msra.mxu0 0
        %2099 = vmatprep.subr.bf16.mxu0 0
        %2100 = vmatpush1.bf16.msra.mxu0 0
        %2101 = vmatprep.subr.bf16.mxu0 0
        %2102 = vmatpush1.bf16.msra.mxu0 0
        %2103 = vmatprep.subr.bf16.mxu0 0
        %2104 = vmatpush1.bf16.msra.mxu0 0
        %2105 = vmatprep.subr.bf16.mxu0 0
        %2106 = vmatpush1.bf16.msra.mxu0 0
        %2107 = vmatprep.subr.bf16.mxu0 0
        %2108 = vmatpush1.bf16.msra.mxu0 0
        %2109 = vmatprep.subr.bf16.mxu0 0
        %2110 = vmatpush1.bf16.msra.mxu0 0
        %2111 = vmatprep.subr.bf16.mxu0 0
        %2112 = vmatpush1.bf16.msra.mxu0 0
        %2113 = vmatprep.subr.bf16.mxu0 0
        %2114 = vmatpush1.bf16.msra.mxu0 0
        %2115 = vmatprep.subr.bf16.mxu0 0
        %2116 = vmatpush1.bf16.msra.mxu0 0
        %2117 = vmatprep.subr.bf16.mxu0 0
        %2118 = vmatpush1.bf16.msra.mxu0 0
        %2119 = vmatprep.subr.bf16.mxu0 0
        %2120 = vmatpush1.bf16.msra.mxu0 0
        %2121 = vmatprep.subr.bf16.mxu0 0
        %2122 = vmatpush1.bf16.msra.mxu0 0
        %2123 = vmatprep.subr.bf16.mxu0 0
        %2124 = vmatpush1.bf16.msra.mxu0 0
        %2125 = vmatprep.subr.bf16.mxu0 0
        %2126 = vmatpush1.bf16.msra.mxu0 0
        %2127 = vmatprep.mubr.bf16.mxu0 0
        %2128 = vmatmul.mubr.bf16.gmra.mrb[0].mxu0 %v2086
        %v2129 = vpop.f32.mrb[0].mxu0
        %v2130 = vadd.f32 0.0, %v2129
        %v2131 = vpop.f32.mrb[0].mxu0
        %v2132 = vadd.f32 0.0, %v2131
        %v2133 = vpop.f32.mrb[0].mxu0
        %v2134 = vpop.f32.mrb[0].mxu0
        %2135 = vdwg.mxu0
        %v2136 = vld [vmem:[%s8] sm:$0xf]
        %v2137 = vld [vmem:[%s8 + $0x4] sm:$0xf]
        %v2138 = vld [vmem:[%s8 + $0x8] sm:$0xf]
        %v2139 = vld [vmem:[%s8 + $0xc] sm:$0xf]
        %v2140 = vld [vmem:[%s8 + $0x10] sm:$0xf]
        %v2141 = vld [vmem:[%s8 + $0x14] sm:$0xf]
        %v2142 = vld [vmem:[%s8 + $0x18] sm:$0xf]
        %v2143 = vld [vmem:[%s8 + $0x1c] sm:$0xf]
        %v2144 = vld [vmem:[%s8 + $0x20] sm:$0xf]
        %v2145 = vld [vmem:[%s8 + $0x24] sm:$0xf]
        %v2146 = vld [vmem:[%s8 + $0x28] sm:$0xf]
        %v2147 = vld [vmem:[%s8 + $0x2c] sm:$0xf]
        %v2148 = vld [vmem:[%s8 + $0x30] sm:$0xf]
        %v2149 = vld [vmem:[%s8 + $0x34] sm:$0xf]
        %v2150 = vld [vmem:[%s8 + $0x38] sm:$0xf]
        %v2151 = vld [vmem:[%s8 + $0x3c] sm:$0xf]
        %v2152 = vld [vmem:[%s8 + $0x40] sm:$0xf]
        %v2153 = vld [vmem:[%s8 + $0x44] sm:$0xf]
        %v2154 = vld [vmem:[%s8 + $0x48] sm:$0xf]
        %v2155 = vld [vmem:[%s8 + $0x4c] sm:$0xf]
        %v2156 = vpack.c.bf16 %v2130, %v2130
        %v2157 = vpack.c.bf16 %v2132, %v2132
        %v2178 = vunpack.c.l.b16 %v2136
        %v2179 = vunpack.c.l.b16 %v2137
        %v2180 = vunpack.c.l.b16 %v2138
        %v2181 = vunpack.c.l.b16 %v2139
        %v2182 = vunpack.c.l.b16 %v2140
        %v2183 = vunpack.c.l.b16 %v2141
        %v2184 = vunpack.c.l.b16 %v2142
        %v2185 = vunpack.c.l.b16 %v2143
        %v2186 = vunpack.c.l.b16 %v2144
        %v2187 = vunpack.c.l.b16 %v2145
        %v2188 = vunpack.c.l.b16 %v2146
        %v2189 = vunpack.c.l.b16 %v2147
        %v2190 = vunpack.c.l.b16 %v2148
        %v2191 = vunpack.c.l.b16 %v2149
        %v2192 = vunpack.c.l.b16 %v2150
        %v2193 = vunpack.c.l.b16 %v2151
        %v2194 = vunpack.c.l.b16 %v2152
        %v2195 = vunpack.c.l.b16 %v2153
        %v2196 = vunpack.c.l.b16 %v2154
        %v2197 = vunpack.c.l.b16 %v2155
        %v2198 = vpack.c.b16 %v2179, %v2178
        %v2199 = vpack.c.b16 %v2181, %v2180
        %v2200 = vpack.c.b16 %v2183, %v2182
        %v2201 = vpack.c.b16 %v2185, %v2184
        %v2202 = vpack.c.b16 %v2187, %v2186
        %v2203 = vpack.c.b16 %v2189, %v2188
        %v2204 = vpack.c.b16 %v2191, %v2190
        %v2205 = vpack.c.b16 %v2193, %v2192
        %v2206 = vpack.c.b16 %v2195, %v2194
        %v2207 = vpack.c.b16 %v2197, %v2196
        %vm2218 = vcmask 261120
        %v2220 = vsel %vm2218, %v2157, 0
        %2222 = vmatprep.subr.bf16.mxu0 0
        %2223 = vmatpush1.bf16.msra.mxu0 %v2198
        %2224 = vmatprep.subr.bf16.mxu0 0
        %2225 = vmatpush1.bf16.msra.mxu0 %v2199
        %2226 = vmatprep.subr.bf16.mxu0 0
        %2227 = vmatpush1.bf16.msra.mxu0 %v2200
        %2228 = vmatprep.subr.bf16.mxu0 0
        %2229 = vmatpush1.bf16.msra.mxu0 %v2201
        %2230 = vmatprep.subr.bf16.mxu0 0
        %2231 = vmatpush1.bf16.msra.mxu0 %v2202
        %2232 = vmatprep.subr.bf16.mxu0 0
        %2233 = vmatpush1.bf16.msra.mxu0 %v2203
        %2234 = vmatprep.subr.bf16.mxu0 0
        %2235 = vmatpush1.bf16.msra.mxu0 %v2204
        %2236 = vmatprep.subr.bf16.mxu0 0
        %2237 = vmatpush1.bf16.msra.mxu0 %v2205
        %2238 = vmatprep.subr.bf16.mxu0 0
        %2239 = vmatpush1.bf16.msra.mxu0 %v2206
        %2240 = vmatprep.subr.bf16.mxu0 0
        %2241 = vmatpush1.bf16.msra.mxu0 %v2207
        %2242 = vmatprep.subr.bf16.mxu0 0
        %2243 = vmatpush1.bf16.msra.mxu0 0
        %2244 = vmatprep.subr.bf16.mxu0 0
        %2245 = vmatpush1.bf16.msra.mxu0 0
        %2246 = vmatprep.subr.bf16.mxu0 0
        %2247 = vmatpush1.bf16.msra.mxu0 0
        %2248 = vmatprep.subr.bf16.mxu0 0
        %2249 = vmatpush1.bf16.msra.mxu0 0
        %2250 = vmatprep.subr.bf16.mxu0 0
        %2251 = vmatpush1.bf16.msra.mxu0 0
        %2252 = vmatprep.subr.bf16.mxu0 0
        %2253 = vmatpush1.bf16.msra.mxu0 0
        %2254 = vmatprep.mubr.bf16.mxu0 %v2220
        %2255 = vmatmul.mubr.bf16.gmra.mrb[0].mxu0 %v2156
        %v2256 = vpop.f32.mrb[0].mxu0
        %v2257 = vadd.f32 0.0, %v2256
        %v2258 = vpop.f32.mrb[0].mxu0
        %v2259 = vpop.f32.mrb[0].mxu0
        %v2260 = vpop.f32.mrb[0].mxu0
        %2261 = vdwg.mxu0
        %vm2262 = vcmask 651264
        %2263 = vst.msk [vmem:[#allocation3] sm:$0x1f] %vm2262, %v2257
        %v2264 = vld [vmem:[#allocation3] sm:$0x1]
        %v2265 = vld [vmem:[%s9] sm:$0xf]
        %v2266 = vld [vmem:[%s9 + $0x4] sm:$0xf]
        %v2267 = vld [vmem:[%s9 + $0x8] sm:$0xf]
        %v2268 = vld [vmem:[%s9 + $0xc] sm:$0xf]
        %v2269 = vld [vmem:[%s9 + $0x10] sm:$0xf]
        %v2270 = vld [vmem:[%s9 + $0x14] sm:$0xf]
        %v2271 = vld [vmem:[%s9 + $0x18] sm:$0xf]
        %v2272 = vld [vmem:[%s9 + $0x1c] sm:$0xf]
        %v2273 = vld [vmem:[%s9 + $0x20] sm:$0xf]
        %v2274 = vld [vmem:[%s9 + $0x24] sm:$0xf]
        %v2275 = vpack.c.bf16 %v2264, %v2264
        %v2276 = vld [vmem:[#allocation3 + $0x1] sm:$0x1]
        %s2277 = scalar_lea.vmem %s9, 40
        %v2278 = vld [vmem:[%s2277] sm:$0xf]
        %v2279 = vld [vmem:[%s2277 + $0x4] sm:$0xf]
        %v2280 = vld [vmem:[%s2277 + $0x8] sm:$0xf]
        %v2281 = vld [vmem:[%s2277 + $0xc] sm:$0xf]
        %v2282 = vld [vmem:[%s2277 + $0x10] sm:$0xf]
        %v2283 = vld [vmem:[%s2277 + $0x14] sm:$0xf]
        %v2284 = vld [vmem:[%s2277 + $0x18] sm:$0xf]
        %v2285 = vld [vmem:[%s2277 + $0x1c] sm:$0xf]
        %v2286 = vld [vmem:[%s2277 + $0x20] sm:$0xf]
        %v2287 = vld [vmem:[%s2277 + $0x24] sm:$0xf]
        %v2288 = vpack.c.bf16 %v2276, %v2276
        %v2299 = vunpack.c.l.b16 %v2278
        %v2300 = vunpack.c.l.b16 %v2279
        %v2301 = vunpack.c.l.b16 %v2280
        %v2302 = vunpack.c.l.b16 %v2281
        %v2303 = vunpack.c.l.b16 %v2282
        %v2304 = vunpack.c.l.b16 %v2283
        %v2305 = vunpack.c.l.b16 %v2284
        %v2306 = vunpack.c.l.b16 %v2285
        %v2307 = vunpack.c.l.b16 %v2286
        %v2308 = vunpack.c.l.b16 %v2287
        %v2309 = vpack.c.b16 %v2300, %v2299
        %v2310 = vpack.c.b16 %v2302, %v2301
        %v2311 = vpack.c.b16 %v2304, %v2303
        %v2312 = vpack.c.b16 %v2306, %v2305
        %v2313 = vpack.c.b16 %v2308, %v2307
        %vm2319 = vcmask 654336
        %v2321 = vsel %vm2319, %v2288, 0
        %2323 = vmatprep.subr.bf16.mxu0 0
        %2324 = vmatpush1.bf16.msra.mxu0 %v2309
        %2325 = vmatprep.subr.bf16.mxu0 0
        %2326 = vmatpush1.bf16.msra.mxu0 %v2310
        %2327 = vmatprep.subr.bf16.mxu0 0
        %2328 = vmatpush1.bf16.msra.mxu0 %v2311
        %2329 = vmatprep.subr.bf16.mxu0 0
        %2330 = vmatpush1.bf16.msra.mxu0 %v2312
        %2331 = vmatprep.subr.bf16.mxu0 0
        %2332 = vmatpush1.bf16.msra.mxu0 %v2313
        %2333 = vmatprep.subr.bf16.mxu0 0
        %2334 = vmatpush1.bf16.msra.mxu0 0
        %2335 = vmatprep.subr.bf16.mxu0 0
        %2336 = vmatpush1.bf16.msra.mxu0 0
        %2337 = vmatprep.subr.bf16.mxu0 0
        %2338 = vmatpush1.bf16.msra.mxu0 0
        %2339 = vmatprep.subr.bf16.mxu0 0
        %2340 = vmatpush1.bf16.msra.mxu0 0
        %2341 = vmatprep.subr.bf16.mxu0 0
        %2342 = vmatpush1.bf16.msra.mxu0 0
        %2343 = vmatprep.subr.bf16.mxu0 0
        %2344 = vmatpush1.bf16.msra.mxu0 0
        %2345 = vmatprep.subr.bf16.mxu0 0
        %2346 = vmatpush1.bf16.msra.mxu0 0
        %2347 = vmatprep.subr.bf16.mxu0 0
        %2348 = vmatpush1.bf16.msra.mxu0 0
        %2349 = vmatprep.subr.bf16.mxu0 0
        %2350 = vmatpush1.bf16.msra.mxu0 0
        %2351 = vmatprep.subr.bf16.mxu0 0
        %2352 = vmatpush1.bf16.msra.mxu0 0
        %2353 = vmatprep.subr.bf16.mxu0 0
        %2354 = vmatpush1.bf16.msra.mxu0 0
        %2355 = vmatprep.mubr.bf16.mxu0 0
        %2356 = vmatmul.mubr.bf16.gmra.mrb[0].mxu0 %v2321
        %v2357 = vpop.f32.mrb[0].mxu0
        %v2358 = vadd.f32 0.0, %v2357
        %v2359 = vpop.f32.mrb[0].mxu0
        %v2360 = vpop.f32.mrb[0].mxu0
        %v2361 = vpop.f32.mrb[0].mxu0
        %2362 = vdwg.mxu0
        %v2373 = vunpack.c.l.b16 %v2265
        %v2374 = vunpack.c.l.b16 %v2266
        %v2375 = vunpack.c.l.b16 %v2267
        %v2376 = vunpack.c.l.b16 %v2268
        %v2377 = vunpack.c.l.b16 %v2269
        %v2378 = vunpack.c.l.b16 %v2270
        %v2379 = vunpack.c.l.b16 %v2271
        %v2380 = vunpack.c.l.b16 %v2272
        %v2381 = vunpack.c.l.b16 %v2273
        %v2382 = vunpack.c.l.b16 %v2274
        %v2383 = vpack.c.b16 %v2374, %v2373
        %v2384 = vpack.c.b16 %v2376, %v2375
        %v2385 = vpack.c.b16 %v2378, %v2377
        %v2386 = vpack.c.b16 %v2380, %v2379
        %v2387 = vpack.c.b16 %v2382, %v2381
        %v2394 = vsel %vm2319, %v2275, 0
        %2396 = vmatprep.subr.bf16.mxu0 0
        %2397 = vmatpush1.bf16.msra.mxu0 %v2383
        %2398 = vmatprep.subr.bf16.mxu0 0
        %2399 = vmatpush1.bf16.msra.mxu0 %v2384
        %2400 = vmatprep.subr.bf16.mxu0 0
        %2401 = vmatpush1.bf16.msra.mxu0 %v2385
        %2402 = vmatprep.subr.bf16.mxu0 0
        %2403 = vmatpush1.bf16.msra.mxu0 %v2386
        %2404 = vmatprep.subr.bf16.mxu0 0
        %2405 = vmatpush1.bf16.msra.mxu0 %v2387
        %2406 = vmatprep.subr.bf16.mxu0 0
        %2407 = vmatpush1.bf16.msra.mxu0 0
        %2408 = vmatprep.subr.bf16.mxu0 0
        %2409 = vmatpush1.bf16.msra.mxu0 0
        %2410 = vmatprep.subr.bf16.mxu0 0
        %2411 = vmatpush1.bf16.msra.mxu0 0
        %2412 = vmatprep.subr.bf16.mxu0 0
        %2413 = vmatpush1.bf16.msra.mxu0 0
        %2414 = vmatprep.subr.bf16.mxu0 0
        %2415 = vmatpush1.bf16.msra.mxu0 0
        %2416 = vmatprep.subr.bf16.mxu0 0
        %2417 = vmatpush1.bf16.msra.mxu0 0
        %2418 = vmatprep.subr.bf16.mxu0 0
        %2419 = vmatpush1.bf16.msra.mxu0 0
        %2420 = vmatprep.subr.bf16.mxu0 0
        %2421 = vmatpush1.bf16.msra.mxu0 0
        %2422 = vmatprep.subr.bf16.mxu0 0
        %2423 = vmatpush1.bf16.msra.mxu0 0
        %2424 = vmatprep.subr.bf16.mxu0 0
        %2425 = vmatpush1.bf16.msra.mxu0 0
        %2426 = vmatprep.subr.bf16.mxu0 0
        %2427 = vmatpush1.bf16.msra.mxu0 0
        %2428 = vmatprep.mubr.bf16.mxu0 0
        %2429 = vmatmul.mubr.bf16.gmra.mrb[0].mxu0 %v2394
        %v2430 = vpop.f32.mrb[0].mxu0
        %v2431 = vadd.f32 %v2358, %v2430
        %v2432 = vpop.f32.mrb[0].mxu0
        %v2433 = vpop.f32.mrb[0].mxu0
        %v2434 = vpop.f32.mrb[0].mxu0
        %2435 = vdwg.mxu0
        %v2436 = vld [vmem:[#allocation3 + $0x2] sm:$0x1]
        %s2437 = scalar_lea.vmem %s9, 80
        %v2438 = vld [vmem:[%s2437] sm:$0xf]
        %v2439 = vld [vmem:[%s2437 + $0x4] sm:$0xf]
        %v2440 = vld [vmem:[%s2437 + $0x8] sm:$0xf]
        %v2441 = vld [vmem:[%s2437 + $0xc] sm:$0xf]
        %v2442 = vld [vmem:[%s2437 + $0x10] sm:$0xf]
        %v2443 = vld [vmem:[%s2437 + $0x14] sm:$0xf]
        %v2444 = vld [vmem:[%s2437 + $0x18] sm:$0xf]
        %v2445 = vld [vmem:[%s2437 + $0x1c] sm:$0xf]
        %v2446 = vld [vmem:[%s2437 + $0x20] sm:$0xf]
        %v2447 = vld [vmem:[%s2437 + $0x24] sm:$0xf]
        %v2448 = vpack.c.bf16 %v2436, %v2436
        %v2459 = vunpack.c.l.b16 %v2438
        %v2460 = vunpack.c.l.b16 %v2439
        %v2461 = vunpack.c.l.b16 %v2440
        %v2462 = vunpack.c.l.b16 %v2441
        %v2463 = vunpack.c.l.b16 %v2442
        %v2464 = vunpack.c.l.b16 %v2443
        %v2465 = vunpack.c.l.b16 %v2444
        %v2466 = vunpack.c.l.b16 %v2445
        %v2467 = vunpack.c.l.b16 %v2446
        %v2468 = vunpack.c.l.b16 %v2447
        %v2469 = vpack.c.b16 %v2460, %v2459
        %v2470 = vpack.c.b16 %v2462, %v2461
        %v2471 = vpack.c.b16 %v2464, %v2463
        %v2472 = vpack.c.b16 %v2466, %v2465
        %v2473 = vpack.c.b16 %v2468, %v2467
        %v2480 = vsel %vm2319, %v2448, 0
        %2482 = vmatprep.subr.bf16.mxu0 0
        %2483 = vmatpush1.bf16.msra.mxu0 %v2469
        %2484 = vmatprep.subr.bf16.mxu0 0
        %2485 = vmatpush1.bf16.msra.mxu0 %v2470
        %2486 = vmatprep.subr.bf16.mxu0 0
        %2487 = vmatpush1.bf16.msra.mxu0 %v2471
        %2488 = vmatprep.subr.bf16.mxu0 0
        %2489 = vmatpush1.bf16.msra.mxu0 %v2472
        %2490 = vmatprep.subr.bf16.mxu0 0
        %2491 = vmatpush1.bf16.msra.mxu0 %v2473
        %2492 = vmatprep.subr.bf16.mxu0 0
        %2493 = vmatpush1.bf16.msra.mxu0 0
        %2494 = vmatprep.subr.bf16.mxu0 0
        %2495 = vmatpush1.bf16.msra.mxu0 0
        %2496 = vmatprep.subr.bf16.mxu0 0
        %2497 = vmatpush1.bf16.msra.mxu0 0
        %2498 = vmatprep.subr.bf16.mxu0 0
        %2499 = vmatpush1.bf16.msra.mxu0 0
        %2500 = vmatprep.subr.bf16.mxu0 0
        %2501 = vmatpush1.bf16.msra.mxu0 0
        %2502 = vmatprep.subr.bf16.mxu0 0
        %2503 = vmatpush1.bf16.msra.mxu0 0
        %2504 = vmatprep.subr.bf16.mxu0 0
        %2505 = vmatpush1.bf16.msra.mxu0 0
        %2506 = vmatprep.subr.bf16.mxu0 0
        %2507 = vmatpush1.bf16.msra.mxu0 0
        %2508 = vmatprep.subr.bf16.mxu0 0
        %2509 = vmatpush1.bf16.msra.mxu0 0
        %2510 = vmatprep.subr.bf16.mxu0 0
        %2511 = vmatpush1.bf16.msra.mxu0 0
        %2512 = vmatprep.subr.bf16.mxu0 0
        %2513 = vmatpush1.bf16.msra.mxu0 0
        %2514 = vmatprep.mubr.bf16.mxu0 0
        %2515 = vmatmul.mubr.bf16.gmra.mrb[0].mxu0 %v2480
        %v2516 = vpop.f32.mrb[0].mxu0
        %v2517 = vadd.f32 0.0, %v2516
        %v2518 = vpop.f32.mrb[0].mxu0
        %v2519 = vpop.f32.mrb[0].mxu0
        %v2520 = vpop.f32.mrb[0].mxu0
        %2521 = vdwg.mxu0
        %v2522 = vadd.f32 %v2431, %v2517
        %v2523 = vld [vmem:[#allocation3 + $0x3] sm:$0x1]
        %s2524 = scalar_lea.vmem %s9, 120
        %v2525 = vld [vmem:[%s2524] sm:$0xf]
        %v2526 = vld [vmem:[%s2524 + $0x4] sm:$0xf]
        %v2527 = vld [vmem:[%s2524 + $0x8] sm:$0xf]
        %v2528 = vld [vmem:[%s2524 + $0xc] sm:$0xf]
        %v2529 = vld [vmem:[%s2524 + $0x10] sm:$0xf]
        %v2530 = vld [vmem:[%s2524 + $0x14] sm:$0xf]
        %v2531 = vld [vmem:[%s2524 + $0x18] sm:$0xf]
        %v2532 = vld [vmem:[%s2524 + $0x1c] sm:$0xf]
        %v2533 = vld [vmem:[%s2524 + $0x20] sm:$0xf]
        %v2534 = vld [vmem:[%s2524 + $0x24] sm:$0xf]
        %v2535 = vpack.c.bf16 %v2523, %v2523
        %v2546 = vunpack.c.l.b16 %v2525
        %v2547 = vunpack.c.l.b16 %v2526
        %v2548 = vunpack.c.l.b16 %v2527
        %v2549 = vunpack.c.l.b16 %v2528
        %v2550 = vunpack.c.l.b16 %v2529
        %v2551 = vunpack.c.l.b16 %v2530
        %v2552 = vunpack.c.l.b16 %v2531
        %v2553 = vunpack.c.l.b16 %v2532
        %v2554 = vunpack.c.l.b16 %v2533
        %v2555 = vunpack.c.l.b16 %v2534
        %v2556 = vpack.c.b16 %v2547, %v2546
        %v2557 = vpack.c.b16 %v2549, %v2548
        %v2558 = vpack.c.b16 %v2551, %v2550
        %v2559 = vpack.c.b16 %v2553, %v2552
        %v2560 = vpack.c.b16 %v2555, %v2554
        %v2567 = vsel %vm2319, %v2535, 0
        %2569 = vmatprep.subr.bf16.mxu0 0
        %2570 = vmatpush1.bf16.msra.mxu0 %v2556
        %2571 = vmatprep.subr.bf16.mxu0 0
        %2572 = vmatpush1.bf16.msra.mxu0 %v2557
        %2573 = vmatprep.subr.bf16.mxu0 0
        %2574 = vmatpush1.bf16.msra.mxu0 %v2558
        %2575 = vmatprep.subr.bf16.mxu0 0
        %2576 = vmatpush1.bf16.msra.mxu0 %v2559
        %2577 = vmatprep.subr.bf16.mxu0 0
        %2578 = vmatpush1.bf16.msra.mxu0 %v2560
        %2579 = vmatprep.subr.bf16.mxu0 0
        %2580 = vmatpush1.bf16.msra.mxu0 0
        %2581 = vmatprep.subr.bf16.mxu0 0
        %2582 = vmatpush1.bf16.msra.mxu0 0
        %2583 = vmatprep.subr.bf16.mxu0 0
        %2584 = vmatpush1.bf16.msra.mxu0 0
        %2585 = vmatprep.subr.bf16.mxu0 0
        %2586 = vmatpush1.bf16.msra.mxu0 0
        %2587 = vmatprep.subr.bf16.mxu0 0
        %2588 = vmatpush1.bf16.msra.mxu0 0
        %2589 = vmatprep.subr.bf16.mxu0 0
        %2590 = vmatpush1.bf16.msra.mxu0 0
        %2591 = vmatprep.subr.bf16.mxu0 0
        %2592 = vmatpush1.bf16.msra.mxu0 0
        %2593 = vmatprep.subr.bf16.mxu0 0
        %2594 = vmatpush1.bf16.msra.mxu0 0
        %2595 = vmatprep.subr.bf16.mxu0 0
        %2596 = vmatpush1.bf16.msra.mxu0 0
        %2597 = vmatprep.subr.bf16.mxu0 0
        %2598 = vmatpush1.bf16.msra.mxu0 0
        %2599 = vmatprep.subr.bf16.mxu0 0
        %2600 = vmatpush1.bf16.msra.mxu0 0
        %2601 = vmatprep.mubr.bf16.mxu0 0
        %2602 = vmatmul.mubr.bf16.gmra.mrb[0].mxu0 %v2567
        %v2603 = vpop.f32.mrb[0].mxu0
        %v2604 = vadd.f32 0.0, %v2603
        %v2605 = vpop.f32.mrb[0].mxu0
        %v2606 = vpop.f32.mrb[0].mxu0
        %v2607 = vpop.f32.mrb[0].mxu0
        %2608 = vdwg.mxu0
        %v2609 = vadd.f32 %v2522, %v2604
        %v2610 = vld [vmem:[#allocation3 + $0x4] sm:$0x1]
        %s2611 = scalar_lea.vmem %s9, 160
        %v2612 = vld [vmem:[%s2611] sm:$0xf]
        %v2613 = vld [vmem:[%s2611 + $0x4] sm:$0xf]
        %v2614 = vld [vmem:[%s2611 + $0x8] sm:$0xf]
        %v2615 = vld [vmem:[%s2611 + $0xc] sm:$0xf]
        %v2616 = vld [vmem:[%s2611 + $0x10] sm:$0xf]
        %v2617 = vld [vmem:[%s2611 + $0x14] sm:$0xf]
        %v2618 = vld [vmem:[%s2611 + $0x18] sm:$0xf]
        %v2619 = vld [vmem:[%s2611 + $0x1c] sm:$0xf]
        %v2620 = vld [vmem:[%s2611 + $0x20] sm:$0xf]
        %v2621 = vld [vmem:[%s2611 + $0x24] sm:$0xf]
        %v2622 = vpack.c.bf16 %v2610, %v2610
        %v2633 = vunpack.c.l.b16 %v2612
        %v2634 = vunpack.c.l.b16 %v2613
        %v2635 = vunpack.c.l.b16 %v2614
        %v2636 = vunpack.c.l.b16 %v2615
        %v2637 = vunpack.c.l.b16 %v2616
        %v2638 = vunpack.c.l.b16 %v2617
        %v2639 = vunpack.c.l.b16 %v2618
        %v2640 = vunpack.c.l.b16 %v2619
        %v2641 = vunpack.c.l.b16 %v2620
        %v2642 = vunpack.c.l.b16 %v2621
        %v2643 = vpack.c.b16 %v2634, %v2633
        %v2644 = vpack.c.b16 %v2636, %v2635
        %v2645 = vpack.c.b16 %v2638, %v2637
        %v2646 = vpack.c.b16 %v2640, %v2639
        %v2647 = vpack.c.b16 %v2642, %v2641
        %v2654 = vsel %vm2319, %v2622, 0
        %2656 = vmatprep.subr.bf16.mxu0 0
        %2657 = vmatpush1.bf16.msra.mxu0 %v2643
        %2658 = vmatprep.subr.bf16.mxu0 0
        %2659 = vmatpush1.bf16.msra.mxu0 %v2644
        %2660 = vmatprep.subr.bf16.mxu0 0
        %2661 = vmatpush1.bf16.msra.mxu0 %v2645
        %2662 = vmatprep.subr.bf16.mxu0 0
        %2663 = vmatpush1.bf16.msra.mxu0 %v2646
        %2664 = vmatprep.subr.bf16.mxu0 0
        %2665 = vmatpush1.bf16.msra.mxu0 %v2647
        %2666 = vmatprep.subr.bf16.mxu0 0
        %2667 = vmatpush1.bf16.msra.mxu0 0
        %2668 = vmatprep.subr.bf16.mxu0 0
        %2669 = vmatpush1.bf16.msra.mxu0 0
        %2670 = vmatprep.subr.bf16.mxu0 0
        %2671 = vmatpush1.bf16.msra.mxu0 0
        %2672 = vmatprep.subr.bf16.mxu0 0
        %2673 = vmatpush1.bf16.msra.mxu0 0
        %2674 = vmatprep.subr.bf16.mxu0 0
        %2675 = vmatpush1.bf16.msra.mxu0 0
        %2676 = vmatprep.subr.bf16.mxu0 0
        %2677 = vmatpush1.bf16.msra.mxu0 0
        %2678 = vmatprep.subr.bf16.mxu0 0
        %2679 = vmatpush1.bf16.msra.mxu0 0
        %2680 = vmatprep.subr.bf16.mxu0 0
        %2681 = vmatpush1.bf16.msra.mxu0 0
        %2682 = vmatprep.subr.bf16.mxu0 0
        %2683 = vmatpush1.bf16.msra.mxu0 0
        %2684 = vmatprep.subr.bf16.mxu0 0
        %2685 = vmatpush1.bf16.msra.mxu0 0
        %2686 = vmatprep.subr.bf16.mxu0 0
        %2687 = vmatpush1.bf16.msra.mxu0 0
        %2688 = vmatprep.mubr.bf16.mxu0 0
        %2689 = vmatmul.mubr.bf16.gmra.mrb[0].mxu0 %v2654
        %v2690 = vpop.f32.mrb[0].mxu0
        %v2691 = vadd.f32 0.0, %v2690
        %v2692 = vpop.f32.mrb[0].mxu0
        %v2693 = vpop.f32.mrb[0].mxu0
        %v2694 = vpop.f32.mrb[0].mxu0
        %2695 = vdwg.mxu0
        %v2696 = vadd.f32 %v2609, %v2691
        %v2697 = vld [vmem:[%s10] sm:$0x1]
        %v2698 = vadd.f32 %v2696, %v2697
        %v2699 = vmax.f32 %v2698, 0.0
        %v2700 = vld [vmem:[%s11] sm:$0xf]
        %v2701 = vld [vmem:[%s11 + $0x4] sm:$0xf]
        %v2702 = vld [vmem:[%s11 + $0x8] sm:$0xf]
        %v2703 = vld [vmem:[%s11 + $0xc] sm:$0xf]
        %v2704 = vld [vmem:[%s11 + $0x10] sm:$0xf]
        %v2705 = vld [vmem:[%s11 + $0x14] sm:$0xf]
        %v2706 = vld [vmem:[%s11 + $0x18] sm:$0xf]
        %v2707 = vld [vmem:[%s11 + $0x1c] sm:$0xf]
        %v2708 = vld [vmem:[%s11 + $0x20] sm:$0xf]
        %v2709 = vld [vmem:[%s11 + $0x24] sm:$0xf]
        %v2710 = vld [vmem:[%s11 + $0x28] sm:$0xf]
        %v2711 = vld [vmem:[%s11 + $0x2c] sm:$0xf]
        %v2712 = vld [vmem:[%s11 + $0x30] sm:$0xf]
        %v2713 = vld [vmem:[%s11 + $0x34] sm:$0xf]
        %v2714 = vld [vmem:[%s11 + $0x38] sm:$0xf]
        %v2715 = vpack.c.bf16 %v2699, %v2699
        %v2716 = vld [vmem:[%s12] sm:$0x1]
        %v2732 = vunpack.c.l.b16 %v2700
        %v2733 = vunpack.c.l.b16 %v2701
        %v2734 = vunpack.c.l.b16 %v2702
        %v2735 = vunpack.c.l.b16 %v2703
        %v2736 = vunpack.c.l.b16 %v2704
        %v2737 = vunpack.c.l.b16 %v2705
        %v2738 = vunpack.c.l.b16 %v2706
        %v2739 = vunpack.c.l.b16 %v2707
        %v2740 = vunpack.c.l.b16 %v2708
        %v2741 = vunpack.c.l.b16 %v2709
        %v2742 = vunpack.c.l.b16 %v2710
        %v2743 = vunpack.c.l.b16 %v2711
        %v2744 = vunpack.c.l.b16 %v2712
        %v2745 = vunpack.c.l.b16 %v2713
        %v2746 = vunpack.c.l.b16 %v2714
        %v2747 = vpack.c.b16 %v2733, %v2732
        %v2748 = vpack.c.b16 %v2735, %v2734
        %v2749 = vpack.c.b16 %v2737, %v2736
        %v2750 = vpack.c.b16 %v2739, %v2738
        %v2751 = vpack.c.b16 %v2741, %v2740
        %v2752 = vpack.c.b16 %v2743, %v2742
        %v2753 = vpack.c.b16 %v2745, %v2744
        %v2754 = vpack.c.b16 %v2746, %v2746
        %vm2762 = vcmask 982016
        %v2764 = vsel %vm2762, %v2715, 0
        %v2767 = vsel %vm1390, %v2754, 0
        %2769 = vmatprep.subr.bf16.mxu0 0
        %2770 = vmatpush1.bf16.msra.mxu0 %v2747
        %2771 = vmatprep.subr.bf16.mxu0 0
        %2772 = vmatpush1.bf16.msra.mxu0 %v2748
        %2773 = vmatprep.subr.bf16.mxu0 0
        %2774 = vmatpush1.bf16.msra.mxu0 %v2749
        %2775 = vmatprep.subr.bf16.mxu0 0
        %2776 = vmatpush1.bf16.msra.mxu0 %v2750
        %2777 = vmatprep.subr.bf16.mxu0 0
        %2778 = vmatpush1.bf16.msra.mxu0 %v2751
        %2779 = vmatprep.subr.bf16.mxu0 0
        %2780 = vmatpush1.bf16.msra.mxu0 %v2752
        %2781 = vmatprep.subr.bf16.mxu0 0
        %2782 = vmatpush1.bf16.msra.mxu0 %v2753
        %2783 = vmatprep.subr.bf16.mxu0 0
        %2784 = vmatpush1.bf16.msra.mxu0 %v2767
        %2785 = vmatprep.subr.bf16.mxu0 0
        %2786 = vmatpush1.bf16.msra.mxu0 0
        %2787 = vmatprep.subr.bf16.mxu0 0
        %2788 = vmatpush1.bf16.msra.mxu0 0
        %2789 = vmatprep.subr.bf16.mxu0 0
        %2790 = vmatpush1.bf16.msra.mxu0 0
        %2791 = vmatprep.subr.bf16.mxu0 0
        %2792 = vmatpush1.bf16.msra.mxu0 0
        %2793 = vmatprep.subr.bf16.mxu0 0
        %2794 = vmatpush1.bf16.msra.mxu0 0
        %2795 = vmatprep.subr.bf16.mxu0 0
        %2796 = vmatpush1.bf16.msra.mxu0 0
        %2797 = vmatprep.subr.bf16.mxu0 0
        %2798 = vmatpush1.bf16.msra.mxu0 0
        %2799 = vmatprep.subr.bf16.mxu0 0
        %2800 = vmatpush1.bf16.msra.mxu0 0
        %2801 = vmatprep.mubr.bf16.mxu0 0
        %2802 = vmatmul.mubr.bf16.gmra.mrb[0].mxu0 %v2764
        %v2803 = vpop.f32.mrb[0].mxu0
        %v2804 = vadd.f32 %v2716, %v2803
        %v2805 = vpop.f32.mrb[0].mxu0
        %v2806 = vpop.f32.mrb[0].mxu0
        %v2807 = vpop.f32.mrb[0].mxu0
        %2808 = vdwg.mxu0
        %v2809 = vmax.f32 %v2804, 0.0
        %v2810 = vld [vmem:[%s13] sm:$0xf]
        %v2811 = vld [vmem:[%s13 + $0x4] sm:$0xf]
        %v2812 = vld [vmem:[%s13 + $0x8] sm:$0xf]
        %v2813 = vld [vmem:[%s13 + $0xc] sm:$0xf]
        %v2814 = vld [vmem:[%s13 + $0x10] sm:$0xf]
        %v2815 = vld [vmem:[%s13 + $0x14] sm:$0xf]
        %v2816 = vld [vmem:[%s13 + $0x18] sm:$0xf]
        %v2817 = vld [vmem:[%s13 + $0x1c] sm:$0xf]
        %v2818 = vld [vmem:[%s13 + $0x20] sm:$0xf]
        %v2819 = vld [vmem:[%s13 + $0x24] sm:$0xf]
        %v2820 = vld [vmem:[%s13 + $0x28] sm:$0x3]
        %v2821 = vpack.c.bf16 %v2809, %v2809
        %v2822 = vld [vmem:[%s14] sm:$0x1]
        %v2834 = vunpack.c.l.b16 %v2810
        %v2835 = vunpack.c.l.b16 %v2811
        %v2836 = vunpack.c.l.b16 %v2812
        %v2837 = vunpack.c.l.b16 %v2813
        %v2838 = vunpack.c.l.b16 %v2814
        %v2839 = vunpack.c.l.b16 %v2815
        %v2840 = vunpack.c.l.b16 %v2816
        %v2841 = vunpack.c.l.b16 %v2817
        %v2842 = vunpack.c.l.b16 %v2818
        %v2843 = vunpack.c.l.b16 %v2819
        %v2844 = vunpack.c.l.b16 %v2820
        %v2845 = vpack.c.b16 %v2835, %v2834
        %v2846 = vpack.c.b16 %v2837, %v2836
        %v2847 = vpack.c.b16 %v2839, %v2838
        %v2848 = vpack.c.b16 %v2841, %v2840
        %v2849 = vpack.c.b16 %v2843, %v2842
        %v2850 = vpack.c.b16 %v2844, %v2844
        %v2857 = vsel %vm1435, %v2821, 0
        %v2860 = vsel %vm1526, %v2850, 0
        %2862 = vmatprep.subr.bf16.mxu0 0
        %2863 = vmatpush1.bf16.msra.mxu0 %v2845
        %2864 = vmatprep.subr.bf16.mxu0 0
        %2865 = vmatpush1.bf16.msra.mxu0 %v2846
        %2866 = vmatprep.subr.bf16.mxu0 0
        %2867 = vmatpush1.bf16.msra.mxu0 %v2847
        %2868 = vmatprep.subr.bf16.mxu0 0
        %2869 = vmatpush1.bf16.msra.mxu0 %v2848
        %2870 = vmatprep.subr.bf16.mxu0 0
        %2871 = vmatpush1.bf16.msra.mxu0 %v2849
        %2872 = vmatprep.subr.bf16.mxu0 0
        %2873 = vmatpush1.bf16.msra.mxu0 %v2860
        %2874 = vmatprep.subr.bf16.mxu0 0
        %2875 = vmatpush1.bf16.msra.mxu0 0
        %2876 = vmatprep.subr.bf16.mxu0 0
        %2877 = vmatpush1.bf16.msra.mxu0 0
        %2878 = vmatprep.subr.bf16.mxu0 0
        %2879 = vmatpush1.bf16.msra.mxu0 0
        %2880 = vmatprep.subr.bf16.mxu0 0
        %2881 = vmatpush1.bf16.msra.mxu0 0
        %2882 = vmatprep.subr.bf16.mxu0 0
        %2883 = vmatpush1.bf16.msra.mxu0 0
        %2884 = vmatprep.subr.bf16.mxu0 0
        %2885 = vmatpush1.bf16.msra.mxu0 0
        %2886 = vmatprep.subr.bf16.mxu0 0
        %2887 = vmatpush1.bf16.msra.mxu0 0
        %2888 = vmatprep.subr.bf16.mxu0 0
        %2889 = vmatpush1.bf16.msra.mxu0 0
        %2890 = vmatprep.subr.bf16.mxu0 0
        %2891 = vmatpush1.bf16.msra.mxu0 0
        %2892 = vmatprep.subr.bf16.mxu0 0
        %2893 = vmatpush1.bf16.msra.mxu0 0
        %2894 = vmatprep.mubr.bf16.mxu0 0
        %2895 = vmatmul.mubr.bf16.gmra.mrb[0].mxu0 %v2857
        %v2896 = vpop.f32.mrb[0].mxu0
        %v2897 = vadd.f32 %v2822, %v2896
        %v2898 = vpop.f32.mrb[0].mxu0
        %v2899 = vpop.f32.mrb[0].mxu0
        %v2900 = vpop.f32.mrb[0].mxu0
        %2901 = vdwg.mxu0
        %2902 = vst [vmem:[%s486] sm:$0x1] %v2897
        %s2903 = sand.u32 %s357, 1
        %s2904 = scalar_lea.sflag [#allocation5], %s2903
        %s2905 = sand.u32 %s357, 1
        %s2906 = scalar_lea.vmem [#allocation4], %s2905
        // Predicated region
        $region81: #{lenet_forward.1} parent=79 // pred_check
          %p2907 = pneg %p367
        $region82: #{lenet_forward.1} parent=79 // pred_check_branch
          %2909 = sbr.rel (%p2907) target = $region84
        $region83: #{lenet_forward.1} parent=79 // pred_region
          %s2911 = ssub.s32 16, 16
          %2912 = vsyncadd %s2904, %s2911
          %s2913 = smul.addr %s29, 16
          %s2914 = scalar_lea.hbm %s15, %s2913
          %s2916 = sshll.u32 %s2906, 4
          %s2917 = int_to_ptr.vmem [resolvable:$true] %s2916
          %2919 = dma.vmem_to_hbm [thread:$0]  %s2917, 16, %s2914, %s2904
        $region84: #{lenet_forward.1} parent=79 // pred_fallthru
          _
      $region80: #{lenet_forward.1} parent=5 // pred_fallthru
        _
      %p2920 = scmp.le.s32.totalorder 2, %s24
      // Predicated region
      $region85: #{lenet_forward.1} parent=5 // pred_check
        %p2921 = pneg %p2920
      $region86: #{lenet_forward.1} parent=5 // pred_check_branch
        %2923 = sbr.rel (%p2921) target = $region88
      $region87: #{lenet_forward.1} parent=5 // pred_region
        %s2924 = ssub.s32 %s24, 2
        // Predicated region
        $region89: #{lenet_forward.1} parent=87 // pred_check
          %p2925 = pneg %p373
        $region90: #{lenet_forward.1} parent=87 // pred_check_branch
          %2927 = sbr.rel (%p2925) target = $region92
        $region91: #{lenet_forward.1} parent=87 // pred_region
          %s2928 = sand.u32 %s358, 1
          %s2929 = scalar_lea.sflag [#allocation5], %s2928
          %s2930 = sand.u32 %s358, 1
          %s2931 = scalar_lea.vmem [#allocation4], %s2930
          %2932 = dma.done %s2929, 16
        $region92: #{lenet_forward.1} parent=87 // pred_fallthru
          _
      $region88: #{lenet_forward.1} parent=5 // pred_fallthru
        _
    $region6: #{lenet_forward.1} parent=1 // loop_footer
      %s28 = sadd.s32 1, %s24
    $region7: #{lenet_forward.1} parent=1 // loop_footer_branch
      %23 = sbr.rel target = $region3
    $region8: #{lenet_forward.1} parent=1 // loop_exit
      _
    %2933 = vsyncpa [#allocation5], 1
    %s2934 = scalar_lea.sflag [#allocation5], 1
    %2935 = vsyncpa %s2934, 1

</llo_original>
